<compile_context>
chip_gen: v7x
topology: tpu7x:2x2x1
jax: 0.10.0
libtpu: 0.0.40
codegen_flags: <defaults>
</compile_context>

<pallas_src>
import jax
import jax.numpy as jnp
from jax import lax
from jax.experimental import pallas as pl
from jax.experimental.pallas import tpu as pltpu

HIDDEN = 128            # hidden_size of the torch module
HDIR = HIDDEN // 2      # per-direction GRU hidden size (64)
EMBED = 1               # embed_size (layer-0 gi precompute relies on EMBED == 1)
NUM_CLASSES = 2
G6 = 6 * HDIR           # 384 packed gate lanes: [r_f, r_b, z_f, z_b, n_f, n_b]


# ----------------------------------------------------------------------------- kernel helpers
def _bigru_layer(gi_all, whh, bhn, S):
    """Fused fwd+bwd GRU layer, fully unrolled (static indices).

    gi_all[i] already holds gi_fwd[time=i] + gi_bwd[time=S-1-i] in packed gate order
    [r_f,r_b | z_f,z_b | n_f,n_b]; whh is the (128,384) block-diagonally packed
    hidden->hidden weight; bhn the packed n-gate hidden bias.
    Returns (x, x_rev): the (S,128) layer output in natural / reversed time order."""
    HH = 2 * HDIR
    h = jnp.zeros((1, HH), jnp.float32)                       # [h_fwd | h_bwd]
    hs = []
    for i in range(S):
        gi = gi_all[i:i + 1, :]                               # (1, 384) static row slice
        gh = jnp.dot(h, whh, preferred_element_type=jnp.float32) + bhn     # (1, 384)
        rz = jax.nn.sigmoid(gi[:, :2 * HH] + gh[:, :2 * HH])  # (1, 256) = [r | z]
        r = rz[:, :HH]                                        # (1, 128) [r_f | r_b]
        z = rz[:, HH:]                                        # (1, 128) [z_f | z_b]
        n = jnp.tanh(gi[:, 2 * HH:] + r * gh[:, 2 * HH:])     # (1, 128) [n_f | n_b]
        h = (1.0 - z) * n + z * h                             # lane-aligned blend
        hs.append(h)
    # Assemble lane/sublane-dense outputs once, outside the serial chain.
    hcat = jnp.concatenate(hs, axis=0)        # (S,128): row i = [h_f(t=i)     | h_b(t=S-1-i)]
    hrev = jnp.concatenate(hs[::-1], axis=0)  # (S,128): row i = [h_f(t=S-1-i) | h_b(t=i)]
    x = jnp.concatenate([hcat[:, :HDIR], hrev[:, HDIR:]], axis=1)      # natural time order
    x_rev = jnp.concatenate([hrev[:, :HDIR], hcat[:, HDIR:]], axis=1)  # reversed time order
    return x, x_rev


def gru_attention_kernel(
    emb_ref, embr_ref,
    wih0f_ref, wih0b_ref, whh0_ref, bgi0_ref, bhn0_ref,
    wih1f_hbm, wih1b_hbm, whh1_hbm, bgi1_ref, bhn1_ref,
    attw_hbm, attp_ref, fcw_ref, fcb_ref,
    out_ref, att_ref,
    wih1f_buf, wih1b_buf, whh1_buf, attw_buf, dma_sem,
):
    S = emb_ref.shape[0]

    # ---- kick off async DMA of layer-1 / attention weights (overlaps layer-0 compute) ----
    cp_w1f = pltpu.make_async_copy(wih1f_hbm, wih1f_buf, dma_sem.at[0])
    cp_w1b = pltpu.make_async_copy(wih1b_hbm, wih1b_buf, dma_sem.at[1])
    cp_whh = pltpu.make_async_copy(whh1_hbm, whh1_buf, dma_sem.at[2])
    cp_att = pltpu.make_async_copy(attw_hbm, attw_buf, dma_sem.at[3])
    cp_w1f.start(); cp_w1b.start(); cp_whh.start(); cp_att.start()

    # ---- layer 0: combined fwd/bwd input projection (EMBED == 1 -> broadcast mul) --------
    gi0 = (emb_ref[...] * wih0f_ref[...]
           + embr_ref[...] * wih0b_ref[...]
           + bgi0_ref[...])                                   # (S, 384)
    whh0 = whh0_ref[...].astype(jnp.float32)                  # bf16 -> f32 once
    x0, x0_rev = _bigru_layer(gi0, whh0, bhn0_ref[...], S)    # (S,128) each

    # ---- layer 1: hoisted (S,128)@(128,384) input projections on the MXU ------------------
    cp_w1f.wait(); cp_w1b.wait(); cp_whh.wait()
    wih1f = wih1f_buf[...].astype(jnp.float32)
    wih1b = wih1b_buf[...].astype(jnp.float32)
    gi1 = (jnp.dot(x0, wih1f, preferred_element_type=jnp.float32)
           + jnp.dot(x0_rev, wih1b, preferred_element_type=jnp.float32)
           + bgi1_ref[...])                                   # (S, 384)
    whh1 = whh1_buf[...].astype(jnp.float32)
    x1, _ = _bigru_layer(gi1, whh1, bhn1_ref[...], S)         # (S, 128)

    # ---- attention pooling + classifier head (lane-dense) ---------------------------------
    cp_att.wait()
    attw = attw_buf[...].astype(jnp.float32)
    u = jnp.tanh(jnp.dot(x1, attw, preferred_element_type=jnp.float32))        # (S, 128)
    # att[0, t] = attP . u[t]  -> computed as attP @ u^T on the MXU -> (1, S)
    att = lax.dot_general(attp_ref[...], u, (((1,), (1,)), ((), ())),
                          preferred_element_type=jnp.float32)                  # (1, S)
    att = att - jnp.max(att, axis=1, keepdims=True)           # softmax over sequence
    e_att = jnp.exp(att)
    att_score = e_att / jnp.sum(e_att, axis=1, keepdims=True)                  # (1, S)
    att_ref[...] = att_score

    feat = jnp.dot(att_score, x1, preferred_element_type=jnp.float32)          # (1, 128)
    y = jnp.dot(feat, fcw_ref[...], preferred_element_type=jnp.float32) + fcb_ref[...]
    y = y - jnp.max(y, axis=1, keepdims=True)                 # softmax over classes
    ey = jnp.exp(y)
    out_ref[...] = ey / jnp.sum(ey, axis=1, keepdims=True)                     # (1, 2)


# ---------------------------------------------------------------------- host-side packing
def _pack_cols(f_part, b_part):
    """f_part/b_part: (rows, 3*HDIR) in gate order [r,z,n] ->
    (rows, 6*HDIR) in packed order [r_f, r_b, z_f, z_b, n_f, n_b]."""
    cols = []
    for g in range(3):
        cols.append(f_part[:, g * HDIR:(g + 1) * HDIR])
        cols.append(b_part[:, g * HDIR:(g + 1) * HDIR])
    return jnp.concatenate(cols, axis=1)


def _pack_layer(p, layer):
    wf, wb = p[f"wih{layer}f"], p[f"wih{layer}b"]        # (in, 192)
    hf, hb = p[f"whh{layer}f"], p[f"whh{layer}b"]        # (64, 192)
    bif, bib = p[f"bih{layer}f"], p[f"bih{layer}b"]      # (1, 192)
    bhf, bhb = p[f"bhh{layer}f"], p[f"bhh{layer}b"]      # (1, 192)
    zw = jnp.zeros_like(wf)
    zh = jnp.zeros_like(hf)
    zH = jnp.zeros((1, HDIR), jnp.float32)

    wih_f_p = _pack_cols(wf, zw)                                         # (in, 384)
    wih_b_p = _pack_cols(zw, wb)                                         # (in, 384)
    # block-diagonal W_hh: rows 0:64 (h_fwd) feed fwd gate slots, rows 64:128 (h_bwd) bwd.
    whh_p = jnp.concatenate([_pack_cols(hf, zh), _pack_cols(zh, hb)], axis=0)  # (128, 384)

    # fold b_hh for the r/z gates into the precomputed gi bias; keep b_hh_n in-loop.
    gi_bias_f = bif + jnp.concatenate([bhf[:, :2 * HDIR], zH], axis=1)
    gi_bias_b = bib + jnp.concatenate([bhb[:, :2 * HDIR], zH], axis=1)
    bgi = _pack_cols(gi_bias_f, gi_bias_b)                               # (1, 384) fwd+bwd
    bhn = _pack_cols(jnp.concatenate([zH, zH, bhf[:, 2 * HDIR:]], axis=1),
                     jnp.concatenate([zH, zH, bhb[:, 2 * HDIR:]], axis=1))  # (1, 384)
    return wih_f_p, wih_b_p, whh_p, bgi, bhn


def gru_attention_forward(token_ids, params):
    assert EMBED == 1  # layer-0 gi precompute uses a broadcast; generalize with jnp.dot if EMBED > 1
    # Embedding lookup (gather) kept in plain JAX as glue; everything else in-kernel.
    embeds = jnp.take(params["emb"], token_ids.reshape(-1), axis=0)      # (S, 1)
    embeds_rev = embeds[::-1]                                            # (S, 1) time-reversed
    S = embeds.shape[0]

    w0f, w0b, whh0, bgi0, bhn0 = _pack_layer(params, 0)
    w1f, w1b, whh1, bgi1, bhn1 = _pack_layer(params, 1)
    WDT = jnp.bfloat16                                                   # bf16 weight storage
    flat = [
        w0f, w0b, whh0.astype(WDT), bgi0, bhn0,
        w1f.astype(WDT), w1b.astype(WDT), whh1.astype(WDT), bgi1, bhn1,
        params["attW"].astype(WDT), params["attP"], params["fcW"], params["fcb"],
    ]

    vmem = pl.BlockSpec(memory_space=pltpu.MemorySpace.VMEM)
    hbm = pl.BlockSpec(memory_space=pl.ANY)
    in_specs = [vmem] * (2 + len(flat))
    for idx in (7, 8, 9, 12):   # wih1f, wih1b, whh1, attW stay in HBM -> manual async DMA
        in_specs[idx] = hbm

    out, att = pl.pallas_call(
        gru_attention_kernel,
        out_shape=(
            jax.ShapeDtypeStruct((1, NUM_CLASSES), jnp.float32),
            jax.ShapeDtypeStruct((1, S), jnp.float32),
        ),
        in_specs=in_specs,
        out_specs=(
            pl.BlockSpec(memory_space=pltpu.MemorySpace.VMEM),
            pl.BlockSpec(memory_space=pltpu.MemorySpace.VMEM),
        ),
        scratch_shapes=[
            pltpu.VMEM((HIDDEN, G6), jnp.bfloat16),       # wih1f landing buffer
            pltpu.VMEM((HIDDEN, G6), jnp.bfloat16),       # wih1b landing buffer
            pltpu.VMEM((HIDDEN, G6), jnp.bfloat16),       # whh1  landing buffer
            pltpu.VMEM((HIDDEN, HIDDEN), jnp.bfloat16),   # attW  landing buffer
            pltpu.SemaphoreType.DMA((4,)),
        ],
    )(embeds, embeds_rev, *flat)
    return out, att.reshape(1, S, 1)


# ----------------------------------------------------------------------- params & reference
def init_params(key, vocab_size):
    """Deterministic synthetic parameters matching the torch module's shapes
    (GRU weights pre-transposed to (in_features, 3*HDIR) / (HDIR, 3*HDIR), gate order [r,z,n])."""
    keys = iter(jax.random.split(key, 64))

    def u(shape, lo, hi):
        return jax.random.uniform(next(keys), shape, jnp.float32, lo, hi)

    p = {"emb": jax.random.normal(next(keys), (vocab_size, EMBED), jnp.float32)}
    k = 1.0 / float(HDIR) ** 0.5
    for layer, in_dim in ((0, EMBED), (1, HIDDEN)):
        for d in ("f", "b"):
            p[f"wih{layer}{d}"] = u((in_dim, 3 * HDIR), -k, k)
            p[f"whh{layer}{d}"] = u((HDIR, 3 * HDIR), -k, k)
            p[f"bih{layer}{d}"] = u((1, 3 * HDIR), -k, k)
            p[f"bhh{layer}{d}"] = u((1, 3 * HDIR), -k, k)
    p["attW"] = u((HIDDEN, HIDDEN), -0.1, 0.1)           # weight_W
    p["attP"] = u((1, HIDDEN), -0.1, 0.1)                # weight_proj, stored lane-dense
    kf = 1.0 / float(HIDDEN) ** 0.5
    p["fcW"] = u((HIDDEN, NUM_CLASSES), -kf, kf)         # fc.weight^T
    p["fcb"] = u((1, NUM_CLASSES), -kf, kf)              # fc.bias
    return p


def reference_forward(token_ids, p):
    """Pure-JAX f32 reference mirroring the torch forward pass (unpacked params)."""
    emb = jnp.take(p["emb"], token_ids.reshape(-1), axis=0)              # (S, 1)

    def run_dir(x_seq, wih_t, whh_t, bih, bhh, reverse):
        if reverse:
            x_seq = x_seq[::-1]

        def step(h, x):
            gi = x @ wih_t + bih[0]
            gh = h @ whh_t + bhh[0]
            r = jax.nn.sigmoid(gi[:HDIR] + gh[:HDIR])
            z = jax.nn.sigmoid(gi[HDIR:2 * HDIR] + gh[HDIR:2 * HDIR])
            n = jnp.tanh(gi[2 * HDIR:] + r * gh[2 * HDIR:])
            h_new = (1.0 - z) * n + z * h
            return h_new, h_new

        _, ys = lax.scan(step, jnp.zeros((HDIR,), jnp.float32), x_seq)
        return ys[::-1] if reverse else ys

    h0 = jnp.concatenate([
        run_dir(emb, p["wih0f"], p["whh0f"], p["bih0f"], p["bhh0f"], False),
        run_dir(emb, p["wih0b"], p["whh0b"], p["bih0b"], p["bhh0b"], True)], axis=1)
    x = jnp.concatenate([
        run_dir(h0, p["wih1f"], p["whh1f"], p["bih1f"], p["bhh1f"], False),
        run_dir(h0, p["wih1b"], p["whh1b"], p["bih1b"], p["bhh1b"], True)], axis=1)
    u = jnp.tanh(x @ p["attW"])
    att = u @ p["attP"].T                                                # (S, 1)
    att_score = jax.nn.softmax(att, axis=0)
    feat = jnp.sum(x * att_score, axis=0, keepdims=True)
    y = feat @ p["fcW"] + p["fcb"]
    out = jax.nn.softmax(y, axis=1)
    return out, att_score.reshape(1, -1, 1)


if __name__ == "__main__":
    key = jax.random.PRNGKey(0)
    pkey, ikey = jax.random.split(key)
    vocab_size = 40                       # synthetic chars vocab (+1 for padding idx)
    S = 8                                 # sequence length

    params = init_params(pkey, vocab_size)
    token_ids = jax.random.randint(ikey, (1, S), 1, vocab_size, dtype=jnp.int32)

    out, att_score = gru_attention_forward(token_ids, params)
    (out, att_score) = jax.block_until_ready((out, att_score))

    ref_out, ref_att = reference_forward(token_ids, params)
    assert out.shape == (1, 2) and att_score.shape == (1, S, 1)
    # Kernel stores the large weights in bf16 (halved DMA); compare against the pure-f32
    # reference with a tolerance that comfortably covers the bf16 weight rounding.
    assert jnp.allclose(out, ref_out, atol=1e-2, rtol=1e-2)
    assert jnp.allclose(att_score, ref_att, atol=1e-2, rtol=1e-2)
    print("KERNEL_OK")
</pallas_src>

<mosaic_0001>
module attributes {stable_mosaic.version = 11 : i64} {
  func.func @gru_attention_kernel(%arg0: memref<8x1xf32, #tpu.memory_space<vmem>>, %arg1: memref<8x1xf32, #tpu.memory_space<vmem>>, %arg2: memref<1x384xf32, #tpu.memory_space<vmem>>, %arg3: memref<1x384xf32, #tpu.memory_space<vmem>>, %arg4: memref<128x384xbf16, #tpu.memory_space<vmem>>, %arg5: memref<1x384xf32, #tpu.memory_space<vmem>>, %arg6: memref<1x384xf32, #tpu.memory_space<vmem>>, %arg7: memref<128x384xbf16, #tpu.memory_space<any>>, %arg8: memref<128x384xbf16, #tpu.memory_space<any>>, %arg9: memref<128x384xbf16, #tpu.memory_space<any>>, %arg10: memref<1x384xf32, #tpu.memory_space<vmem>>, %arg11: memref<1x384xf32, #tpu.memory_space<vmem>>, %arg12: memref<128x128xbf16, #tpu.memory_space<any>>, %arg13: memref<1x128xf32, #tpu.memory_space<vmem>>, %arg14: memref<128x2xf32, #tpu.memory_space<vmem>>, %arg15: memref<1x2xf32, #tpu.memory_space<vmem>>, %arg16: memref<1x2xf32, #tpu.memory_space<vmem>>, %arg17: memref<1x8xf32, #tpu.memory_space<vmem>>, %arg18: memref<128x384xbf16, #tpu.memory_space<vmem>>, %arg19: memref<128x384xbf16, #tpu.memory_space<vmem>>, %arg20: memref<128x384xbf16, #tpu.memory_space<vmem>>, %arg21: memref<128x128xbf16, #tpu.memory_space<vmem>>, %arg22: memref<4x!tpu.dma_semaphore, #tpu.memory_space<semaphore_mem>>) attributes {dimension_semantics = [], scalar_prefetch = 0 : i64, scratch_operands = 5 : i64, tpu.core_type = #tpu.core_type<tc>} {
    %c0_i32 = arith.constant 0 : i32
    %0 = tpu.memref_slice %arg22[%c0_i32] : memref<4x!tpu.dma_semaphore, #tpu.memory_space<semaphore_mem>> -> memref<1x!tpu.dma_semaphore, #tpu.memory_space<semaphore_mem>>
    %1 = tpu.memref_squeeze %0 : memref<1x!tpu.dma_semaphore, #tpu.memory_space<semaphore_mem>> -> memref<!tpu.dma_semaphore, #tpu.memory_space<semaphore_mem>>
    tpu.enqueue_dma source(%arg7 : memref<128x384xbf16, #tpu.memory_space<any>>) target(%arg18 : memref<128x384xbf16, #tpu.memory_space<vmem>>) target_semaphore(%1 : memref<!tpu.dma_semaphore, #tpu.memory_space<semaphore_mem>>)
    %c1_i32 = arith.constant 1 : i32
    %2 = tpu.memref_slice %arg22[%c1_i32] : memref<4x!tpu.dma_semaphore, #tpu.memory_space<semaphore_mem>> -> memref<1x!tpu.dma_semaphore, #tpu.memory_space<semaphore_mem>>
    %3 = tpu.memref_squeeze %2 : memref<1x!tpu.dma_semaphore, #tpu.memory_space<semaphore_mem>> -> memref<!tpu.dma_semaphore, #tpu.memory_space<semaphore_mem>>
    tpu.enqueue_dma source(%arg8 : memref<128x384xbf16, #tpu.memory_space<any>>) target(%arg19 : memref<128x384xbf16, #tpu.memory_space<vmem>>) target_semaphore(%3 : memref<!tpu.dma_semaphore, #tpu.memory_space<semaphore_mem>>)
    %c2_i32 = arith.constant 2 : i32
    %4 = tpu.memref_slice %arg22[%c2_i32] : memref<4x!tpu.dma_semaphore, #tpu.memory_space<semaphore_mem>> -> memref<1x!tpu.dma_semaphore, #tpu.memory_space<semaphore_mem>>
    %5 = tpu.memref_squeeze %4 : memref<1x!tpu.dma_semaphore, #tpu.memory_space<semaphore_mem>> -> memref<!tpu.dma_semaphore, #tpu.memory_space<semaphore_mem>>
    tpu.enqueue_dma source(%arg9 : memref<128x384xbf16, #tpu.memory_space<any>>) target(%arg20 : memref<128x384xbf16, #tpu.memory_space<vmem>>) target_semaphore(%5 : memref<!tpu.dma_semaphore, #tpu.memory_space<semaphore_mem>>)
    %c3_i32 = arith.constant 3 : i32
    %6 = tpu.memref_slice %arg22[%c3_i32] : memref<4x!tpu.dma_semaphore, #tpu.memory_space<semaphore_mem>> -> memref<1x!tpu.dma_semaphore, #tpu.memory_space<semaphore_mem>>
    %7 = tpu.memref_squeeze %6 : memref<1x!tpu.dma_semaphore, #tpu.memory_space<semaphore_mem>> -> memref<!tpu.dma_semaphore, #tpu.memory_space<semaphore_mem>>
    tpu.enqueue_dma source(%arg12 : memref<128x128xbf16, #tpu.memory_space<any>>) target(%arg21 : memref<128x128xbf16, #tpu.memory_space<vmem>>) target_semaphore(%7 : memref<!tpu.dma_semaphore, #tpu.memory_space<semaphore_mem>>)
    %c0 = arith.constant 0 : index
    %c0_0 = arith.constant 0 : index
    %8 = vector.load %arg0[%c0, %c0_0] : memref<8x1xf32, #tpu.memory_space<vmem>>, vector<8x1xf32>
    %c0_1 = arith.constant 0 : index
    %c0_2 = arith.constant 0 : index
    %9 = vector.load %arg2[%c0_1, %c0_2] : memref<1x384xf32, #tpu.memory_space<vmem>>, vector<1x384xf32>
    %10 = vector.broadcast %8 : vector<8x1xf32> to vector<8x384xf32>
    %11 = vector.broadcast %9 : vector<1x384xf32> to vector<8x384xf32>
    %12 = arith.mulf %10, %11 : vector<8x384xf32>
    %c0_3 = arith.constant 0 : index
    %c0_4 = arith.constant 0 : index
    %13 = vector.load %arg1[%c0_3, %c0_4] : memref<8x1xf32, #tpu.memory_space<vmem>>, vector<8x1xf32>
    %c0_5 = arith.constant 0 : index
    %c0_6 = arith.constant 0 : index
    %14 = vector.load %arg3[%c0_5, %c0_6] : memref<1x384xf32, #tpu.memory_space<vmem>>, vector<1x384xf32>
    %15 = vector.broadcast %13 : vector<8x1xf32> to vector<8x384xf32>
    %16 = vector.broadcast %14 : vector<1x384xf32> to vector<8x384xf32>
    %17 = arith.mulf %15, %16 : vector<8x384xf32>
    %18 = arith.addf %12, %17 : vector<8x384xf32>
    %c0_7 = arith.constant 0 : index
    %c0_8 = arith.constant 0 : index
    %19 = vector.load %arg5[%c0_7, %c0_8] : memref<1x384xf32, #tpu.memory_space<vmem>>, vector<1x384xf32>
    %20 = vector.broadcast %19 : vector<1x384xf32> to vector<8x384xf32>
    %21 = arith.addf %18, %20 : vector<8x384xf32>
    %c0_9 = arith.constant 0 : index
    %c0_10 = arith.constant 0 : index
    %22 = vector.load %arg4[%c0_9, %c0_10] : memref<128x384xbf16, #tpu.memory_space<vmem>>, vector<128x384xbf16>
    %23 = arith.extf %22 : vector<128x384xbf16> to vector<128x384xf32>
    %c0_11 = arith.constant 0 : index
    %c0_12 = arith.constant 0 : index
    %24 = vector.load %arg6[%c0_11, %c0_12] : memref<1x384xf32, #tpu.memory_space<vmem>>, vector<1x384xf32>
    %cst = arith.constant 0.000000e+00 : f32
    %25 = vector.broadcast %cst : f32 to vector<1x128xf32>
    %26 = vector.extract_strided_slice %21 {offsets = [0, 0], sizes = [1, 384], strides = [1, 1]} : vector<8x384xf32> to vector<1x384xf32>
    %cst_13 = arith.constant dense<0.000000e+00> : vector<1x384xf32>
    %27 = tpu.matmul %25, %23, %cst_13 {dimension_numbers = #tpu.dot_dimension_numbers<[1], [0], [0], [1], [0, 0, 1, 1], [], []>} : vector<1x128xf32>, vector<128x384xf32>, vector<1x384xf32> -> vector<1x384xf32>
    %28 = arith.addf %27, %24 : vector<1x384xf32>
    %29 = vector.extract_strided_slice %26 {offsets = [0, 0], sizes = [1, 256], strides = [1, 1]} : vector<1x384xf32> to vector<1x256xf32>
    %30 = vector.extract_strided_slice %28 {offsets = [0, 0], sizes = [1, 256], strides = [1, 1]} : vector<1x384xf32> to vector<1x256xf32>
    %31 = arith.addf %29, %30 : vector<1x256xf32>
    %32 = arith.negf %31 : vector<1x256xf32>
    %33 = math.exp %32 : vector<1x256xf32>
    %cst_14 = arith.constant 1.000000e+00 : f32
    %34 = vector.broadcast %cst_14 : f32 to vector<1x256xf32>
    %35 = arith.addf %34, %33 : vector<1x256xf32>
    %36 = arith.divf %34, %35 : vector<1x256xf32>
    %37 = vector.extract_strided_slice %36 {offsets = [0, 0], sizes = [1, 128], strides = [1, 1]} : vector<1x256xf32> to vector<1x128xf32>
    %38 = vector.extract_strided_slice %36 {offsets = [0, 128], sizes = [1, 128], strides = [1, 1]} : vector<1x256xf32> to vector<1x128xf32>
    %39 = vector.extract_strided_slice %26 {offsets = [0, 256], sizes = [1, 128], strides = [1, 1]} : vector<1x384xf32> to vector<1x128xf32>
    %40 = vector.extract_strided_slice %28 {offsets = [0, 256], sizes = [1, 128], strides = [1, 1]} : vector<1x384xf32> to vector<1x128xf32>
    %41 = arith.mulf %37, %40 : vector<1x128xf32>
    %42 = arith.addf %39, %41 : vector<1x128xf32>
    %43 = math.tanh %42 : vector<1x128xf32>
    %cst_15 = arith.constant 1.000000e+00 : f32
    %44 = vector.broadcast %cst_15 : f32 to vector<1x128xf32>
    %45 = arith.subf %44, %38 : vector<1x128xf32>
    %46 = arith.mulf %45, %43 : vector<1x128xf32>
    %47 = arith.mulf %38, %25 : vector<1x128xf32>
    %48 = arith.addf %46, %47 : vector<1x128xf32>
    %49 = vector.extract_strided_slice %21 {offsets = [1, 0], sizes = [1, 384], strides = [1, 1]} : vector<8x384xf32> to vector<1x384xf32>
    %cst_16 = arith.constant dense<0.000000e+00> : vector<1x384xf32>
    %50 = tpu.matmul %48, %23, %cst_16 {dimension_numbers = #tpu.dot_dimension_numbers<[1], [0], [0], [1], [0, 0, 1, 1], [], []>} : vector<1x128xf32>, vector<128x384xf32>, vector<1x384xf32> -> vector<1x384xf32>
    %51 = arith.addf %50, %24 : vector<1x384xf32>
    %52 = vector.extract_strided_slice %49 {offsets = [0, 0], sizes = [1, 256], strides = [1, 1]} : vector<1x384xf32> to vector<1x256xf32>
    %53 = vector.extract_strided_slice %51 {offsets = [0, 0], sizes = [1, 256], strides = [1, 1]} : vector<1x384xf32> to vector<1x256xf32>
    %54 = arith.addf %52, %53 : vector<1x256xf32>
    %55 = arith.negf %54 : vector<1x256xf32>
    %56 = math.exp %55 : vector<1x256xf32>
    %cst_17 = arith.constant 1.000000e+00 : f32
    %57 = vector.broadcast %cst_17 : f32 to vector<1x256xf32>
    %58 = arith.addf %57, %56 : vector<1x256xf32>
    %59 = arith.divf %57, %58 : vector<1x256xf32>
    %60 = vector.extract_strided_slice %59 {offsets = [0, 0], sizes = [1, 128], strides = [1, 1]} : vector<1x256xf32> to vector<1x128xf32>
    %61 = vector.extract_strided_slice %59 {offsets = [0, 128], sizes = [1, 128], strides = [1, 1]} : vector<1x256xf32> to vector<1x128xf32>
    %62 = vector.extract_strided_slice %49 {offsets = [0, 256], sizes = [1, 128], strides = [1, 1]} : vector<1x384xf32> to vector<1x128xf32>
    %63 = vector.extract_strided_slice %51 {offsets = [0, 256], sizes = [1, 128], strides = [1, 1]} : vector<1x384xf32> to vector<1x128xf32>
    %64 = arith.mulf %60, %63 : vector<1x128xf32>
    %65 = arith.addf %62, %64 : vector<1x128xf32>
    %66 = math.tanh %65 : vector<1x128xf32>
    %cst_18 = arith.constant 1.000000e+00 : f32
    %67 = vector.broadcast %cst_18 : f32 to vector<1x128xf32>
    %68 = arith.subf %67, %61 : vector<1x128xf32>
    %69 = arith.mulf %68, %66 : vector<1x128xf32>
    %70 = arith.mulf %61, %48 : vector<1x128xf32>
    %71 = arith.addf %69, %70 : vector<1x128xf32>
    %72 = vector.extract_strided_slice %21 {offsets = [2, 0], sizes = [1, 384], strides = [1, 1]} : vector<8x384xf32> to vector<1x384xf32>
    %cst_19 = arith.constant dense<0.000000e+00> : vector<1x384xf32>
    %73 = tpu.matmul %71, %23, %cst_19 {dimension_numbers = #tpu.dot_dimension_numbers<[1], [0], [0], [1], [0, 0, 1, 1], [], []>} : vector<1x128xf32>, vector<128x384xf32>, vector<1x384xf32> -> vector<1x384xf32>
    %74 = arith.addf %73, %24 : vector<1x384xf32>
    %75 = vector.extract_strided_slice %72 {offsets = [0, 0], sizes = [1, 256], strides = [1, 1]} : vector<1x384xf32> to vector<1x256xf32>
    %76 = vector.extract_strided_slice %74 {offsets = [0, 0], sizes = [1, 256], strides = [1, 1]} : vector<1x384xf32> to vector<1x256xf32>
    %77 = arith.addf %75, %76 : vector<1x256xf32>
    %78 = arith.negf %77 : vector<1x256xf32>
    %79 = math.exp %78 : vector<1x256xf32>
    %cst_20 = arith.constant 1.000000e+00 : f32
    %80 = vector.broadcast %cst_20 : f32 to vector<1x256xf32>
    %81 = arith.addf %80, %79 : vector<1x256xf32>
    %82 = arith.divf %80, %81 : vector<1x256xf32>
    %83 = vector.extract_strided_slice %82 {offsets = [0, 0], sizes = [1, 128], strides = [1, 1]} : vector<1x256xf32> to vector<1x128xf32>
    %84 = vector.extract_strided_slice %82 {offsets = [0, 128], sizes = [1, 128], strides = [1, 1]} : vector<1x256xf32> to vector<1x128xf32>
    %85 = vector.extract_strided_slice %72 {offsets = [0, 256], sizes = [1, 128], strides = [1, 1]} : vector<1x384xf32> to vector<1x128xf32>
    %86 = vector.extract_strided_slice %74 {offsets = [0, 256], sizes = [1, 128], strides = [1, 1]} : vector<1x384xf32> to vector<1x128xf32>
    %87 = arith.mulf %83, %86 : vector<1x128xf32>
    %88 = arith.addf %85, %87 : vector<1x128xf32>
    %89 = math.tanh %88 : vector<1x128xf32>
    %cst_21 = arith.constant 1.000000e+00 : f32
    %90 = vector.broadcast %cst_21 : f32 to vector<1x128xf32>
    %91 = arith.subf %90, %84 : vector<1x128xf32>
    %92 = arith.mulf %91, %89 : vector<1x128xf32>
    %93 = arith.mulf %84, %71 : vector<1x128xf32>
    %94 = arith.addf %92, %93 : vector<1x128xf32>
    %95 = vector.extract_strided_slice %21 {offsets = [3, 0], sizes = [1, 384], strides = [1, 1]} : vector<8x384xf32> to vector<1x384xf32>
    %cst_22 = arith.constant dense<0.000000e+00> : vector<1x384xf32>
    %96 = tpu.matmul %94, %23, %cst_22 {dimension_numbers = #tpu.dot_dimension_numbers<[1], [0], [0], [1], [0, 0, 1, 1], [], []>} : vector<1x128xf32>, vector<128x384xf32>, vector<1x384xf32> -> vector<1x384xf32>
    %97 = arith.addf %96, %24 : vector<1x384xf32>
    %98 = vector.extract_strided_slice %95 {offsets = [0, 0], sizes = [1, 256], strides = [1, 1]} : vector<1x384xf32> to vector<1x256xf32>
    %99 = vector.extract_strided_slice %97 {offsets = [0, 0], sizes = [1, 256], strides = [1, 1]} : vector<1x384xf32> to vector<1x256xf32>
    %100 = arith.addf %98, %99 : vector<1x256xf32>
    %101 = arith.negf %100 : vector<1x256xf32>
    %102 = math.exp %101 : vector<1x256xf32>
    %cst_23 = arith.constant 1.000000e+00 : f32
    %103 = vector.broadcast %cst_23 : f32 to vector<1x256xf32>
    %104 = arith.addf %103, %102 : vector<1x256xf32>
    %105 = arith.divf %103, %104 : vector<1x256xf32>
    %106 = vector.extract_strided_slice %105 {offsets = [0, 0], sizes = [1, 128], strides = [1, 1]} : vector<1x256xf32> to vector<1x128xf32>
    %107 = vector.extract_strided_slice %105 {offsets = [0, 128], sizes = [1, 128], strides = [1, 1]} : vector<1x256xf32> to vector<1x128xf32>
    %108 = vector.extract_strided_slice %95 {offsets = [0, 256], sizes = [1, 128], strides = [1, 1]} : vector<1x384xf32> to vector<1x128xf32>
    %109 = vector.extract_strided_slice %97 {offsets = [0, 256], sizes = [1, 128], strides = [1, 1]} : vector<1x384xf32> to vector<1x128xf32>
    %110 = arith.mulf %106, %109 : vector<1x128xf32>
    %111 = arith.addf %108, %110 : vector<1x128xf32>
    %112 = math.tanh %111 : vector<1x128xf32>
    %cst_24 = arith.constant 1.000000e+00 : f32
    %113 = vector.broadcast %cst_24 : f32 to vector<1x128xf32>
    %114 = arith.subf %113, %107 : vector<1x128xf32>
    %115 = arith.mulf %114, %112 : vector<1x128xf32>
    %116 = arith.mulf %107, %94 : vector<1x128xf32>
    %117 = arith.addf %115, %116 : vector<1x128xf32>
    %118 = vector.extract_strided_slice %21 {offsets = [4, 0], sizes = [1, 384], strides = [1, 1]} : vector<8x384xf32> to vector<1x384xf32>
    %cst_25 = arith.constant dense<0.000000e+00> : vector<1x384xf32>
    %119 = tpu.matmul %117, %23, %cst_25 {dimension_numbers = #tpu.dot_dimension_numbers<[1], [0], [0], [1], [0, 0, 1, 1], [], []>} : vector<1x128xf32>, vector<128x384xf32>, vector<1x384xf32> -> vector<1x384xf32>
    %120 = arith.addf %119, %24 : vector<1x384xf32>
    %121 = vector.extract_strided_slice %118 {offsets = [0, 0], sizes = [1, 256], strides = [1, 1]} : vector<1x384xf32> to vector<1x256xf32>
    %122 = vector.extract_strided_slice %120 {offsets = [0, 0], sizes = [1, 256], strides = [1, 1]} : vector<1x384xf32> to vector<1x256xf32>
    %123 = arith.addf %121, %122 : vector<1x256xf32>
    %124 = arith.negf %123 : vector<1x256xf32>
    %125 = math.exp %124 : vector<1x256xf32>
    %cst_26 = arith.constant 1.000000e+00 : f32
    %126 = vector.broadcast %cst_26 : f32 to vector<1x256xf32>
    %127 = arith.addf %126, %125 : vector<1x256xf32>
    %128 = arith.divf %126, %127 : vector<1x256xf32>
    %129 = vector.extract_strided_slice %128 {offsets = [0, 0], sizes = [1, 128], strides = [1, 1]} : vector<1x256xf32> to vector<1x128xf32>
    %130 = vector.extract_strided_slice %128 {offsets = [0, 128], sizes = [1, 128], strides = [1, 1]} : vector<1x256xf32> to vector<1x128xf32>
    %131 = vector.extract_strided_slice %118 {offsets = [0, 256], sizes = [1, 128], strides = [1, 1]} : vector<1x384xf32> to vector<1x128xf32>
    %132 = vector.extract_strided_slice %120 {offsets = [0, 256], sizes = [1, 128], strides = [1, 1]} : vector<1x384xf32> to vector<1x128xf32>
    %133 = arith.mulf %129, %132 : vector<1x128xf32>
    %134 = arith.addf %131, %133 : vector<1x128xf32>
    %135 = math.tanh %134 : vector<1x128xf32>
    %cst_27 = arith.constant 1.000000e+00 : f32
    %136 = vector.broadcast %cst_27 : f32 to vector<1x128xf32>
    %137 = arith.subf %136, %130 : vector<1x128xf32>
    %138 = arith.mulf %137, %135 : vector<1x128xf32>
    %139 = arith.mulf %130, %117 : vector<1x128xf32>
    %140 = arith.addf %138, %139 : vector<1x128xf32>
    %141 = vector.extract_strided_slice %21 {offsets = [5, 0], sizes = [1, 384], strides = [1, 1]} : vector<8x384xf32> to vector<1x384xf32>
    %cst_28 = arith.constant dense<0.000000e+00> : vector<1x384xf32>
    %142 = tpu.matmul %140, %23, %cst_28 {dimension_numbers = #tpu.dot_dimension_numbers<[1], [0], [0], [1], [0, 0, 1, 1], [], []>} : vector<1x128xf32>, vector<128x384xf32>, vector<1x384xf32> -> vector<1x384xf32>
    %143 = arith.addf %142, %24 : vector<1x384xf32>
    %144 = vector.extract_strided_slice %141 {offsets = [0, 0], sizes = [1, 256], strides = [1, 1]} : vector<1x384xf32> to vector<1x256xf32>
    %145 = vector.extract_strided_slice %143 {offsets = [0, 0], sizes = [1, 256], strides = [1, 1]} : vector<1x384xf32> to vector<1x256xf32>
    %146 = arith.addf %144, %145 : vector<1x256xf32>
    %147 = arith.negf %146 : vector<1x256xf32>
    %148 = math.exp %147 : vector<1x256xf32>
    %cst_29 = arith.constant 1.000000e+00 : f32
    %149 = vector.broadcast %cst_29 : f32 to vector<1x256xf32>
    %150 = arith.addf %149, %148 : vector<1x256xf32>
    %151 = arith.divf %149, %150 : vector<1x256xf32>
    %152 = vector.extract_strided_slice %151 {offsets = [0, 0], sizes = [1, 128], strides = [1, 1]} : vector<1x256xf32> to vector<1x128xf32>
    %153 = vector.extract_strided_slice %151 {offsets = [0, 128], sizes = [1, 128], strides = [1, 1]} : vector<1x256xf32> to vector<1x128xf32>
    %154 = vector.extract_strided_slice %141 {offsets = [0, 256], sizes = [1, 128], strides = [1, 1]} : vector<1x384xf32> to vector<1x128xf32>
    %155 = vector.extract_strided_slice %143 {offsets = [0, 256], sizes = [1, 128], strides = [1, 1]} : vector<1x384xf32> to vector<1x128xf32>
    %156 = arith.mulf %152, %155 : vector<1x128xf32>
    %157 = arith.addf %154, %156 : vector<1x128xf32>
    %158 = math.tanh %157 : vector<1x128xf32>
    %cst_30 = arith.constant 1.000000e+00 : f32
    %159 = vector.broadcast %cst_30 : f32 to vector<1x128xf32>
    %160 = arith.subf %159, %153 : vector<1x128xf32>
    %161 = arith.mulf %160, %158 : vector<1x128xf32>
    %162 = arith.mulf %153, %140 : vector<1x128xf32>
    %163 = arith.addf %161, %162 : vector<1x128xf32>
    %164 = vector.extract_strided_slice %21 {offsets = [6, 0], sizes = [1, 384], strides = [1, 1]} : vector<8x384xf32> to vector<1x384xf32>
    %cst_31 = arith.constant dense<0.000000e+00> : vector<1x384xf32>
    %165 = tpu.matmul %163, %23, %cst_31 {dimension_numbers = #tpu.dot_dimension_numbers<[1], [0], [0], [1], [0, 0, 1, 1], [], []>} : vector<1x128xf32>, vector<128x384xf32>, vector<1x384xf32> -> vector<1x384xf32>
    %166 = arith.addf %165, %24 : vector<1x384xf32>
    %167 = vector.extract_strided_slice %164 {offsets = [0, 0], sizes = [1, 256], strides = [1, 1]} : vector<1x384xf32> to vector<1x256xf32>
    %168 = vector.extract_strided_slice %166 {offsets = [0, 0], sizes = [1, 256], strides = [1, 1]} : vector<1x384xf32> to vector<1x256xf32>
    %169 = arith.addf %167, %168 : vector<1x256xf32>
    %170 = arith.negf %169 : vector<1x256xf32>
    %171 = math.exp %170 : vector<1x256xf32>
    %cst_32 = arith.constant 1.000000e+00 : f32
    %172 = vector.broadcast %cst_32 : f32 to vector<1x256xf32>
    %173 = arith.addf %172, %171 : vector<1x256xf32>
    %174 = arith.divf %172, %173 : vector<1x256xf32>
    %175 = vector.extract_strided_slice %174 {offsets = [0, 0], sizes = [1, 128], strides = [1, 1]} : vector<1x256xf32> to vector<1x128xf32>
    %176 = vector.extract_strided_slice %174 {offsets = [0, 128], sizes = [1, 128], strides = [1, 1]} : vector<1x256xf32> to vector<1x128xf32>
    %177 = vector.extract_strided_slice %164 {offsets = [0, 256], sizes = [1, 128], strides = [1, 1]} : vector<1x384xf32> to vector<1x128xf32>
    %178 = vector.extract_strided_slice %166 {offsets = [0, 256], sizes = [1, 128], strides = [1, 1]} : vector<1x384xf32> to vector<1x128xf32>
    %179 = arith.mulf %175, %178 : vector<1x128xf32>
    %180 = arith.addf %177, %179 : vector<1x128xf32>
    %181 = math.tanh %180 : vector<1x128xf32>
    %cst_33 = arith.constant 1.000000e+00 : f32
    %182 = vector.broadcast %cst_33 : f32 to vector<1x128xf32>
    %183 = arith.subf %182, %176 : vector<1x128xf32>
    %184 = arith.mulf %183, %181 : vector<1x128xf32>
    %185 = arith.mulf %176, %163 : vector<1x128xf32>
    %186 = arith.addf %184, %185 : vector<1x128xf32>
    %187 = vector.extract_strided_slice %21 {offsets = [7, 0], sizes = [1, 384], strides = [1, 1]} : vector<8x384xf32> to vector<1x384xf32>
    %cst_34 = arith.constant dense<0.000000e+00> : vector<1x384xf32>
    %188 = tpu.matmul %186, %23, %cst_34 {dimension_numbers = #tpu.dot_dimension_numbers<[1], [0], [0], [1], [0, 0, 1, 1], [], []>} : vector<1x128xf32>, vector<128x384xf32>, vector<1x384xf32> -> vector<1x384xf32>
    %189 = arith.addf %188, %24 : vector<1x384xf32>
    %190 = vector.extract_strided_slice %187 {offsets = [0, 0], sizes = [1, 256], strides = [1, 1]} : vector<1x384xf32> to vector<1x256xf32>
    %191 = vector.extract_strided_slice %189 {offsets = [0, 0], sizes = [1, 256], strides = [1, 1]} : vector<1x384xf32> to vector<1x256xf32>
    %192 = arith.addf %190, %191 : vector<1x256xf32>
    %193 = arith.negf %192 : vector<1x256xf32>
    %194 = math.exp %193 : vector<1x256xf32>
    %cst_35 = arith.constant 1.000000e+00 : f32
    %195 = vector.broadcast %cst_35 : f32 to vector<1x256xf32>
    %196 = arith.addf %195, %194 : vector<1x256xf32>
    %197 = arith.divf %195, %196 : vector<1x256xf32>
    %198 = vector.extract_strided_slice %197 {offsets = [0, 0], sizes = [1, 128], strides = [1, 1]} : vector<1x256xf32> to vector<1x128xf32>
    %199 = vector.extract_strided_slice %197 {offsets = [0, 128], sizes = [1, 128], strides = [1, 1]} : vector<1x256xf32> to vector<1x128xf32>
    %200 = vector.extract_strided_slice %187 {offsets = [0, 256], sizes = [1, 128], strides = [1, 1]} : vector<1x384xf32> to vector<1x128xf32>
    %201 = vector.extract_strided_slice %189 {offsets = [0, 256], sizes = [1, 128], strides = [1, 1]} : vector<1x384xf32> to vector<1x128xf32>
    %202 = arith.mulf %198, %201 : vector<1x128xf32>
    %203 = arith.addf %200, %202 : vector<1x128xf32>
    %204 = math.tanh %203 : vector<1x128xf32>
    %cst_36 = arith.constant 1.000000e+00 : f32
    %205 = vector.broadcast %cst_36 : f32 to vector<1x128xf32>
    %206 = arith.subf %205, %199 : vector<1x128xf32>
    %207 = arith.mulf %206, %204 : vector<1x128xf32>
    %208 = arith.mulf %199, %186 : vector<1x128xf32>
    %209 = arith.addf %207, %208 : vector<1x128xf32>
    %210 = tpu.concatenate %48, %71, %94, %117, %140, %163, %186, %209 in 0 : vector<1x128xf32>, vector<1x128xf32>, vector<1x128xf32>, vector<1x128xf32>, vector<1x128xf32>, vector<1x128xf32>, vector<1x128xf32>, vector<1x128xf32> -> vector<8x128xf32>
    %211 = tpu.concatenate %209, %186, %163, %140, %117, %94, %71, %48 in 0 : vector<1x128xf32>, vector<1x128xf32>, vector<1x128xf32>, vector<1x128xf32>, vector<1x128xf32>, vector<1x128xf32>, vector<1x128xf32>, vector<1x128xf32> -> vector<8x128xf32>
    %212 = vector.extract_strided_slice %210 {offsets = [0, 0], sizes = [8, 64], strides = [1, 1]} : vector<8x128xf32> to vector<8x64xf32>
    %213 = vector.extract_strided_slice %211 {offsets = [0, 64], sizes = [8, 64], strides = [1, 1]} : vector<8x128xf32> to vector<8x64xf32>
    %214 = tpu.concatenate %212, %213 in 1 : vector<8x64xf32>, vector<8x64xf32> -> vector<8x128xf32>
    %215 = vector.extract_strided_slice %211 {offsets = [0, 0], sizes = [8, 64], strides = [1, 1]} : vector<8x128xf32> to vector<8x64xf32>
    %216 = vector.extract_strided_slice %210 {offsets = [0, 64], sizes = [8, 64], strides = [1, 1]} : vector<8x128xf32> to vector<8x64xf32>
    %217 = tpu.concatenate %215, %216 in 1 : vector<8x64xf32>, vector<8x64xf32> -> vector<8x128xf32>
    %c0_i32_37 = arith.constant 0 : i32
    %218 = tpu.memref_slice %arg22[%c0_i32_37] : memref<4x!tpu.dma_semaphore, #tpu.memory_space<semaphore_mem>> -> memref<1x!tpu.dma_semaphore, #tpu.memory_space<semaphore_mem>>
    %219 = tpu.memref_squeeze %218 : memref<1x!tpu.dma_semaphore, #tpu.memory_space<semaphore_mem>> -> memref<!tpu.dma_semaphore, #tpu.memory_space<semaphore_mem>>
    tpu.wait_dma2 semaphore(%219 : memref<!tpu.dma_semaphore, #tpu.memory_space<semaphore_mem>>) src(%arg7 : memref<128x384xbf16, #tpu.memory_space<any>>) dst(%arg18 : memref<128x384xbf16, #tpu.memory_space<vmem>>)
    %c1_i32_38 = arith.constant 1 : i32
    %220 = tpu.memref_slice %arg22[%c1_i32_38] : memref<4x!tpu.dma_semaphore, #tpu.memory_space<semaphore_mem>> -> memref<1x!tpu.dma_semaphore, #tpu.memory_space<semaphore_mem>>
    %221 = tpu.memref_squeeze %220 : memref<1x!tpu.dma_semaphore, #tpu.memory_space<semaphore_mem>> -> memref<!tpu.dma_semaphore, #tpu.memory_space<semaphore_mem>>
    tpu.wait_dma2 semaphore(%221 : memref<!tpu.dma_semaphore, #tpu.memory_space<semaphore_mem>>) src(%arg8 : memref<128x384xbf16, #tpu.memory_space<any>>) dst(%arg19 : memref<128x384xbf16, #tpu.memory_space<vmem>>)
    %c2_i32_39 = arith.constant 2 : i32
    %222 = tpu.memref_slice %arg22[%c2_i32_39] : memref<4x!tpu.dma_semaphore, #tpu.memory_space<semaphore_mem>> -> memref<1x!tpu.dma_semaphore, #tpu.memory_space<semaphore_mem>>
    %223 = tpu.memref_squeeze %222 : memref<1x!tpu.dma_semaphore, #tpu.memory_space<semaphore_mem>> -> memref<!tpu.dma_semaphore, #tpu.memory_space<semaphore_mem>>
    tpu.wait_dma2 semaphore(%223 : memref<!tpu.dma_semaphore, #tpu.memory_space<semaphore_mem>>) src(%arg9 : memref<128x384xbf16, #tpu.memory_space<any>>) dst(%arg20 : memref<128x384xbf16, #tpu.memory_space<vmem>>)
    %c0_40 = arith.constant 0 : index
    %c0_41 = arith.constant 0 : index
    %224 = vector.load %arg18[%c0_40, %c0_41] : memref<128x384xbf16, #tpu.memory_space<vmem>>, vector<128x384xbf16>
    %225 = arith.extf %224 : vector<128x384xbf16> to vector<128x384xf32>
    %c0_42 = arith.constant 0 : index
    %c0_43 = arith.constant 0 : index
    %226 = vector.load %arg19[%c0_42, %c0_43] : memref<128x384xbf16, #tpu.memory_space<vmem>>, vector<128x384xbf16>
    %227 = arith.extf %226 : vector<128x384xbf16> to vector<128x384xf32>
    %cst_44 = arith.constant dense<0.000000e+00> : vector<8x384xf32>
    %228 = tpu.matmul %214, %225, %cst_44 {dimension_numbers = #tpu.dot_dimension_numbers<[1], [0], [0], [1], [0, 0, 1, 1], [], []>} : vector<8x128xf32>, vector<128x384xf32>, vector<8x384xf32> -> vector<8x384xf32>
    %cst_45 = arith.constant dense<0.000000e+00> : vector<8x384xf32>
    %229 = tpu.matmul %217, %227, %cst_45 {dimension_numbers = #tpu.dot_dimension_numbers<[1], [0], [0], [1], [0, 0, 1, 1], [], []>} : vector<8x128xf32>, vector<128x384xf32>, vector<8x384xf32> -> vector<8x384xf32>
    %230 = arith.addf %228, %229 : vector<8x384xf32>
    %c0_46 = arith.constant 0 : index
    %c0_47 = arith.constant 0 : index
    %231 = vector.load %arg10[%c0_46, %c0_47] : memref<1x384xf32, #tpu.memory_space<vmem>>, vector<1x384xf32>
    %232 = vector.broadcast %231 : vector<1x384xf32> to vector<8x384xf32>
    %233 = arith.addf %230, %232 : vector<8x384xf32>
    %c0_48 = arith.constant 0 : index
    %c0_49 = arith.constant 0 : index
    %234 = vector.load %arg20[%c0_48, %c0_49] : memref<128x384xbf16, #tpu.memory_space<vmem>>, vector<128x384xbf16>
    %235 = arith.extf %234 : vector<128x384xbf16> to vector<128x384xf32>
    %c0_50 = arith.constant 0 : index
    %c0_51 = arith.constant 0 : index
    %236 = vector.load %arg11[%c0_50, %c0_51] : memref<1x384xf32, #tpu.memory_space<vmem>>, vector<1x384xf32>
    %cst_52 = arith.constant 0.000000e+00 : f32
    %237 = vector.broadcast %cst_52 : f32 to vector<1x128xf32>
    %238 = vector.extract_strided_slice %233 {offsets = [0, 0], sizes = [1, 384], strides = [1, 1]} : vector<8x384xf32> to vector<1x384xf32>
    %cst_53 = arith.constant dense<0.000000e+00> : vector<1x384xf32>
    %239 = tpu.matmul %237, %235, %cst_53 {dimension_numbers = #tpu.dot_dimension_numbers<[1], [0], [0], [1], [0, 0, 1, 1], [], []>} : vector<1x128xf32>, vector<128x384xf32>, vector<1x384xf32> -> vector<1x384xf32>
    %240 = arith.addf %239, %236 : vector<1x384xf32>
    %241 = vector.extract_strided_slice %238 {offsets = [0, 0], sizes = [1, 256], strides = [1, 1]} : vector<1x384xf32> to vector<1x256xf32>
    %242 = vector.extract_strided_slice %240 {offsets = [0, 0], sizes = [1, 256], strides = [1, 1]} : vector<1x384xf32> to vector<1x256xf32>
    %243 = arith.addf %241, %242 : vector<1x256xf32>
    %244 = arith.negf %243 : vector<1x256xf32>
    %245 = math.exp %244 : vector<1x256xf32>
    %cst_54 = arith.constant 1.000000e+00 : f32
    %246 = vector.broadcast %cst_54 : f32 to vector<1x256xf32>
    %247 = arith.addf %246, %245 : vector<1x256xf32>
    %248 = arith.divf %246, %247 : vector<1x256xf32>
    %249 = vector.extract_strided_slice %248 {offsets = [0, 0], sizes = [1, 128], strides = [1, 1]} : vector<1x256xf32> to vector<1x128xf32>
    %250 = vector.extract_strided_slice %248 {offsets = [0, 128], sizes = [1, 128], strides = [1, 1]} : vector<1x256xf32> to vector<1x128xf32>
    %251 = vector.extract_strided_slice %238 {offsets = [0, 256], sizes = [1, 128], strides = [1, 1]} : vector<1x384xf32> to vector<1x128xf32>
    %252 = vector.extract_strided_slice %240 {offsets = [0, 256], sizes = [1, 128], strides = [1, 1]} : vector<1x384xf32> to vector<1x128xf32>
    %253 = arith.mulf %249, %252 : vector<1x128xf32>
    %254 = arith.addf %251, %253 : vector<1x128xf32>
    %255 = math.tanh %254 : vector<1x128xf32>
    %cst_55 = arith.constant 1.000000e+00 : f32
    %256 = vector.broadcast %cst_55 : f32 to vector<1x128xf32>
    %257 = arith.subf %256, %250 : vector<1x128xf32>
    %258 = arith.mulf %257, %255 : vector<1x128xf32>
    %259 = arith.mulf %250, %237 : vector<1x128xf32>
    %260 = arith.addf %258, %259 : vector<1x128xf32>
    %261 = vector.extract_strided_slice %233 {offsets = [1, 0], sizes = [1, 384], strides = [1, 1]} : vector<8x384xf32> to vector<1x384xf32>
    %cst_56 = arith.constant dense<0.000000e+00> : vector<1x384xf32>
    %262 = tpu.matmul %260, %235, %cst_56 {dimension_numbers = #tpu.dot_dimension_numbers<[1], [0], [0], [1], [0, 0, 1, 1], [], []>} : vector<1x128xf32>, vector<128x384xf32>, vector<1x384xf32> -> vector<1x384xf32>
    %263 = arith.addf %262, %236 : vector<1x384xf32>
    %264 = vector.extract_strided_slice %261 {offsets = [0, 0], sizes = [1, 256], strides = [1, 1]} : vector<1x384xf32> to vector<1x256xf32>
    %265 = vector.extract_strided_slice %263 {offsets = [0, 0], sizes = [1, 256], strides = [1, 1]} : vector<1x384xf32> to vector<1x256xf32>
    %266 = arith.addf %264, %265 : vector<1x256xf32>
    %267 = arith.negf %266 : vector<1x256xf32>
    %268 = math.exp %267 : vector<1x256xf32>
    %cst_57 = arith.constant 1.000000e+00 : f32
    %269 = vector.broadcast %cst_57 : f32 to vector<1x256xf32>
    %270 = arith.addf %269, %268 : vector<1x256xf32>
    %271 = arith.divf %269, %270 : vector<1x256xf32>
    %272 = vector.extract_strided_slice %271 {offsets = [0, 0], sizes = [1, 128], strides = [1, 1]} : vector<1x256xf32> to vector<1x128xf32>
    %273 = vector.extract_strided_slice %271 {offsets = [0, 128], sizes = [1, 128], strides = [1, 1]} : vector<1x256xf32> to vector<1x128xf32>
    %274 = vector.extract_strided_slice %261 {offsets = [0, 256], sizes = [1, 128], strides = [1, 1]} : vector<1x384xf32> to vector<1x128xf32>
    %275 = vector.extract_strided_slice %263 {offsets = [0, 256], sizes = [1, 128], strides = [1, 1]} : vector<1x384xf32> to vector<1x128xf32>
    %276 = arith.mulf %272, %275 : vector<1x128xf32>
    %277 = arith.addf %274, %276 : vector<1x128xf32>
    %278 = math.tanh %277 : vector<1x128xf32>
    %cst_58 = arith.constant 1.000000e+00 : f32
    %279 = vector.broadcast %cst_58 : f32 to vector<1x128xf32>
    %280 = arith.subf %279, %273 : vector<1x128xf32>
    %281 = arith.mulf %280, %278 : vector<1x128xf32>
    %282 = arith.mulf %273, %260 : vector<1x128xf32>
    %283 = arith.addf %281, %282 : vector<1x128xf32>
    %284 = vector.extract_strided_slice %233 {offsets = [2, 0], sizes = [1, 384], strides = [1, 1]} : vector<8x384xf32> to vector<1x384xf32>
    %cst_59 = arith.constant dense<0.000000e+00> : vector<1x384xf32>
    %285 = tpu.matmul %283, %235, %cst_59 {dimension_numbers = #tpu.dot_dimension_numbers<[1], [0], [0], [1], [0, 0, 1, 1], [], []>} : vector<1x128xf32>, vector<128x384xf32>, vector<1x384xf32> -> vector<1x384xf32>
    %286 = arith.addf %285, %236 : vector<1x384xf32>
    %287 = vector.extract_strided_slice %284 {offsets = [0, 0], sizes = [1, 256], strides = [1, 1]} : vector<1x384xf32> to vector<1x256xf32>
    %288 = vector.extract_strided_slice %286 {offsets = [0, 0], sizes = [1, 256], strides = [1, 1]} : vector<1x384xf32> to vector<1x256xf32>
    %289 = arith.addf %287, %288 : vector<1x256xf32>
    %290 = arith.negf %289 : vector<1x256xf32>
    %291 = math.exp %290 : vector<1x256xf32>
    %cst_60 = arith.constant 1.000000e+00 : f32
    %292 = vector.broadcast %cst_60 : f32 to vector<1x256xf32>
    %293 = arith.addf %292, %291 : vector<1x256xf32>
    %294 = arith.divf %292, %293 : vector<1x256xf32>
    %295 = vector.extract_strided_slice %294 {offsets = [0, 0], sizes = [1, 128], strides = [1, 1]} : vector<1x256xf32> to vector<1x128xf32>
    %296 = vector.extract_strided_slice %294 {offsets = [0, 128], sizes = [1, 128], strides = [1, 1]} : vector<1x256xf32> to vector<1x128xf32>
    %297 = vector.extract_strided_slice %284 {offsets = [0, 256], sizes = [1, 128], strides = [1, 1]} : vector<1x384xf32> to vector<1x128xf32>
    %298 = vector.extract_strided_slice %286 {offsets = [0, 256], sizes = [1, 128], strides = [1, 1]} : vector<1x384xf32> to vector<1x128xf32>
    %299 = arith.mulf %295, %298 : vector<1x128xf32>
    %300 = arith.addf %297, %299 : vector<1x128xf32>
    %301 = math.tanh %300 : vector<1x128xf32>
    %cst_61 = arith.constant 1.000000e+00 : f32
    %302 = vector.broadcast %cst_61 : f32 to vector<1x128xf32>
    %303 = arith.subf %302, %296 : vector<1x128xf32>
    %304 = arith.mulf %303, %301 : vector<1x128xf32>
    %305 = arith.mulf %296, %283 : vector<1x128xf32>
    %306 = arith.addf %304, %305 : vector<1x128xf32>
    %307 = vector.extract_strided_slice %233 {offsets = [3, 0], sizes = [1, 384], strides = [1, 1]} : vector<8x384xf32> to vector<1x384xf32>
    %cst_62 = arith.constant dense<0.000000e+00> : vector<1x384xf32>
    %308 = tpu.matmul %306, %235, %cst_62 {dimension_numbers = #tpu.dot_dimension_numbers<[1], [0], [0], [1], [0, 0, 1, 1], [], []>} : vector<1x128xf32>, vector<128x384xf32>, vector<1x384xf32> -> vector<1x384xf32>
    %309 = arith.addf %308, %236 : vector<1x384xf32>
    %310 = vector.extract_strided_slice %307 {offsets = [0, 0], sizes = [1, 256], strides = [1, 1]} : vector<1x384xf32> to vector<1x256xf32>
    %311 = vector.extract_strided_slice %309 {offsets = [0, 0], sizes = [1, 256], strides = [1, 1]} : vector<1x384xf32> to vector<1x256xf32>
    %312 = arith.addf %310, %311 : vector<1x256xf32>
    %313 = arith.negf %312 : vector<1x256xf32>
    %314 = math.exp %313 : vector<1x256xf32>
    %cst_63 = arith.constant 1.000000e+00 : f32
    %315 = vector.broadcast %cst_63 : f32 to vector<1x256xf32>
    %316 = arith.addf %315, %314 : vector<1x256xf32>
    %317 = arith.divf %315, %316 : vector<1x256xf32>
    %318 = vector.extract_strided_slice %317 {offsets = [0, 0], sizes = [1, 128], strides = [1, 1]} : vector<1x256xf32> to vector<1x128xf32>
    %319 = vector.extract_strided_slice %317 {offsets = [0, 128], sizes = [1, 128], strides = [1, 1]} : vector<1x256xf32> to vector<1x128xf32>
    %320 = vector.extract_strided_slice %307 {offsets = [0, 256], sizes = [1, 128], strides = [1, 1]} : vector<1x384xf32> to vector<1x128xf32>
    %321 = vector.extract_strided_slice %309 {offsets = [0, 256], sizes = [1, 128], strides = [1, 1]} : vector<1x384xf32> to vector<1x128xf32>
    %322 = arith.mulf %318, %321 : vector<1x128xf32>
    %323 = arith.addf %320, %322 : vector<1x128xf32>
    %324 = math.tanh %323 : vector<1x128xf32>
    %cst_64 = arith.constant 1.000000e+00 : f32
    %325 = vector.broadcast %cst_64 : f32 to vector<1x128xf32>
    %326 = arith.subf %325, %319 : vector<1x128xf32>
    %327 = arith.mulf %326, %324 : vector<1x128xf32>
    %328 = arith.mulf %319, %306 : vector<1x128xf32>
    %329 = arith.addf %327, %328 : vector<1x128xf32>
    %330 = vector.extract_strided_slice %233 {offsets = [4, 0], sizes = [1, 384], strides = [1, 1]} : vector<8x384xf32> to vector<1x384xf32>
    %cst_65 = arith.constant dense<0.000000e+00> : vector<1x384xf32>
    %331 = tpu.matmul %329, %235, %cst_65 {dimension_numbers = #tpu.dot_dimension_numbers<[1], [0], [0], [1], [0, 0, 1, 1], [], []>} : vector<1x128xf32>, vector<128x384xf32>, vector<1x384xf32> -> vector<1x384xf32>
    %332 = arith.addf %331, %236 : vector<1x384xf32>
    %333 = vector.extract_strided_slice %330 {offsets = [0, 0], sizes = [1, 256], strides = [1, 1]} : vector<1x384xf32> to vector<1x256xf32>
    %334 = vector.extract_strided_slice %332 {offsets = [0, 0], sizes = [1, 256], strides = [1, 1]} : vector<1x384xf32> to vector<1x256xf32>
    %335 = arith.addf %333, %334 : vector<1x256xf32>
    %336 = arith.negf %335 : vector<1x256xf32>
    %337 = math.exp %336 : vector<1x256xf32>
    %cst_66 = arith.constant 1.000000e+00 : f32
    %338 = vector.broadcast %cst_66 : f32 to vector<1x256xf32>
    %339 = arith.addf %338, %337 : vector<1x256xf32>
    %340 = arith.divf %338, %339 : vector<1x256xf32>
    %341 = vector.extract_strided_slice %340 {offsets = [0, 0], sizes = [1, 128], strides = [1, 1]} : vector<1x256xf32> to vector<1x128xf32>
    %342 = vector.extract_strided_slice %340 {offsets = [0, 128], sizes = [1, 128], strides = [1, 1]} : vector<1x256xf32> to vector<1x128xf32>
    %343 = vector.extract_strided_slice %330 {offsets = [0, 256], sizes = [1, 128], strides = [1, 1]} : vector<1x384xf32> to vector<1x128xf32>
    %344 = vector.extract_strided_slice %332 {offsets = [0, 256], sizes = [1, 128], strides = [1, 1]} : vector<1x384xf32> to vector<1x128xf32>
    %345 = arith.mulf %341, %344 : vector<1x128xf32>
    %346 = arith.addf %343, %345 : vector<1x128xf32>
    %347 = math.tanh %346 : vector<1x128xf32>
    %cst_67 = arith.constant 1.000000e+00 : f32
    %348 = vector.broadcast %cst_67 : f32 to vector<1x128xf32>
    %349 = arith.subf %348, %342 : vector<1x128xf32>
    %350 = arith.mulf %349, %347 : vector<1x128xf32>
    %351 = arith.mulf %342, %329 : vector<1x128xf32>
    %352 = arith.addf %350, %351 : vector<1x128xf32>
    %353 = vector.extract_strided_slice %233 {offsets = [5, 0], sizes = [1, 384], strides = [1, 1]} : vector<8x384xf32> to vector<1x384xf32>
    %cst_68 = arith.constant dense<0.000000e+00> : vector<1x384xf32>
    %354 = tpu.matmul %352, %235, %cst_68 {dimension_numbers = #tpu.dot_dimension_numbers<[1], [0], [0], [1], [0, 0, 1, 1], [], []>} : vector<1x128xf32>, vector<128x384xf32>, vector<1x384xf32> -> vector<1x384xf32>
    %355 = arith.addf %354, %236 : vector<1x384xf32>
    %356 = vector.extract_strided_slice %353 {offsets = [0, 0], sizes = [1, 256], strides = [1, 1]} : vector<1x384xf32> to vector<1x256xf32>
    %357 = vector.extract_strided_slice %355 {offsets = [0, 0], sizes = [1, 256], strides = [1, 1]} : vector<1x384xf32> to vector<1x256xf32>
    %358 = arith.addf %356, %357 : vector<1x256xf32>
    %359 = arith.negf %358 : vector<1x256xf32>
    %360 = math.exp %359 : vector<1x256xf32>
    %cst_69 = arith.constant 1.000000e+00 : f32
    %361 = vector.broadcast %cst_69 : f32 to vector<1x256xf32>
    %362 = arith.addf %361, %360 : vector<1x256xf32>
    %363 = arith.divf %361, %362 : vector<1x256xf32>
    %364 = vector.extract_strided_slice %363 {offsets = [0, 0], sizes = [1, 128], strides = [1, 1]} : vector<1x256xf32> to vector<1x128xf32>
    %365 = vector.extract_strided_slice %363 {offsets = [0, 128], sizes = [1, 128], strides = [1, 1]} : vector<1x256xf32> to vector<1x128xf32>
    %366 = vector.extract_strided_slice %353 {offsets = [0, 256], sizes = [1, 128], strides = [1, 1]} : vector<1x384xf32> to vector<1x128xf32>
    %367 = vector.extract_strided_slice %355 {offsets = [0, 256], sizes = [1, 128], strides = [1, 1]} : vector<1x384xf32> to vector<1x128xf32>
    %368 = arith.mulf %364, %367 : vector<1x128xf32>
    %369 = arith.addf %366, %368 : vector<1x128xf32>
    %370 = math.tanh %369 : vector<1x128xf32>
    %cst_70 = arith.constant 1.000000e+00 : f32
    %371 = vector.broadcast %cst_70 : f32 to vector<1x128xf32>
    %372 = arith.subf %371, %365 : vector<1x128xf32>
    %373 = arith.mulf %372, %370 : vector<1x128xf32>
    %374 = arith.mulf %365, %352 : vector<1x128xf32>
    %375 = arith.addf %373, %374 : vector<1x128xf32>
    %376 = vector.extract_strided_slice %233 {offsets = [6, 0], sizes = [1, 384], strides = [1, 1]} : vector<8x384xf32> to vector<1x384xf32>
    %cst_71 = arith.constant dense<0.000000e+00> : vector<1x384xf32>
    %377 = tpu.matmul %375, %235, %cst_71 {dimension_numbers = #tpu.dot_dimension_numbers<[1], [0], [0], [1], [0, 0, 1, 1], [], []>} : vector<1x128xf32>, vector<128x384xf32>, vector<1x384xf32> -> vector<1x384xf32>
    %378 = arith.addf %377, %236 : vector<1x384xf32>
    %379 = vector.extract_strided_slice %376 {offsets = [0, 0], sizes = [1, 256], strides = [1, 1]} : vector<1x384xf32> to vector<1x256xf32>
    %380 = vector.extract_strided_slice %378 {offsets = [0, 0], sizes = [1, 256], strides = [1, 1]} : vector<1x384xf32> to vector<1x256xf32>
    %381 = arith.addf %379, %380 : vector<1x256xf32>
    %382 = arith.negf %381 : vector<1x256xf32>
    %383 = math.exp %382 : vector<1x256xf32>
    %cst_72 = arith.constant 1.000000e+00 : f32
    %384 = vector.broadcast %cst_72 : f32 to vector<1x256xf32>
    %385 = arith.addf %384, %383 : vector<1x256xf32>
    %386 = arith.divf %384, %385 : vector<1x256xf32>
    %387 = vector.extract_strided_slice %386 {offsets = [0, 0], sizes = [1, 128], strides = [1, 1]} : vector<1x256xf32> to vector<1x128xf32>
    %388 = vector.extract_strided_slice %386 {offsets = [0, 128], sizes = [1, 128], strides = [1, 1]} : vector<1x256xf32> to vector<1x128xf32>
    %389 = vector.extract_strided_slice %376 {offsets = [0, 256], sizes = [1, 128], strides = [1, 1]} : vector<1x384xf32> to vector<1x128xf32>
    %390 = vector.extract_strided_slice %378 {offsets = [0, 256], sizes = [1, 128], strides = [1, 1]} : vector<1x384xf32> to vector<1x128xf32>
    %391 = arith.mulf %387, %390 : vector<1x128xf32>
    %392 = arith.addf %389, %391 : vector<1x128xf32>
    %393 = math.tanh %392 : vector<1x128xf32>
    %cst_73 = arith.constant 1.000000e+00 : f32
    %394 = vector.broadcast %cst_73 : f32 to vector<1x128xf32>
    %395 = arith.subf %394, %388 : vector<1x128xf32>
    %396 = arith.mulf %395, %393 : vector<1x128xf32>
    %397 = arith.mulf %388, %375 : vector<1x128xf32>
    %398 = arith.addf %396, %397 : vector<1x128xf32>
    %399 = vector.extract_strided_slice %233 {offsets = [7, 0], sizes = [1, 384], strides = [1, 1]} : vector<8x384xf32> to vector<1x384xf32>
    %cst_74 = arith.constant dense<0.000000e+00> : vector<1x384xf32>
    %400 = tpu.matmul %398, %235, %cst_74 {dimension_numbers = #tpu.dot_dimension_numbers<[1], [0], [0], [1], [0, 0, 1, 1], [], []>} : vector<1x128xf32>, vector<128x384xf32>, vector<1x384xf32> -> vector<1x384xf32>
    %401 = arith.addf %400, %236 : vector<1x384xf32>
    %402 = vector.extract_strided_slice %399 {offsets = [0, 0], sizes = [1, 256], strides = [1, 1]} : vector<1x384xf32> to vector<1x256xf32>
    %403 = vector.extract_strided_slice %401 {offsets = [0, 0], sizes = [1, 256], strides = [1, 1]} : vector<1x384xf32> to vector<1x256xf32>
    %404 = arith.addf %402, %403 : vector<1x256xf32>
    %405 = arith.negf %404 : vector<1x256xf32>
    %406 = math.exp %405 : vector<1x256xf32>
    %cst_75 = arith.constant 1.000000e+00 : f32
    %407 = vector.broadcast %cst_75 : f32 to vector<1x256xf32>
    %408 = arith.addf %407, %406 : vector<1x256xf32>
    %409 = arith.divf %407, %408 : vector<1x256xf32>
    %410 = vector.extract_strided_slice %409 {offsets = [0, 0], sizes = [1, 128], strides = [1, 1]} : vector<1x256xf32> to vector<1x128xf32>
    %411 = vector.extract_strided_slice %409 {offsets = [0, 128], sizes = [1, 128], strides = [1, 1]} : vector<1x256xf32> to vector<1x128xf32>
    %412 = vector.extract_strided_slice %399 {offsets = [0, 256], sizes = [1, 128], strides = [1, 1]} : vector<1x384xf32> to vector<1x128xf32>
    %413 = vector.extract_strided_slice %401 {offsets = [0, 256], sizes = [1, 128], strides = [1, 1]} : vector<1x384xf32> to vector<1x128xf32>
    %414 = arith.mulf %410, %413 : vector<1x128xf32>
    %415 = arith.addf %412, %414 : vector<1x128xf32>
    %416 = math.tanh %415 : vector<1x128xf32>
    %cst_76 = arith.constant 1.000000e+00 : f32
    %417 = vector.broadcast %cst_76 : f32 to vector<1x128xf32>
    %418 = arith.subf %417, %411 : vector<1x128xf32>
    %419 = arith.mulf %418, %416 : vector<1x128xf32>
    %420 = arith.mulf %411, %398 : vector<1x128xf32>
    %421 = arith.addf %419, %420 : vector<1x128xf32>
    %422 = tpu.concatenate %260, %283, %306, %329, %352, %375, %398, %421 in 0 : vector<1x128xf32>, vector<1x128xf32>, vector<1x128xf32>, vector<1x128xf32>, vector<1x128xf32>, vector<1x128xf32>, vector<1x128xf32>, vector<1x128xf32> -> vector<8x128xf32>
    %423 = tpu.concatenate %421, %398, %375, %352, %329, %306, %283, %260 in 0 : vector<1x128xf32>, vector<1x128xf32>, vector<1x128xf32>, vector<1x128xf32>, vector<1x128xf32>, vector<1x128xf32>, vector<1x128xf32>, vector<1x128xf32> -> vector<8x128xf32>
    %424 = vector.extract_strided_slice %422 {offsets = [0, 0], sizes = [8, 64], strides = [1, 1]} : vector<8x128xf32> to vector<8x64xf32>
    %425 = vector.extract_strided_slice %423 {offsets = [0, 64], sizes = [8, 64], strides = [1, 1]} : vector<8x128xf32> to vector<8x64xf32>
    %426 = tpu.concatenate %424, %425 in 1 : vector<8x64xf32>, vector<8x64xf32> -> vector<8x128xf32>
    %c3_i32_77 = arith.constant 3 : i32
    %427 = tpu.memref_slice %arg22[%c3_i32_77] : memref<4x!tpu.dma_semaphore, #tpu.memory_space<semaphore_mem>> -> memref<1x!tpu.dma_semaphore, #tpu.memory_space<semaphore_mem>>
    %428 = tpu.memref_squeeze %427 : memref<1x!tpu.dma_semaphore, #tpu.memory_space<semaphore_mem>> -> memref<!tpu.dma_semaphore, #tpu.memory_space<semaphore_mem>>
    tpu.wait_dma2 semaphore(%428 : memref<!tpu.dma_semaphore, #tpu.memory_space<semaphore_mem>>) src(%arg12 : memref<128x128xbf16, #tpu.memory_space<any>>) dst(%arg21 : memref<128x128xbf16, #tpu.memory_space<vmem>>)
    %c0_78 = arith.constant 0 : index
    %c0_79 = arith.constant 0 : index
    %429 = vector.load %arg21[%c0_78, %c0_79] : memref<128x128xbf16, #tpu.memory_space<vmem>>, vector<128x128xbf16>
    %430 = arith.extf %429 : vector<128x128xbf16> to vector<128x128xf32>
    %cst_80 = arith.constant dense<0.000000e+00> : vector<8x128xf32>
    %431 = tpu.matmul %426, %430, %cst_80 {dimension_numbers = #tpu.dot_dimension_numbers<[1], [0], [0], [1], [0, 0, 1, 1], [], []>} : vector<8x128xf32>, vector<128x128xf32>, vector<8x128xf32> -> vector<8x128xf32>
    %432 = math.tanh %431 : vector<8x128xf32>
    %c0_81 = arith.constant 0 : index
    %c0_82 = arith.constant 0 : index
    %433 = vector.load %arg13[%c0_81, %c0_82] : memref<1x128xf32, #tpu.memory_space<vmem>>, vector<1x128xf32>
    %cst_83 = arith.constant dense<0.000000e+00> : vector<1x8xf32>
    %434 = tpu.matmul %433, %432, %cst_83 {dimension_numbers = #tpu.dot_dimension_numbers<[1], [1], [0], [0], [0, 0, 1, 0], [], []>} : vector<1x128xf32>, vector<8x128xf32>, vector<1x8xf32> -> vector<1x8xf32>
    %cst_84 = arith.constant dense<0xFF800000> : vector<1xf32>
    %435 = vector.multi_reduction <maximumf>, %434, %cst_84 [1] : vector<1x8xf32> to vector<1xf32>
    %436 = vector.shape_cast %435 : vector<1xf32> to vector<1x1xf32>
    %437 = vector.broadcast %436 : vector<1x1xf32> to vector<1x8xf32>
    %438 = arith.subf %434, %437 : vector<1x8xf32>
    %439 = math.exp %438 : vector<1x8xf32>
    %cst_85 = arith.constant dense<0.000000e+00> : vector<1xf32>
    %440 = vector.multi_reduction <add>, %439, %cst_85 [1] : vector<1x8xf32> to vector<1xf32>
    %441 = vector.shape_cast %440 : vector<1xf32> to vector<1x1xf32>
    %442 = vector.broadcast %441 : vector<1x1xf32> to vector<1x8xf32>
    %443 = arith.divf %439, %442 : vector<1x8xf32>
    %c0_86 = arith.constant 0 : index
    %c0_87 = arith.constant 0 : index
    %444 = vector.load %arg17[%c0_86, %c0_87] : memref<1x8xf32, #tpu.memory_space<vmem>>, vector<1x8xf32>
    tpu.vector_store %arg17[%c0_86, %c0_87], %443 {strides = array<i32>} : memref<1x8xf32, #tpu.memory_space<vmem>>, vector<1x8xf32>,
    %cst_88 = arith.constant dense<0.000000e+00> : vector<1x128xf32>
    %445 = tpu.matmul %443, %426, %cst_88 {dimension_numbers = #tpu.dot_dimension_numbers<[1], [0], [0], [1], [0, 0, 1, 1], [], []>} : vector<1x8xf32>, vector<8x128xf32>, vector<1x128xf32> -> vector<1x128xf32>
    %c0_89 = arith.constant 0 : index
    %c0_90 = arith.constant 0 : index
    %446 = vector.load %arg14[%c0_89, %c0_90] : memref<128x2xf32, #tpu.memory_space<vmem>>, vector<128x2xf32>
    %cst_91 = arith.constant dense<0.000000e+00> : vector<1x2xf32>
    %447 = tpu.matmul %445, %446, %cst_91 {dimension_numbers = #tpu.dot_dimension_numbers<[1], [0], [0], [1], [0, 0, 1, 1], [], []>} : vector<1x128xf32>, vector<128x2xf32>, vector<1x2xf32> -> vector<1x2xf32>
    %c0_92 = arith.constant 0 : index
    %c0_93 = arith.constant 0 : index
    %448 = vector.load %arg15[%c0_92, %c0_93] : memref<1x2xf32, #tpu.memory_space<vmem>>, vector<1x2xf32>
    %449 = arith.addf %447, %448 : vector<1x2xf32>
    %cst_94 = arith.constant dense<0xFF800000> : vector<1xf32>
    %450 = vector.multi_reduction <maximumf>, %449, %cst_94 [1] : vector<1x2xf32> to vector<1xf32>
    %451 = vector.shape_cast %450 : vector<1xf32> to vector<1x1xf32>
    %452 = vector.broadcast %451 : vector<1x1xf32> to vector<1x2xf32>
    %453 = arith.subf %449, %452 : vector<1x2xf32>
    %454 = math.exp %453 : vector<1x2xf32>
    %cst_95 = arith.constant dense<0.000000e+00> : vector<1xf32>
    %455 = vector.multi_reduction <add>, %454, %cst_95 [1] : vector<1x2xf32> to vector<1xf32>
    %456 = vector.shape_cast %455 : vector<1xf32> to vector<1x1xf32>
    %457 = vector.broadcast %456 : vector<1x1xf32> to vector<1x2xf32>
    %458 = arith.divf %454, %457 : vector<1x2xf32>
    %c0_96 = arith.constant 0 : index
    %c0_97 = arith.constant 0 : index
    %459 = vector.load %arg16[%c0_96, %c0_97] : memref<1x2xf32, #tpu.memory_space<vmem>>, vector<1x2xf32>
    tpu.vector_store %arg16[%c0_96, %c0_97], %458 {strides = array<i32>} : memref<1x2xf32, #tpu.memory_space<vmem>>, vector<1x2xf32>,
    return
  }
}

</mosaic_0001>

<llo_original>
// kernel: tpu_custom_call.1
$region0: #{tpu_custom_call.1}
  #allocation0 [shape = 'u32[]', space=smem, size = 0x4, offset = 0x4, fixed_abs, tag = 'smem constant byte address 0x4 - core index']
  #allocation1 [shape = 'u32[144,128]{1,0:T(1,128)}', space=vmem, size = 0x12000, scoped, tag = 'internal scratch']
  #allocation2 [shape = 'bf16[128,384]{1,0:T(16,128)(2,1)}', space=vmem, size = 0x18000, scoped, tag = 'scratch operand']
  #allocation3 [shape = 'bf16[128,384]{1,0:T(16,128)(2,1)}', space=vmem, size = 0x18000, scoped, tag = 'scratch operand']
  #allocation4 [shape = 'bf16[128,384]{1,0:T(16,128)(2,1)}', space=vmem, size = 0x18000, scoped, tag = 'scratch operand']
  #allocation5 [shape = 'bf16[128,128]{1,0:T(16,128)(2,1)}', space=vmem, size = 0x8000, scoped, tag = 'scratch operand']
  #allocation6 [shape = 's32[4]{0}', space=sflag, size = 0x10, scoped, tag = 'scratch operand']
  #allocation13 [shape = 's32[]', space=sflag, size = 0x4, offset = 0, fixed_abs, tag = 'sflag constant byte address 0x0 - dummy sync flag']
  #allocation15 [shape = 's32[]', space=sflag, size = 0x4, offset = 0, fixed_abs, tag = 'sflag constant byte address 0x0 - dummy sync flag']
  #allocation17 [shape = 's32[]', space=sflag, size = 0x4, offset = 0, fixed_abs, tag = 'sflag constant byte address 0x0 - dummy sync flag']
  #allocation19 [shape = 's32[]', space=sflag, size = 0x4, offset = 0, fixed_abs, tag = 'sflag constant byte address 0x0 - dummy sync flag']
  %s0 = inlined_call_operand.vmem [shape: f32[8,1], index: 0, kind: input, shape index: {}]
  %s1 = inlined_call_operand.vmem [shape: f32[8,1], index: 1, kind: input, shape index: {}]
  %s2 = inlined_call_operand.vmem [shape: f32[1,384], index: 2, kind: input, shape index: {}]
  %s3 = inlined_call_operand.vmem [shape: f32[1,384], index: 3, kind: input, shape index: {}]
  %s4 = inlined_call_operand.hbm [shape: bf16[128,384], index: 4, kind: input, shape index: {}]
  %s5 = inlined_call_operand.vmem [shape: f32[1,384], index: 5, kind: input, shape index: {}]
  %s6 = inlined_call_operand.vmem [shape: f32[1,384], index: 6, kind: input, shape index: {}]
  %s7 = inlined_call_operand.hbm [shape: bf16[128,384], index: 7, kind: input, shape index: {}]
  %s8 = inlined_call_operand.hbm [shape: bf16[128,384], index: 8, kind: input, shape index: {}]
  %s9 = inlined_call_operand.hbm [shape: bf16[128,384], index: 9, kind: input, shape index: {}]
  %s10 = inlined_call_operand.vmem [shape: f32[1,384], index: 10, kind: input, shape index: {}]
  %s11 = inlined_call_operand.vmem [shape: f32[1,384], index: 11, kind: input, shape index: {}]
  %s12 = inlined_call_operand.vmem [shape: bf16[128,128], index: 12, kind: input, shape index: {}]
  %s13 = inlined_call_operand.vmem [shape: f32[1,128], index: 13, kind: input, shape index: {}]
  %s14 = inlined_call_operand.vmem [shape: f32[128,2], index: 14, kind: input, shape index: {}]
  %s15 = inlined_call_operand.vmem [shape: f32[1,2], index: 15, kind: input, shape index: {}]
  %s16 = inlined_call_operand.hbm [shape: f32[1,2], index: 16, kind: output, shape index: {0}]
  %s17 = inlined_call_operand.hbm [shape: f32[1,8], index: 17, kind: output, shape index: {1}]
  %18 = xla_tuple %s16, %s17
  %s19 = sld [smem:[#allocation0]]
  $region104: #{tpu_custom_call.1} parent=0
    _
  %s21 = ssub.s32 1, %s19
  %s22 = scalar_select 0, %s21, %s19
  $region1: #{tpu_custom_call.1} parent=0
    #allocation7 [shape = 'u8[98304]{0}', space=vmem, size = 0x18000, scoped, tag = 'input window, operand 4, single buffered']
    #allocation8 [shape = 's32[1]{0}', space=sflag, size = 0x4, scoped, tag = 'scoped memory for tpu_custom_call.1']
    #allocation9 [shape = 's32[1]{0}', space=sflag, size = 0x4, scoped, tag = 'scoped memory for tpu_custom_call.1']
    #allocation10 [shape = 'u8[512]{0}', space=vmem, size = 0x400, scoped, tag = 'output window, operand 0, single buffered']
    #allocation11 [shape = 'u8[512]{0}', space=vmem, size = 0x400, scoped, tag = 'output window, operand 1, single buffered']
    #allocation12 [shape = 's32[1]{0}', space=sflag, size = 0x4, scoped, tag = 'scoped memory for tpu_custom_call.1']
    #allocation14 [shape = 'u32[9]{0}', space=smem, size = 0x24, scoped, tag = 'DMA stride descriptor']
    #allocation16 [shape = 'u32[9]{0}', space=smem, size = 0x24, scoped, tag = 'DMA stride descriptor']
    #allocation18 [shape = 'u32[9]{0}', space=smem, size = 0x24, scoped, tag = 'DMA stride descriptor']
    %23 = vsyncpa [#allocation8], 0
    %24 = vsyncpa [#allocation9], 0
    %25 = vsyncpa [#allocation12], 0
    // Predicated region
    $region2: #{tpu_custom_call.1} parent=1 // pred_check
      _
    $region3: #{tpu_custom_call.1} parent=1 // pred_check_branch
      %27 = sbr.rel (0) target = $region5
    $region4: #{tpu_custom_call.1} parent=1 // pred_region
      _
    $region5: #{tpu_custom_call.1} parent=1 // pred_fallthru
      _
    // Predicated region
    $region6: #{tpu_custom_call.1} parent=1 // pred_check
      _
    $region7: #{tpu_custom_call.1} parent=1 // pred_check_branch
      %29 = sbr.rel (0) target = $region9
    $region8: #{tpu_custom_call.1} parent=1 // pred_region
      _
    $region9: #{tpu_custom_call.1} parent=1 // pred_fallthru
      _
    // Predicated region
    $region10: #{tpu_custom_call.1} parent=1 // pred_check
      _
    $region11: #{tpu_custom_call.1} parent=1 // pred_check_branch
      %31 = sbr.rel (0) target = $region13
    $region12: #{tpu_custom_call.1} parent=1 // pred_region
      _
    $region13: #{tpu_custom_call.1} parent=1 // pred_fallthru
      _
    // Predicated region
    $region14: #{tpu_custom_call.1} parent=1 // pred_check
      _
    $region15: #{tpu_custom_call.1} parent=1 // pred_check_branch
      %33 = sbr.rel (0) target = $region17
    $region16: #{tpu_custom_call.1} parent=1 // pred_region
      _
    $region17: #{tpu_custom_call.1} parent=1 // pred_fallthru
      _
    // Predicated region
    $region18: #{tpu_custom_call.1} parent=1 // pred_check
      _
    $region19: #{tpu_custom_call.1} parent=1 // pred_check_branch
      %35 = sbr.rel (0) target = $region21
    $region20: #{tpu_custom_call.1} parent=1 // pred_region
      %s37 = ssub.s32 3072, 3072
      %38 = vsyncadd [#allocation8], %s37
      %s39 = sshll.u32 [#allocation7], 4
      %s40 = int_to_ptr.vmem [resolvable:$true] %s39
      %45 = dma.hbm_to_vmem [thread:$0]  %s4, 3072, %s40, [#allocation8], 192, 192, 12
    $region21: #{tpu_custom_call.1} parent=1 // pred_fallthru
      _
    // Predicated region
    $region22: #{tpu_custom_call.1} parent=1 // pred_check
      _
    $region23: #{tpu_custom_call.1} parent=1 // pred_check_branch
      %47 = sbr.rel (0) target = $region25
    $region24: #{tpu_custom_call.1} parent=1 // pred_region
      _
    $region25: #{tpu_custom_call.1} parent=1 // pred_fallthru
      _
    // Predicated region
    $region26: #{tpu_custom_call.1} parent=1 // pred_check
      _
    $region27: #{tpu_custom_call.1} parent=1 // pred_check_branch
      %49 = sbr.rel (0) target = $region29
    $region28: #{tpu_custom_call.1} parent=1 // pred_region
      _
    $region29: #{tpu_custom_call.1} parent=1 // pred_fallthru
      _
    // Predicated region
    $region30: #{tpu_custom_call.1} parent=1 // pred_check
      _
    $region31: #{tpu_custom_call.1} parent=1 // pred_check_branch
      %51 = sbr.rel (0) target = $region33
    $region32: #{tpu_custom_call.1} parent=1 // pred_region
      _
    $region33: #{tpu_custom_call.1} parent=1 // pred_fallthru
      _
    // Predicated region
    $region34: #{tpu_custom_call.1} parent=1 // pred_check
      _
    $region35: #{tpu_custom_call.1} parent=1 // pred_check_branch
      %53 = sbr.rel (0) target = $region37
    $region36: #{tpu_custom_call.1} parent=1 // pred_region
      _
    $region37: #{tpu_custom_call.1} parent=1 // pred_fallthru
      _
    // Predicated region
    $region38: #{tpu_custom_call.1} parent=1 // pred_check
      _
    $region39: #{tpu_custom_call.1} parent=1 // pred_check_branch
      %55 = sbr.rel (0) target = $region41
    $region40: #{tpu_custom_call.1} parent=1 // pred_region
      _
    $region41: #{tpu_custom_call.1} parent=1 // pred_fallthru
      _
    // Predicated region
    $region42: #{tpu_custom_call.1} parent=1 // pred_check
      _
    $region43: #{tpu_custom_call.1} parent=1 // pred_check_branch
      %57 = sbr.rel (0) target = $region45
    $region44: #{tpu_custom_call.1} parent=1 // pred_region
      _
    $region45: #{tpu_custom_call.1} parent=1 // pred_fallthru
      _
    // Predicated region
    $region46: #{tpu_custom_call.1} parent=1 // pred_check
      _
    $region47: #{tpu_custom_call.1} parent=1 // pred_check_branch
      %59 = sbr.rel (0) target = $region49
    $region48: #{tpu_custom_call.1} parent=1 // pred_region
      _
    $region49: #{tpu_custom_call.1} parent=1 // pred_fallthru
      _
    // Predicated region
    $region50: #{tpu_custom_call.1} parent=1 // pred_check
      _
    $region51: #{tpu_custom_call.1} parent=1 // pred_check_branch
      %61 = sbr.rel (0) target = $region53
    $region52: #{tpu_custom_call.1} parent=1 // pred_region
      %62 = dma.done [#allocation8], 3072
    $region53: #{tpu_custom_call.1} parent=1 // pred_fallthru
      _
    %s64 = sshll.u32 1, 14
    %s65 = sxor.u32 4294967295, %s64
    %s67 = sld [smem:[#allocation0]]
    %s68 = sadd.s32 2, %s67
    %s70 = sshll.u32 7, 26
    %s71 = sxor.u32 4294967295, %s70
    %s72 = sand.u32 0, %s71
    %s73 = sshll.u32 %s68, 26
    %s74 = sor.u32 %s72, %s73
    %s75 = sshll.u32 [#allocation2], 4
    %s76 = int_to_ptr.vmem [resolvable:$true] %s75
    %79 = sst [smem:[#allocation14]] 384
    %s80 = scalar_lea.smem [#allocation14], 1
    %81 = sst [smem:[%s80]] 384
    %s82 = scalar_lea.smem [#allocation14], 2
    %83 = sst [smem:[%s82]] 3
    %s84 = scalar_lea.smem [#allocation14], 3
    %85 = sst [smem:[%s84]] 64
    %s86 = scalar_lea.smem [#allocation14], 4
    %87 = sst [smem:[%s86]] 128
    %s88 = scalar_lea.smem [#allocation14], 5
    %89 = sst [smem:[%s88]] 2
    %s90 = scalar_lea.smem [#allocation14], 6
    %91 = sst [smem:[%s90]] 192
    %s92 = scalar_lea.smem [#allocation14], 7
    %93 = sst [smem:[%s92]] 64
    %s94 = scalar_lea.smem [#allocation14], 8
    %95 = sst [smem:[%s94]] 4
    %97 = dma.general %s7, 3072, %s76, [#allocation6], [#allocation13], [#allocation14], %s74, 0
    %s98 = scalar_lea.sflag [#allocation6], 1
    %s100 = sshll.u32 1, 14
    %s101 = sxor.u32 4294967295, %s100
    %s103 = sadd.s32 2, %s67
    %s105 = sshll.u32 7, 26
    %s106 = sxor.u32 4294967295, %s105
    %s107 = sand.u32 0, %s106
    %s108 = sshll.u32 %s103, 26
    %s109 = sor.u32 %s107, %s108
    %s110 = sshll.u32 [#allocation3], 4
    %s111 = int_to_ptr.vmem [resolvable:$true] %s110
    %114 = sst [smem:[#allocation16]] 384
    %s115 = scalar_lea.smem [#allocation16], 1
    %116 = sst [smem:[%s115]] 384
    %s117 = scalar_lea.smem [#allocation16], 2
    %118 = sst [smem:[%s117]] 3
    %s119 = scalar_lea.smem [#allocation16], 3
    %120 = sst [smem:[%s119]] 64
    %s121 = scalar_lea.smem [#allocation16], 4
    %122 = sst [smem:[%s121]] 128
    %s123 = scalar_lea.smem [#allocation16], 5
    %124 = sst [smem:[%s123]] 2
    %s125 = scalar_lea.smem [#allocation16], 6
    %126 = sst [smem:[%s125]] 192
    %s127 = scalar_lea.smem [#allocation16], 7
    %128 = sst [smem:[%s127]] 64
    %s129 = scalar_lea.smem [#allocation16], 8
    %130 = sst [smem:[%s129]] 4
    %132 = dma.general %s8, 3072, %s111, %s98, [#allocation15], [#allocation16], %s109, 0
    %s133 = scalar_lea.sflag [#allocation6], 2
    %s135 = sshll.u32 1, 14
    %s136 = sxor.u32 4294967295, %s135
    %s138 = sadd.s32 2, %s67
    %s140 = sshll.u32 7, 26
    %s141 = sxor.u32 4294967295, %s140
    %s142 = sand.u32 0, %s141
    %s143 = sshll.u32 %s138, 26
    %s144 = sor.u32 %s142, %s143
    %s145 = sshll.u32 [#allocation4], 4
    %s146 = int_to_ptr.vmem [resolvable:$true] %s145
    %149 = sst [smem:[#allocation18]] 384
    %s150 = scalar_lea.smem [#allocation18], 1
    %151 = sst [smem:[%s150]] 384
    %s152 = scalar_lea.smem [#allocation18], 2
    %153 = sst [smem:[%s152]] 3
    %s154 = scalar_lea.smem [#allocation18], 3
    %155 = sst [smem:[%s154]] 64
    %s156 = scalar_lea.smem [#allocation18], 4
    %157 = sst [smem:[%s156]] 128
    %s158 = scalar_lea.smem [#allocation18], 5
    %159 = sst [smem:[%s158]] 2
    %s160 = scalar_lea.smem [#allocation18], 6
    %161 = sst [smem:[%s160]] 192
    %s162 = scalar_lea.smem [#allocation18], 7
    %163 = sst [smem:[%s162]] 64
    %s164 = scalar_lea.smem [#allocation18], 8
    %165 = sst [smem:[%s164]] 4
    %167 = dma.general %s9, 3072, %s146, %s133, [#allocation17], [#allocation18], %s144, 0
    %s168 = scalar_lea.sflag [#allocation6], 3
    %p170 = scmp.lt.u32.totalorder 64, 8
    %p171 = pneg %p170
    // Predicated region
    $region54: #{tpu_custom_call.1} parent=1 // pred_check
      _
    $region55: #{tpu_custom_call.1} parent=1 // pred_check_branch
      %173 = sbr.rel (%p170) target = $region57
    $region56: #{tpu_custom_call.1} parent=1 // pred_region
      %s188 = sand.u32 64, 7
      %p189 = scmp.eq.s32.totalorder %s188, 0
      // Predicated region
      $region69: #{tpu_custom_call.1} parent=56 // pred_check
        %p190 = pneg %p189
      $region70: #{tpu_custom_call.1} parent=56 // pred_check_branch
        %192 = sbr.rel (%p190) target = $region72
      $region71: #{tpu_custom_call.1} parent=56 // pred_region
        loop: start=0, step=1, limit=1
        $region73: #{tpu_custom_call.1} parent=71 // loop_pre_header
          _
        $region74: #{tpu_custom_call.1} parent=71 // loop_header
          %s194 = sphi 0, %s198
          %p195 = scmp.ge.s32.totalorder %s194, 1
          %s199 = sphi %s12, %s12
          %s200 = sphi [#allocation5], [#allocation5]
        $region75: #{tpu_custom_call.1} parent=71 // loop_header_branch
          %197 = sbr.rel (%p195) target = $region79
        $region76: #{tpu_custom_call.1} parent=71 // loop_body
          %v201 = vld [vmem:[%s199] sm:$0xff]
          %202 = vst [vmem:[%s200] sm:$0xff] %v201
          %v203 = vld [vmem:[%s199 + $0x8] sm:$0xff]
          %204 = vst [vmem:[%s200 + $0x8] sm:$0xff] %v203
          %v205 = vld [vmem:[%s199 + $0x10] sm:$0xff]
          %206 = vst [vmem:[%s200 + $0x10] sm:$0xff] %v205
          %v207 = vld [vmem:[%s199 + $0x18] sm:$0xff]
          %208 = vst [vmem:[%s200 + $0x18] sm:$0xff] %v207
          %v209 = vld [vmem:[%s199 + $0x20] sm:$0xff]
          %210 = vst [vmem:[%s200 + $0x20] sm:$0xff] %v209
          %v211 = vld [vmem:[%s199 + $0x28] sm:$0xff]
          %212 = vst [vmem:[%s200 + $0x28] sm:$0xff] %v211
          %v213 = vld [vmem:[%s199 + $0x30] sm:$0xff]
          %214 = vst [vmem:[%s200 + $0x30] sm:$0xff] %v213
          %v215 = vld [vmem:[%s199 + $0x38] sm:$0xff]
          %216 = vst [vmem:[%s200 + $0x38] sm:$0xff] %v215
        $region77: #{tpu_custom_call.1} parent=71 // loop_footer
          %s198 = sadd.s32 1, %s194
        $region78: #{tpu_custom_call.1} parent=71 // loop_footer_branch
          %193 = sbr.rel target = $region74
        $region79: #{tpu_custom_call.1} parent=71 // loop_exit
          _
      $region72: #{tpu_custom_call.1} parent=56 // pred_fallthru
        _
      %p217 = pneg %p189
      // Predicated region
      $region80: #{tpu_custom_call.1} parent=56 // pred_check
        _
      $region81: #{tpu_custom_call.1} parent=56 // pred_check_branch
        %219 = sbr.rel (%p189) target = $region83
      $region82: #{tpu_custom_call.1} parent=56 // pred_region
        %s220 = sand.u32 64, 7
      $region83: #{tpu_custom_call.1} parent=56 // pred_fallthru
        _
    $region57: #{tpu_custom_call.1} parent=1 // pred_fallthru
      _
    // Predicated region
    $region58: #{tpu_custom_call.1} parent=1 // pred_check
      %p174 = pneg %p170
    $region59: #{tpu_custom_call.1} parent=1 // pred_check_branch
      %176 = sbr.rel (%p174) target = $region61
    $region60: #{tpu_custom_call.1} parent=1 // pred_region
      %s177 = sshllo.u32 0, 64
      loop: start=0, step=1, limit=1
      $region62: #{tpu_custom_call.1} parent=60 // loop_pre_header
        _
      $region63: #{tpu_custom_call.1} parent=60 // loop_header
        %s179 = sphi 0, %s183
        %p180 = scmp.ge.s32.totalorder %s179, 1
        %s184 = sphi %s12, %s12
        %s185 = sphi [#allocation5], [#allocation5]
      $region64: #{tpu_custom_call.1} parent=60 // loop_header_branch
        %182 = sbr.rel (%p180) target = $region68
      $region65: #{tpu_custom_call.1} parent=60 // loop_body
        %v186 = vld [vmem:[%s184] sm:%s177]
        %187 = vst [vmem:[%s185] sm:%s177] %v186
      $region66: #{tpu_custom_call.1} parent=60 // loop_footer
        %s183 = sadd.s32 1, %s179
      $region67: #{tpu_custom_call.1} parent=60 // loop_footer_branch
        %178 = sbr.rel target = $region63
      $region68: #{tpu_custom_call.1} parent=60 // loop_exit
        _
    $region61: #{tpu_custom_call.1} parent=1 // pred_fallthru
      _
    // Predicated region
    $region84: #{tpu_custom_call.1} parent=1 // pred_check
      _
    $region85: #{tpu_custom_call.1} parent=1 // pred_check_branch
      %223 = sbr.rel (0) target = $region87
    $region86: #{tpu_custom_call.1} parent=1 // pred_region
      %224 = vsyncadd %s168, 1024
    $region87: #{tpu_custom_call.1} parent=1 // pred_fallthru
      _
    %v225 = vld [vmem:[%s0] sm:$0xff]
    %v226 = vld [vmem:[%s2] sm:$0x7]
    %228 = vset.pattern.permute.xlu0 0
    %229 = vperm.xlu0 %228, %v225
    %v230 = vpop.permute.xlu0 %229
    %v233 = vlaneseq
    %v234 = vshrl.u32 %v233, 7
    %v235 = vsub.s32 0, %v234
    %v236 = vrot.slane %v226, %v235
    %v237 = vlaneseq
    %v238 = vshrl.u32 %v237, 7
    %v239 = vsub.s32 1, %v238
    %v240 = vrot.slane %v226, %v239
    %v241 = vlaneseq
    %v242 = vshrl.u32 %v241, 7
    %v243 = vsub.s32 2, %v242
    %v244 = vrot.slane %v226, %v243
    %v248 = vmul.f32 %v230, %v236
    %v249 = vmul.f32 %v230, %v240
    %v250 = vmul.f32 %v230, %v244
    %v251 = vld [vmem:[%s1] sm:$0xff]
    %v252 = vld [vmem:[%s3] sm:$0x7]
    %254 = vset.pattern.permute.xlu0 0
    %255 = vperm.xlu0 %254, %v251
    %v256 = vpop.permute.xlu0 %255
    %v259 = vlaneseq
    %v260 = vshrl.u32 %v259, 7
    %v261 = vsub.s32 0, %v260
    %v262 = vrot.slane %v252, %v261
    %v263 = vlaneseq
    %v264 = vshrl.u32 %v263, 7
    %v265 = vsub.s32 1, %v264
    %v266 = vrot.slane %v252, %v265
    %v267 = vlaneseq
    %v268 = vshrl.u32 %v267, 7
    %v269 = vsub.s32 2, %v268
    %v270 = vrot.slane %v252, %v269
    %v274 = vmul.f32 %v256, %v262
    %v275 = vmul.f32 %v256, %v266
    %v276 = vmul.f32 %v256, %v270
    %v277 = vadd.f32 %v248, %v274
    %v278 = vadd.f32 %v249, %v275
    %v279 = vadd.f32 %v250, %v276
    %v280 = vld [vmem:[%s5] sm:$0x7]
    %v282 = vlaneseq
    %v283 = vshrl.u32 %v282, 7
    %v284 = vsub.s32 0, %v283
    %v285 = vrot.slane %v280, %v284
    %v286 = vlaneseq
    %v287 = vshrl.u32 %v286, 7
    %v288 = vsub.s32 1, %v287
    %v289 = vrot.slane %v280, %v288
    %v290 = vlaneseq
    %v291 = vshrl.u32 %v290, 7
    %v292 = vsub.s32 2, %v291
    %v293 = vrot.slane %v280, %v292
    %v297 = vadd.f32 %v277, %v285
    %v298 = vadd.f32 %v278, %v289
    %v299 = vadd.f32 %v279, %v293
    %v300 = vld [vmem:[#allocation7] sm:$0xff]
    %v301 = vld [vmem:[#allocation7 + $0x8] sm:$0xf]
    %v302 = vld [vmem:[#allocation7 + $0xc] sm:$0xff]
    %v303 = vld [vmem:[#allocation7 + $0x14] sm:$0xf]
    %v304 = vld [vmem:[#allocation7 + $0x18] sm:$0xff]
    %v305 = vld [vmem:[#allocation7 + $0x20] sm:$0xf]
    %v306 = vld [vmem:[#allocation7 + $0x24] sm:$0xff]
    %v307 = vld [vmem:[#allocation7 + $0x2c] sm:$0xf]
    %v308 = vld [vmem:[#allocation7 + $0x30] sm:$0xff]
    %v309 = vld [vmem:[#allocation7 + $0x38] sm:$0xf]
    %v310 = vld [vmem:[#allocation7 + $0x3c] sm:$0xff]
    %v311 = vld [vmem:[#allocation7 + $0x44] sm:$0xf]
    %v312 = vld [vmem:[#allocation7 + $0x48] sm:$0xff]
    %v313 = vld [vmem:[#allocation7 + $0x50] sm:$0xf]
    %v314 = vld [vmem:[#allocation7 + $0x54] sm:$0xff]
    %v315 = vld [vmem:[#allocation7 + $0x5c] sm:$0xf]
    %v316 = vld [vmem:[#allocation7 + $0x60] sm:$0xff]
    %v317 = vld [vmem:[#allocation7 + $0x68] sm:$0xf]
    %v318 = vld [vmem:[#allocation7 + $0x6c] sm:$0xff]
    %v319 = vld [vmem:[#allocation7 + $0x74] sm:$0xf]
    %v320 = vld [vmem:[#allocation7 + $0x78] sm:$0xff]
    %v321 = vld [vmem:[#allocation7 + $0x80] sm:$0xf]
    %v322 = vld [vmem:[#allocation7 + $0x84] sm:$0xff]
    %v323 = vld [vmem:[#allocation7 + $0x8c] sm:$0xf]
    %v324 = vld [vmem:[#allocation7 + $0x90] sm:$0xff]
    %v325 = vld [vmem:[#allocation7 + $0x98] sm:$0xf]
    %v326 = vld [vmem:[#allocation7 + $0x9c] sm:$0xff]
    %v327 = vld [vmem:[#allocation7 + $0xa4] sm:$0xf]
    %v328 = vld [vmem:[#allocation7 + $0xa8] sm:$0xff]
    %v329 = vld [vmem:[#allocation7 + $0xb0] sm:$0xf]
    %v330 = vld [vmem:[#allocation7 + $0xb4] sm:$0xff]
    %v331 = vld [vmem:[#allocation7 + $0xbc] sm:$0xf]
    %v332 = vunpack.c.l.bf16 %v300
    %v333 = vunpack.c.h.bf16 %v300
    %v334 = vunpack.c.l.bf16 %v301
    %v335 = vunpack.c.l.bf16 %v302
    %v336 = vunpack.c.h.bf16 %v302
    %v337 = vunpack.c.l.bf16 %v303
    %v338 = vunpack.c.l.bf16 %v304
    %v339 = vunpack.c.h.bf16 %v304
    %v340 = vunpack.c.l.bf16 %v305
    %v341 = vunpack.c.l.bf16 %v306
    %v342 = vunpack.c.h.bf16 %v306
    %v343 = vunpack.c.l.bf16 %v307
    %v344 = vunpack.c.l.bf16 %v308
    %v345 = vunpack.c.h.bf16 %v308
    %v346 = vunpack.c.l.bf16 %v309
    %v347 = vunpack.c.l.bf16 %v310
    %v348 = vunpack.c.h.bf16 %v310
    %v349 = vunpack.c.l.bf16 %v311
    %v350 = vunpack.c.l.bf16 %v312
    %v351 = vunpack.c.h.bf16 %v312
    %v352 = vunpack.c.l.bf16 %v313
    %v353 = vunpack.c.l.bf16 %v314
    %v354 = vunpack.c.h.bf16 %v314
    %v355 = vunpack.c.l.bf16 %v315
    %v356 = vunpack.c.l.bf16 %v316
    %v357 = vunpack.c.h.bf16 %v316
    %v358 = vunpack.c.l.bf16 %v317
    %v359 = vunpack.c.l.bf16 %v318
    %v360 = vunpack.c.h.bf16 %v318
    %v361 = vunpack.c.l.bf16 %v319
    %v362 = vunpack.c.l.bf16 %v320
    %v363 = vunpack.c.h.bf16 %v320
    %v364 = vunpack.c.l.bf16 %v321
    %v365 = vunpack.c.l.bf16 %v322
    %v366 = vunpack.c.h.bf16 %v322
    %v367 = vunpack.c.l.bf16 %v323
    %v368 = vunpack.c.l.bf16 %v324
    %v369 = vunpack.c.h.bf16 %v324
    %v370 = vunpack.c.l.bf16 %v325
    %v371 = vunpack.c.l.bf16 %v326
    %v372 = vunpack.c.h.bf16 %v326
    %v373 = vunpack.c.l.bf16 %v327
    %v374 = vunpack.c.l.bf16 %v328
    %v375 = vunpack.c.h.bf16 %v328
    %v376 = vunpack.c.l.bf16 %v329
    %v377 = vunpack.c.l.bf16 %v330
    %v378 = vunpack.c.h.bf16 %v330
    %v379 = vunpack.c.l.bf16 %v331
    %v380 = vld [vmem:[%s6] sm:$0x7]
    %v382 = vlaneseq
    %v383 = vshrl.u32 %v382, 7
    %v384 = vsub.s32 0, %v383
    %v385 = vrot.slane %v380, %v384
    %v386 = vlaneseq
    %v387 = vshrl.u32 %v386, 7
    %v388 = vsub.s32 1, %v387
    %v389 = vrot.slane %v380, %v388
    %v390 = vlaneseq
    %v391 = vshrl.u32 %v390, 7
    %v392 = vsub.s32 2, %v391
    %v393 = vrot.slane %v380, %v392
    %397 = vmatprep.subr.mxu0 %v333
    %398 = vmatpush1.msra.mxu0 %v332
    %399 = vmatprep.subr.mxu0 %v336
    %400 = vmatpush1.msra.mxu0 %v335
    %401 = vmatprep.subr.mxu0 %v339
    %402 = vmatpush1.msra.mxu0 %v338
    %403 = vmatprep.subr.mxu0 %v342
    %404 = vmatpush1.msra.mxu0 %v341
    %405 = vmatprep.subr.mxu0 %v345
    %406 = vmatpush1.msra.mxu0 %v344
    %407 = vmatprep.subr.mxu0 %v348
    %408 = vmatpush1.msra.mxu0 %v347
    %409 = vmatprep.subr.mxu0 %v351
    %410 = vmatpush1.msra.mxu0 %v350
    %411 = vmatprep.subr.mxu0 %v354
    %412 = vmatpush1.msra.mxu0 %v353
    %413 = vmatprep.subr.mxu0 %v357
    %414 = vmatpush1.msra.mxu0 %v356
    %415 = vmatprep.subr.mxu0 %v360
    %416 = vmatpush1.msra.mxu0 %v359
    %417 = vmatprep.subr.mxu0 %v363
    %418 = vmatpush1.msra.mxu0 %v362
    %419 = vmatprep.subr.mxu0 %v366
    %420 = vmatpush1.msra.mxu0 %v365
    %421 = vmatprep.subr.mxu0 %v369
    %422 = vmatpush1.msra.mxu0 %v368
    %423 = vmatprep.subr.mxu0 %v372
    %424 = vmatpush1.msra.mxu0 %v371
    %425 = vmatprep.subr.mxu0 %v375
    %426 = vmatpush1.msra.mxu0 %v374
    %427 = vmatprep.subr.mxu0 %v378
    %428 = vmatpush1.msra.mxu0 %v377
    %429 = vmatprep.subr.mxu0 0.0
    %430 = vmatpush1.msra.mxu0 0.0
    %431 = vmatprep.subr.mxu0 0.0
    %432 = vmatpush1.msra.mxu0 0.0
    %433 = vmatprep.subr.mxu0 0.0
    %434 = vmatpush1.msra.mxu0 0.0
    %435 = vmatprep.subr.mxu0 0.0
    %436 = vmatpush1.msra.mxu0 0.0
    %437 = vmatprep.subr.mxu0 0.0
    %438 = vmatpush1.msra.mxu0 0.0
    %439 = vmatprep.subr.mxu0 0.0
    %440 = vmatpush1.msra.mxu0 0.0
    %441 = vmatprep.subr.mxu0 0.0
    %442 = vmatpush1.msra.mxu0 0.0
    %443 = vmatprep.subr.mxu0 0.0
    %444 = vmatpush1.msra.mxu0 0.0
    %445 = vmatprep.subr.mxu0 0.0
    %446 = vmatpush1.msra.mxu0 0.0
    %447 = vmatprep.subr.mxu0 0.0
    %448 = vmatpush1.msra.mxu0 0.0
    %449 = vmatprep.subr.mxu0 0.0
    %450 = vmatpush1.msra.mxu0 0.0
    %451 = vmatprep.subr.mxu0 0.0
    %452 = vmatpush1.msra.mxu0 0.0
    %453 = vmatprep.subr.mxu0 0.0
    %454 = vmatpush1.msra.mxu0 0.0
    %455 = vmatprep.subr.mxu0 0.0
    %456 = vmatpush1.msra.mxu0 0.0
    %457 = vmatprep.subr.mxu0 0.0
    %458 = vmatpush1.msra.mxu0 0.0
    %459 = vmatprep.subr.mxu0 0.0
    %460 = vmatpush1.msra.mxu0 0.0
    %461 = vmatprep.mubr.f32.mxu0 0.0
    %462 = vmatmul.mubr.f32.gmra.mrb[0].mxu0 0.0
    %v463 = vpop.f32.mrb[0].mxu0
    %v464 = vadd.f32 %v385, %v463
    %v465 = vpop.f32.mrb[0].mxu0
    %v466 = vadd.f32 %v389, %v465
    %467 = vdwg.mxu0
    %468 = vmatprep.subr.mxu0 0.0
    %469 = vmatpush1.msra.mxu0 %v334
    %470 = vmatprep.subr.mxu0 0.0
    %471 = vmatpush1.msra.mxu0 %v337
    %472 = vmatprep.subr.mxu0 0.0
    %473 = vmatpush1.msra.mxu0 %v340
    %474 = vmatprep.subr.mxu0 0.0
    %475 = vmatpush1.msra.mxu0 %v343
    %476 = vmatprep.subr.mxu0 0.0
    %477 = vmatpush1.msra.mxu0 %v346
    %478 = vmatprep.subr.mxu0 0.0
    %479 = vmatpush1.msra.mxu0 %v349
    %480 = vmatprep.subr.mxu0 0.0
    %481 = vmatpush1.msra.mxu0 %v352
    %482 = vmatprep.subr.mxu0 0.0
    %483 = vmatpush1.msra.mxu0 %v355
    %484 = vmatprep.subr.mxu0 0.0
    %485 = vmatpush1.msra.mxu0 %v358
    %486 = vmatprep.subr.mxu0 0.0
    %487 = vmatpush1.msra.mxu0 %v361
    %488 = vmatprep.subr.mxu0 0.0
    %489 = vmatpush1.msra.mxu0 %v364
    %490 = vmatprep.subr.mxu0 0.0
    %491 = vmatpush1.msra.mxu0 %v367
    %492 = vmatprep.subr.mxu0 0.0
    %493 = vmatpush1.msra.mxu0 %v370
    %494 = vmatprep.subr.mxu0 0.0
    %495 = vmatpush1.msra.mxu0 %v373
    %496 = vmatprep.subr.mxu0 0.0
    %497 = vmatpush1.msra.mxu0 %v376
    %498 = vmatprep.subr.mxu0 0.0
    %499 = vmatpush1.msra.mxu0 %v379
    %500 = vmatprep.subr.mxu0 0.0
    %501 = vmatpush1.msra.mxu0 0.0
    %502 = vmatprep.subr.mxu0 0.0
    %503 = vmatpush1.msra.mxu0 0.0
    %504 = vmatprep.subr.mxu0 0.0
    %505 = vmatpush1.msra.mxu0 0.0
    %506 = vmatprep.subr.mxu0 0.0
    %507 = vmatpush1.msra.mxu0 0.0
    %508 = vmatprep.subr.mxu0 0.0
    %509 = vmatpush1.msra.mxu0 0.0
    %510 = vmatprep.subr.mxu0 0.0
    %511 = vmatpush1.msra.mxu0 0.0
    %512 = vmatprep.subr.mxu0 0.0
    %513 = vmatpush1.msra.mxu0 0.0
    %514 = vmatprep.subr.mxu0 0.0
    %515 = vmatpush1.msra.mxu0 0.0
    %516 = vmatprep.subr.mxu0 0.0
    %517 = vmatpush1.msra.mxu0 0.0
    %518 = vmatprep.subr.mxu0 0.0
    %519 = vmatpush1.msra.mxu0 0.0
    %520 = vmatprep.subr.mxu0 0.0
    %521 = vmatpush1.msra.mxu0 0.0
    %522 = vmatprep.subr.mxu0 0.0
    %523 = vmatpush1.msra.mxu0 0.0
    %524 = vmatprep.subr.mxu0 0.0
    %525 = vmatpush1.msra.mxu0 0.0
    %526 = vmatprep.subr.mxu0 0.0
    %527 = vmatpush1.msra.mxu0 0.0
    %528 = vmatprep.subr.mxu0 0.0
    %529 = vmatpush1.msra.mxu0 0.0
    %530 = vmatprep.subr.mxu0 0.0
    %531 = vmatpush1.msra.mxu0 0.0
    %532 = vmatprep.mubr.f32.mxu0 0.0
    %533 = vmatmul.mubr.f32.gmra.mrb[0].mxu0 0.0
    %v534 = vpop.f32.mrb[0].mxu0
    %v535 = vadd.f32 %v393, %v534
    %v536 = vpop.f32.mrb[0].mxu0
    %537 = vdwg.mxu0
    %v538 = vadd.f32 %v297, %v464
    %v539 = vadd.f32 %v298, %v466
    %v540 = vxor.u32 %v538, 2147483648
    %v541 = vxor.u32 %v539, 2147483648
    %v542 = vmul.f32 %v540, 1.442695
    %v543 = vpow.pop %v542
    %v544 = vmul.f32 %v541, 1.442695
    %v545 = vpow.pop %v544
    %v546 = vadd.f32 %v543, 1.0
    %v547 = vadd.f32 %v545, 1.0
    %v548 = vrcp.pop %v546
    %v549 = vmul.f32 1.0, %v548
    %v550 = vrcp.pop %v547
    %v551 = vmul.f32 1.0, %v550
    %v552 = vmul.f32 %v549, %v535
    %v553 = vadd.f32 %v299, %v552
    %v554 = vtanh.pop %v553
    %v555 = vsub.f32 1.0, %v551
    %v556 = vmul.f32 %v555, %v554
    %v557 = vmul.f32 %v551, 0.0
    %v558 = vadd.f32 %v556, %v557
    %559 = vmatprep.subr.mxu0 %v333
    %560 = vmatpush1.msra.mxu0 %v332
    %561 = vmatprep.subr.mxu0 %v336
    %562 = vmatpush1.msra.mxu0 %v335
    %563 = vmatprep.subr.mxu0 %v339
    %564 = vmatpush1.msra.mxu0 %v338
    %565 = vmatprep.subr.mxu0 %v342
    %566 = vmatpush1.msra.mxu0 %v341
    %567 = vmatprep.subr.mxu0 %v345
    %568 = vmatpush1.msra.mxu0 %v344
    %569 = vmatprep.subr.mxu0 %v348
    %570 = vmatpush1.msra.mxu0 %v347
    %571 = vmatprep.subr.mxu0 %v351
    %572 = vmatpush1.msra.mxu0 %v350
    %573 = vmatprep.subr.mxu0 %v354
    %574 = vmatpush1.msra.mxu0 %v353
    %575 = vmatprep.subr.mxu0 %v357
    %576 = vmatpush1.msra.mxu0 %v356
    %577 = vmatprep.subr.mxu0 %v360
    %578 = vmatpush1.msra.mxu0 %v359
    %579 = vmatprep.subr.mxu0 %v363
    %580 = vmatpush1.msra.mxu0 %v362
    %581 = vmatprep.subr.mxu0 %v366
    %582 = vmatpush1.msra.mxu0 %v365
    %583 = vmatprep.subr.mxu0 %v369
    %584 = vmatpush1.msra.mxu0 %v368
    %585 = vmatprep.subr.mxu0 %v372
    %586 = vmatpush1.msra.mxu0 %v371
    %587 = vmatprep.subr.mxu0 %v375
    %588 = vmatpush1.msra.mxu0 %v374
    %589 = vmatprep.subr.mxu0 %v378
    %590 = vmatpush1.msra.mxu0 %v377
    %591 = vmatprep.subr.mxu0 0.0
    %592 = vmatpush1.msra.mxu0 0.0
    %593 = vmatprep.subr.mxu0 0.0
    %594 = vmatpush1.msra.mxu0 0.0
    %595 = vmatprep.subr.mxu0 0.0
    %596 = vmatpush1.msra.mxu0 0.0
    %597 = vmatprep.subr.mxu0 0.0
    %598 = vmatpush1.msra.mxu0 0.0
    %599 = vmatprep.subr.mxu0 0.0
    %600 = vmatpush1.msra.mxu0 0.0
    %601 = vmatprep.subr.mxu0 0.0
    %602 = vmatpush1.msra.mxu0 0.0
    %603 = vmatprep.subr.mxu0 0.0
    %604 = vmatpush1.msra.mxu0 0.0
    %605 = vmatprep.subr.mxu0 0.0
    %606 = vmatpush1.msra.mxu0 0.0
    %607 = vmatprep.subr.mxu0 0.0
    %608 = vmatpush1.msra.mxu0 0.0
    %609 = vmatprep.subr.mxu0 0.0
    %610 = vmatpush1.msra.mxu0 0.0
    %611 = vmatprep.subr.mxu0 0.0
    %612 = vmatpush1.msra.mxu0 0.0
    %613 = vmatprep.subr.mxu0 0.0
    %614 = vmatpush1.msra.mxu0 0.0
    %615 = vmatprep.subr.mxu0 0.0
    %616 = vmatpush1.msra.mxu0 0.0
    %617 = vmatprep.subr.mxu0 0.0
    %618 = vmatpush1.msra.mxu0 0.0
    %619 = vmatprep.subr.mxu0 0.0
    %620 = vmatpush1.msra.mxu0 0.0
    %621 = vmatprep.subr.mxu0 0.0
    %622 = vmatpush1.msra.mxu0 0.0
    %623 = vmatprep.mubr.f32.mxu0 0.0
    %624 = vmatmul.mubr.f32.gmra.mrb[0].mxu0 %v558
    %v625 = vpop.f32.mrb[0].mxu0
    %v626 = vadd.f32 %v385, %v625
    %v627 = vpop.f32.mrb[0].mxu0
    %v628 = vadd.f32 %v389, %v627
    %629 = vdwg.mxu0
    %630 = vmatprep.subr.mxu0 0.0
    %631 = vmatpush1.msra.mxu0 %v334
    %632 = vmatprep.subr.mxu0 0.0
    %633 = vmatpush1.msra.mxu0 %v337
    %634 = vmatprep.subr.mxu0 0.0
    %635 = vmatpush1.msra.mxu0 %v340
    %636 = vmatprep.subr.mxu0 0.0
    %637 = vmatpush1.msra.mxu0 %v343
    %638 = vmatprep.subr.mxu0 0.0
    %639 = vmatpush1.msra.mxu0 %v346
    %640 = vmatprep.subr.mxu0 0.0
    %641 = vmatpush1.msra.mxu0 %v349
    %642 = vmatprep.subr.mxu0 0.0
    %643 = vmatpush1.msra.mxu0 %v352
    %644 = vmatprep.subr.mxu0 0.0
    %645 = vmatpush1.msra.mxu0 %v355
    %646 = vmatprep.subr.mxu0 0.0
    %647 = vmatpush1.msra.mxu0 %v358
    %648 = vmatprep.subr.mxu0 0.0
    %649 = vmatpush1.msra.mxu0 %v361
    %650 = vmatprep.subr.mxu0 0.0
    %651 = vmatpush1.msra.mxu0 %v364
    %652 = vmatprep.subr.mxu0 0.0
    %653 = vmatpush1.msra.mxu0 %v367
    %654 = vmatprep.subr.mxu0 0.0
    %655 = vmatpush1.msra.mxu0 %v370
    %656 = vmatprep.subr.mxu0 0.0
    %657 = vmatpush1.msra.mxu0 %v373
    %658 = vmatprep.subr.mxu0 0.0
    %659 = vmatpush1.msra.mxu0 %v376
    %660 = vmatprep.subr.mxu0 0.0
    %661 = vmatpush1.msra.mxu0 %v379
    %662 = vmatprep.subr.mxu0 0.0
    %663 = vmatpush1.msra.mxu0 0.0
    %664 = vmatprep.subr.mxu0 0.0
    %665 = vmatpush1.msra.mxu0 0.0
    %666 = vmatprep.subr.mxu0 0.0
    %667 = vmatpush1.msra.mxu0 0.0
    %668 = vmatprep.subr.mxu0 0.0
    %669 = vmatpush1.msra.mxu0 0.0
    %670 = vmatprep.subr.mxu0 0.0
    %671 = vmatpush1.msra.mxu0 0.0
    %672 = vmatprep.subr.mxu0 0.0
    %673 = vmatpush1.msra.mxu0 0.0
    %674 = vmatprep.subr.mxu0 0.0
    %675 = vmatpush1.msra.mxu0 0.0
    %676 = vmatprep.subr.mxu0 0.0
    %677 = vmatpush1.msra.mxu0 0.0
    %678 = vmatprep.subr.mxu0 0.0
    %679 = vmatpush1.msra.mxu0 0.0
    %680 = vmatprep.subr.mxu0 0.0
    %681 = vmatpush1.msra.mxu0 0.0
    %682 = vmatprep.subr.mxu0 0.0
    %683 = vmatpush1.msra.mxu0 0.0
    %684 = vmatprep.subr.mxu0 0.0
    %685 = vmatpush1.msra.mxu0 0.0
    %686 = vmatprep.subr.mxu0 0.0
    %687 = vmatpush1.msra.mxu0 0.0
    %688 = vmatprep.subr.mxu0 0.0
    %689 = vmatpush1.msra.mxu0 0.0
    %690 = vmatprep.subr.mxu0 0.0
    %691 = vmatpush1.msra.mxu0 0.0
    %692 = vmatprep.subr.mxu0 0.0
    %693 = vmatpush1.msra.mxu0 0.0
    %694 = vmatprep.mubr.f32.mxu0 0.0
    %695 = vmatmul.mubr.f32.gmra.mrb[0].mxu0 %v558
    %v696 = vpop.f32.mrb[0].mxu0
    %v697 = vadd.f32 %v393, %v696
    %v698 = vpop.f32.mrb[0].mxu0
    %699 = vdwg.mxu0
    %v702 = vrot.slane %v626, 7
    %v703 = vrot.slane %v628, 7
    %v706 = vadd.f32 %v297, %v702
    %v707 = vadd.f32 %v298, %v703
    %v708 = vxor.u32 %v706, 2147483648
    %v709 = vxor.u32 %v707, 2147483648
    %v710 = vmul.f32 %v708, 1.442695
    %v711 = vpow.pop %v710
    %v712 = vmul.f32 %v709, 1.442695
    %v713 = vpow.pop %v712
    %v714 = vadd.f32 %v711, 1.0
    %v715 = vadd.f32 %v713, 1.0
    %v716 = vrcp.pop %v714
    %v717 = vmul.f32 1.0, %v716
    %v718 = vrcp.pop %v715
    %v719 = vmul.f32 1.0, %v718
    %v721 = vrot.slane %v697, 7
    %v723 = vmul.f32 %v717, %v721
    %v724 = vadd.f32 %v299, %v723
    %v725 = vtanh.pop %v724
    %v726 = vsub.f32 1.0, %v719
    %v727 = vmul.f32 %v726, %v725
    %v729 = vrot.slane %v558, 7
    %v731 = vmul.f32 %v719, %v729
    %v732 = vadd.f32 %v727, %v731
    %v734 = vrot.slane %v732, 1
    %736 = vmatprep.subr.mxu0 %v333
    %737 = vmatpush1.msra.mxu0 %v332
    %738 = vmatprep.subr.mxu0 %v336
    %739 = vmatpush1.msra.mxu0 %v335
    %740 = vmatprep.subr.mxu0 %v339
    %741 = vmatpush1.msra.mxu0 %v338
    %742 = vmatprep.subr.mxu0 %v342
    %743 = vmatpush1.msra.mxu0 %v341
    %744 = vmatprep.subr.mxu0 %v345
    %745 = vmatpush1.msra.mxu0 %v344
    %746 = vmatprep.subr.mxu0 %v348
    %747 = vmatpush1.msra.mxu0 %v347
    %748 = vmatprep.subr.mxu0 %v351
    %749 = vmatpush1.msra.mxu0 %v350
    %750 = vmatprep.subr.mxu0 %v354
    %751 = vmatpush1.msra.mxu0 %v353
    %752 = vmatprep.subr.mxu0 %v357
    %753 = vmatpush1.msra.mxu0 %v356
    %754 = vmatprep.subr.mxu0 %v360
    %755 = vmatpush1.msra.mxu0 %v359
    %756 = vmatprep.subr.mxu0 %v363
    %757 = vmatpush1.msra.mxu0 %v362
    %758 = vmatprep.subr.mxu0 %v366
    %759 = vmatpush1.msra.mxu0 %v365
    %760 = vmatprep.subr.mxu0 %v369
    %761 = vmatpush1.msra.mxu0 %v368
    %762 = vmatprep.subr.mxu0 %v372
    %763 = vmatpush1.msra.mxu0 %v371
    %764 = vmatprep.subr.mxu0 %v375
    %765 = vmatpush1.msra.mxu0 %v374
    %766 = vmatprep.subr.mxu0 %v378
    %767 = vmatpush1.msra.mxu0 %v377
    %768 = vmatprep.subr.mxu0 0.0
    %769 = vmatpush1.msra.mxu0 0.0
    %770 = vmatprep.subr.mxu0 0.0
    %771 = vmatpush1.msra.mxu0 0.0
    %772 = vmatprep.subr.mxu0 0.0
    %773 = vmatpush1.msra.mxu0 0.0
    %774 = vmatprep.subr.mxu0 0.0
    %775 = vmatpush1.msra.mxu0 0.0
    %776 = vmatprep.subr.mxu0 0.0
    %777 = vmatpush1.msra.mxu0 0.0
    %778 = vmatprep.subr.mxu0 0.0
    %779 = vmatpush1.msra.mxu0 0.0
    %780 = vmatprep.subr.mxu0 0.0
    %781 = vmatpush1.msra.mxu0 0.0
    %782 = vmatprep.subr.mxu0 0.0
    %783 = vmatpush1.msra.mxu0 0.0
    %784 = vmatprep.subr.mxu0 0.0
    %785 = vmatpush1.msra.mxu0 0.0
    %786 = vmatprep.subr.mxu0 0.0
    %787 = vmatpush1.msra.mxu0 0.0
    %788 = vmatprep.subr.mxu0 0.0
    %789 = vmatpush1.msra.mxu0 0.0
    %790 = vmatprep.subr.mxu0 0.0
    %791 = vmatpush1.msra.mxu0 0.0
    %792 = vmatprep.subr.mxu0 0.0
    %793 = vmatpush1.msra.mxu0 0.0
    %794 = vmatprep.subr.mxu0 0.0
    %795 = vmatpush1.msra.mxu0 0.0
    %796 = vmatprep.subr.mxu0 0.0
    %797 = vmatpush1.msra.mxu0 0.0
    %798 = vmatprep.subr.mxu0 0.0
    %799 = vmatpush1.msra.mxu0 0.0
    %800 = vmatprep.mubr.f32.mxu0 0.0
    %801 = vmatmul.mubr.f32.gmra.mrb[0].mxu0 %v734
    %v802 = vpop.f32.mrb[0].mxu0
    %v803 = vadd.f32 %v385, %v802
    %v804 = vpop.f32.mrb[0].mxu0
    %v805 = vadd.f32 %v389, %v804
    %806 = vdwg.mxu0
    %807 = vmatprep.subr.mxu0 0.0
    %808 = vmatpush1.msra.mxu0 %v334
    %809 = vmatprep.subr.mxu0 0.0
    %810 = vmatpush1.msra.mxu0 %v337
    %811 = vmatprep.subr.mxu0 0.0
    %812 = vmatpush1.msra.mxu0 %v340
    %813 = vmatprep.subr.mxu0 0.0
    %814 = vmatpush1.msra.mxu0 %v343
    %815 = vmatprep.subr.mxu0 0.0
    %816 = vmatpush1.msra.mxu0 %v346
    %817 = vmatprep.subr.mxu0 0.0
    %818 = vmatpush1.msra.mxu0 %v349
    %819 = vmatprep.subr.mxu0 0.0
    %820 = vmatpush1.msra.mxu0 %v352
    %821 = vmatprep.subr.mxu0 0.0
    %822 = vmatpush1.msra.mxu0 %v355
    %823 = vmatprep.subr.mxu0 0.0
    %824 = vmatpush1.msra.mxu0 %v358
    %825 = vmatprep.subr.mxu0 0.0
    %826 = vmatpush1.msra.mxu0 %v361
    %827 = vmatprep.subr.mxu0 0.0
    %828 = vmatpush1.msra.mxu0 %v364
    %829 = vmatprep.subr.mxu0 0.0
    %830 = vmatpush1.msra.mxu0 %v367
    %831 = vmatprep.subr.mxu0 0.0
    %832 = vmatpush1.msra.mxu0 %v370
    %833 = vmatprep.subr.mxu0 0.0
    %834 = vmatpush1.msra.mxu0 %v373
    %835 = vmatprep.subr.mxu0 0.0
    %836 = vmatpush1.msra.mxu0 %v376
    %837 = vmatprep.subr.mxu0 0.0
    %838 = vmatpush1.msra.mxu0 %v379
    %839 = vmatprep.subr.mxu0 0.0
    %840 = vmatpush1.msra.mxu0 0.0
    %841 = vmatprep.subr.mxu0 0.0
    %842 = vmatpush1.msra.mxu0 0.0
    %843 = vmatprep.subr.mxu0 0.0
    %844 = vmatpush1.msra.mxu0 0.0
    %845 = vmatprep.subr.mxu0 0.0
    %846 = vmatpush1.msra.mxu0 0.0
    %847 = vmatprep.subr.mxu0 0.0
    %848 = vmatpush1.msra.mxu0 0.0
    %849 = vmatprep.subr.mxu0 0.0
    %850 = vmatpush1.msra.mxu0 0.0
    %851 = vmatprep.subr.mxu0 0.0
    %852 = vmatpush1.msra.mxu0 0.0
    %853 = vmatprep.subr.mxu0 0.0
    %854 = vmatpush1.msra.mxu0 0.0
    %855 = vmatprep.subr.mxu0 0.0
    %856 = vmatpush1.msra.mxu0 0.0
    %857 = vmatprep.subr.mxu0 0.0
    %858 = vmatpush1.msra.mxu0 0.0
    %859 = vmatprep.subr.mxu0 0.0
    %860 = vmatpush1.msra.mxu0 0.0
    %861 = vmatprep.subr.mxu0 0.0
    %862 = vmatpush1.msra.mxu0 0.0
    %863 = vmatprep.subr.mxu0 0.0
    %864 = vmatpush1.msra.mxu0 0.0
    %865 = vmatprep.subr.mxu0 0.0
    %866 = vmatpush1.msra.mxu0 0.0
    %867 = vmatprep.subr.mxu0 0.0
    %868 = vmatpush1.msra.mxu0 0.0
    %869 = vmatprep.subr.mxu0 0.0
    %870 = vmatpush1.msra.mxu0 0.0
    %871 = vmatprep.mubr.f32.mxu0 0.0
    %872 = vmatmul.mubr.f32.gmra.mrb[0].mxu0 %v734
    %v873 = vpop.f32.mrb[0].mxu0
    %v874 = vadd.f32 %v393, %v873
    %v875 = vpop.f32.mrb[0].mxu0
    %876 = vdwg.mxu0
    %v879 = vrot.slane %v803, 6
    %v880 = vrot.slane %v805, 6
    %v883 = vadd.f32 %v297, %v879
    %v884 = vadd.f32 %v298, %v880
    %v885 = vxor.u32 %v883, 2147483648
    %v886 = vxor.u32 %v884, 2147483648
    %v887 = vmul.f32 %v885, 1.442695
    %v888 = vpow.pop %v887
    %v889 = vmul.f32 %v886, 1.442695
    %v890 = vpow.pop %v889
    %v891 = vadd.f32 %v888, 1.0
    %v892 = vadd.f32 %v890, 1.0
    %v893 = vrcp.pop %v891
    %v894 = vmul.f32 1.0, %v893
    %v895 = vrcp.pop %v892
    %v896 = vmul.f32 1.0, %v895
    %v898 = vrot.slane %v874, 6
    %v900 = vmul.f32 %v894, %v898
    %v901 = vadd.f32 %v299, %v900
    %v902 = vtanh.pop %v901
    %v903 = vsub.f32 1.0, %v896
    %v904 = vmul.f32 %v903, %v902
    %v905 = vrot.slane %v732, 7
    %v907 = vmul.f32 %v896, %v905
    %v908 = vadd.f32 %v904, %v907
    %v910 = vrot.slane %v908, 2
    %912 = vmatprep.subr.mxu0 %v333
    %913 = vmatpush1.msra.mxu0 %v332
    %914 = vmatprep.subr.mxu0 %v336
    %915 = vmatpush1.msra.mxu0 %v335
    %916 = vmatprep.subr.mxu0 %v339
    %917 = vmatpush1.msra.mxu0 %v338
    %918 = vmatprep.subr.mxu0 %v342
    %919 = vmatpush1.msra.mxu0 %v341
    %920 = vmatprep.subr.mxu0 %v345
    %921 = vmatpush1.msra.mxu0 %v344
    %922 = vmatprep.subr.mxu0 %v348
    %923 = vmatpush1.msra.mxu0 %v347
    %924 = vmatprep.subr.mxu0 %v351
    %925 = vmatpush1.msra.mxu0 %v350
    %926 = vmatprep.subr.mxu0 %v354
    %927 = vmatpush1.msra.mxu0 %v353
    %928 = vmatprep.subr.mxu0 %v357
    %929 = vmatpush1.msra.mxu0 %v356
    %930 = vmatprep.subr.mxu0 %v360
    %931 = vmatpush1.msra.mxu0 %v359
    %932 = vmatprep.subr.mxu0 %v363
    %933 = vmatpush1.msra.mxu0 %v362
    %934 = vmatprep.subr.mxu0 %v366
    %935 = vmatpush1.msra.mxu0 %v365
    %936 = vmatprep.subr.mxu0 %v369
    %937 = vmatpush1.msra.mxu0 %v368
    %938 = vmatprep.subr.mxu0 %v372
    %939 = vmatpush1.msra.mxu0 %v371
    %940 = vmatprep.subr.mxu0 %v375
    %941 = vmatpush1.msra.mxu0 %v374
    %942 = vmatprep.subr.mxu0 %v378
    %943 = vmatpush1.msra.mxu0 %v377
    %944 = vmatprep.subr.mxu0 0.0
    %945 = vmatpush1.msra.mxu0 0.0
    %946 = vmatprep.subr.mxu0 0.0
    %947 = vmatpush1.msra.mxu0 0.0
    %948 = vmatprep.subr.mxu0 0.0
    %949 = vmatpush1.msra.mxu0 0.0
    %950 = vmatprep.subr.mxu0 0.0
    %951 = vmatpush1.msra.mxu0 0.0
    %952 = vmatprep.subr.mxu0 0.0
    %953 = vmatpush1.msra.mxu0 0.0
    %954 = vmatprep.subr.mxu0 0.0
    %955 = vmatpush1.msra.mxu0 0.0
    %956 = vmatprep.subr.mxu0 0.0
    %957 = vmatpush1.msra.mxu0 0.0
    %958 = vmatprep.subr.mxu0 0.0
    %959 = vmatpush1.msra.mxu0 0.0
    %960 = vmatprep.subr.mxu0 0.0
    %961 = vmatpush1.msra.mxu0 0.0
    %962 = vmatprep.subr.mxu0 0.0
    %963 = vmatpush1.msra.mxu0 0.0
    %964 = vmatprep.subr.mxu0 0.0
    %965 = vmatpush1.msra.mxu0 0.0
    %966 = vmatprep.subr.mxu0 0.0
    %967 = vmatpush1.msra.mxu0 0.0
    %968 = vmatprep.subr.mxu0 0.0
    %969 = vmatpush1.msra.mxu0 0.0
    %970 = vmatprep.subr.mxu0 0.0
    %971 = vmatpush1.msra.mxu0 0.0
    %972 = vmatprep.subr.mxu0 0.0
    %973 = vmatpush1.msra.mxu0 0.0
    %974 = vmatprep.subr.mxu0 0.0
    %975 = vmatpush1.msra.mxu0 0.0
    %976 = vmatprep.mubr.f32.mxu0 0.0
    %977 = vmatmul.mubr.f32.gmra.mrb[0].mxu0 %v910
    %v978 = vpop.f32.mrb[0].mxu0
    %v979 = vadd.f32 %v385, %v978
    %v980 = vpop.f32.mrb[0].mxu0
    %v981 = vadd.f32 %v389, %v980
    %982 = vdwg.mxu0
    %983 = vmatprep.subr.mxu0 0.0
    %984 = vmatpush1.msra.mxu0 %v334
    %985 = vmatprep.subr.mxu0 0.0
    %986 = vmatpush1.msra.mxu0 %v337
    %987 = vmatprep.subr.mxu0 0.0
    %988 = vmatpush1.msra.mxu0 %v340
    %989 = vmatprep.subr.mxu0 0.0
    %990 = vmatpush1.msra.mxu0 %v343
    %991 = vmatprep.subr.mxu0 0.0
    %992 = vmatpush1.msra.mxu0 %v346
    %993 = vmatprep.subr.mxu0 0.0
    %994 = vmatpush1.msra.mxu0 %v349
    %995 = vmatprep.subr.mxu0 0.0
    %996 = vmatpush1.msra.mxu0 %v352
    %997 = vmatprep.subr.mxu0 0.0
    %998 = vmatpush1.msra.mxu0 %v355
    %999 = vmatprep.subr.mxu0 0.0
    %1000 = vmatpush1.msra.mxu0 %v358
    %1001 = vmatprep.subr.mxu0 0.0
    %1002 = vmatpush1.msra.mxu0 %v361
    %1003 = vmatprep.subr.mxu0 0.0
    %1004 = vmatpush1.msra.mxu0 %v364
    %1005 = vmatprep.subr.mxu0 0.0
    %1006 = vmatpush1.msra.mxu0 %v367
    %1007 = vmatprep.subr.mxu0 0.0
    %1008 = vmatpush1.msra.mxu0 %v370
    %1009 = vmatprep.subr.mxu0 0.0
    %1010 = vmatpush1.msra.mxu0 %v373
    %1011 = vmatprep.subr.mxu0 0.0
    %1012 = vmatpush1.msra.mxu0 %v376
    %1013 = vmatprep.subr.mxu0 0.0
    %1014 = vmatpush1.msra.mxu0 %v379
    %1015 = vmatprep.subr.mxu0 0.0
    %1016 = vmatpush1.msra.mxu0 0.0
    %1017 = vmatprep.subr.mxu0 0.0
    %1018 = vmatpush1.msra.mxu0 0.0
    %1019 = vmatprep.subr.mxu0 0.0
    %1020 = vmatpush1.msra.mxu0 0.0
    %1021 = vmatprep.subr.mxu0 0.0
    %1022 = vmatpush1.msra.mxu0 0.0
    %1023 = vmatprep.subr.mxu0 0.0
    %1024 = vmatpush1.msra.mxu0 0.0
    %1025 = vmatprep.subr.mxu0 0.0
    %1026 = vmatpush1.msra.mxu0 0.0
    %1027 = vmatprep.subr.mxu0 0.0
    %1028 = vmatpush1.msra.mxu0 0.0
    %1029 = vmatprep.subr.mxu0 0.0
    %1030 = vmatpush1.msra.mxu0 0.0
    %1031 = vmatprep.subr.mxu0 0.0
    %1032 = vmatpush1.msra.mxu0 0.0
    %1033 = vmatprep.subr.mxu0 0.0
    %1034 = vmatpush1.msra.mxu0 0.0
    %1035 = vmatprep.subr.mxu0 0.0
    %1036 = vmatpush1.msra.mxu0 0.0
    %1037 = vmatprep.subr.mxu0 0.0
    %1038 = vmatpush1.msra.mxu0 0.0
    %1039 = vmatprep.subr.mxu0 0.0
    %1040 = vmatpush1.msra.mxu0 0.0
    %1041 = vmatprep.subr.mxu0 0.0
    %1042 = vmatpush1.msra.mxu0 0.0
    %1043 = vmatprep.subr.mxu0 0.0
    %1044 = vmatpush1.msra.mxu0 0.0
    %1045 = vmatprep.subr.mxu0 0.0
    %1046 = vmatpush1.msra.mxu0 0.0
    %1047 = vmatprep.mubr.f32.mxu0 0.0
    %1048 = vmatmul.mubr.f32.gmra.mrb[0].mxu0 %v910
    %v1049 = vpop.f32.mrb[0].mxu0
    %v1050 = vadd.f32 %v393, %v1049
    %v1051 = vpop.f32.mrb[0].mxu0
    %1052 = vdwg.mxu0
    %v1055 = vrot.slane %v979, 5
    %v1056 = vrot.slane %v981, 5
    %v1059 = vadd.f32 %v297, %v1055
    %v1060 = vadd.f32 %v298, %v1056
    %v1061 = vxor.u32 %v1059, 2147483648
    %v1062 = vxor.u32 %v1060, 2147483648
    %v1063 = vmul.f32 %v1061, 1.442695
    %v1064 = vpow.pop %v1063
    %v1065 = vmul.f32 %v1062, 1.442695
    %v1066 = vpow.pop %v1065
    %v1067 = vadd.f32 %v1064, 1.0
    %v1068 = vadd.f32 %v1066, 1.0
    %v1069 = vrcp.pop %v1067
    %v1070 = vmul.f32 1.0, %v1069
    %v1071 = vrcp.pop %v1068
    %v1072 = vmul.f32 1.0, %v1071
    %v1074 = vrot.slane %v1050, 5
    %v1076 = vmul.f32 %v1070, %v1074
    %v1077 = vadd.f32 %v299, %v1076
    %v1078 = vtanh.pop %v1077
    %v1079 = vsub.f32 1.0, %v1072
    %v1080 = vmul.f32 %v1079, %v1078
    %v1081 = vrot.slane %v908, 7
    %v1083 = vmul.f32 %v1072, %v1081
    %v1084 = vadd.f32 %v1080, %v1083
    %v1086 = vrot.slane %v1084, 3
    %1088 = vmatprep.subr.mxu0 %v333
    %1089 = vmatpush1.msra.mxu0 %v332
    %1090 = vmatprep.subr.mxu0 %v336
    %1091 = vmatpush1.msra.mxu0 %v335
    %1092 = vmatprep.subr.mxu0 %v339
    %1093 = vmatpush1.msra.mxu0 %v338
    %1094 = vmatprep.subr.mxu0 %v342
    %1095 = vmatpush1.msra.mxu0 %v341
    %1096 = vmatprep.subr.mxu0 %v345
    %1097 = vmatpush1.msra.mxu0 %v344
    %1098 = vmatprep.subr.mxu0 %v348
    %1099 = vmatpush1.msra.mxu0 %v347
    %1100 = vmatprep.subr.mxu0 %v351
    %1101 = vmatpush1.msra.mxu0 %v350
    %1102 = vmatprep.subr.mxu0 %v354
    %1103 = vmatpush1.msra.mxu0 %v353
    %1104 = vmatprep.subr.mxu0 %v357
    %1105 = vmatpush1.msra.mxu0 %v356
    %1106 = vmatprep.subr.mxu0 %v360
    %1107 = vmatpush1.msra.mxu0 %v359
    %1108 = vmatprep.subr.mxu0 %v363
    %1109 = vmatpush1.msra.mxu0 %v362
    %1110 = vmatprep.subr.mxu0 %v366
    %1111 = vmatpush1.msra.mxu0 %v365
    %1112 = vmatprep.subr.mxu0 %v369
    %1113 = vmatpush1.msra.mxu0 %v368
    %1114 = vmatprep.subr.mxu0 %v372
    %1115 = vmatpush1.msra.mxu0 %v371
    %1116 = vmatprep.subr.mxu0 %v375
    %1117 = vmatpush1.msra.mxu0 %v374
    %1118 = vmatprep.subr.mxu0 %v378
    %1119 = vmatpush1.msra.mxu0 %v377
    %1120 = vmatprep.subr.mxu0 0.0
    %1121 = vmatpush1.msra.mxu0 0.0
    %1122 = vmatprep.subr.mxu0 0.0
    %1123 = vmatpush1.msra.mxu0 0.0
    %1124 = vmatprep.subr.mxu0 0.0
    %1125 = vmatpush1.msra.mxu0 0.0
    %1126 = vmatprep.subr.mxu0 0.0
    %1127 = vmatpush1.msra.mxu0 0.0
    %1128 = vmatprep.subr.mxu0 0.0
    %1129 = vmatpush1.msra.mxu0 0.0
    %1130 = vmatprep.subr.mxu0 0.0
    %1131 = vmatpush1.msra.mxu0 0.0
    %1132 = vmatprep.subr.mxu0 0.0
    %1133 = vmatpush1.msra.mxu0 0.0
    %1134 = vmatprep.subr.mxu0 0.0
    %1135 = vmatpush1.msra.mxu0 0.0
    %1136 = vmatprep.subr.mxu0 0.0
    %1137 = vmatpush1.msra.mxu0 0.0
    %1138 = vmatprep.subr.mxu0 0.0
    %1139 = vmatpush1.msra.mxu0 0.0
    %1140 = vmatprep.subr.mxu0 0.0
    %1141 = vmatpush1.msra.mxu0 0.0
    %1142 = vmatprep.subr.mxu0 0.0
    %1143 = vmatpush1.msra.mxu0 0.0
    %1144 = vmatprep.subr.mxu0 0.0
    %1145 = vmatpush1.msra.mxu0 0.0
    %1146 = vmatprep.subr.mxu0 0.0
    %1147 = vmatpush1.msra.mxu0 0.0
    %1148 = vmatprep.subr.mxu0 0.0
    %1149 = vmatpush1.msra.mxu0 0.0
    %1150 = vmatprep.subr.mxu0 0.0
    %1151 = vmatpush1.msra.mxu0 0.0
    %1152 = vmatprep.mubr.f32.mxu0 0.0
    %1153 = vmatmul.mubr.f32.gmra.mrb[0].mxu0 %v1086
    %v1154 = vpop.f32.mrb[0].mxu0
    %v1155 = vadd.f32 %v385, %v1154
    %v1156 = vpop.f32.mrb[0].mxu0
    %v1157 = vadd.f32 %v389, %v1156
    %1158 = vdwg.mxu0
    %1159 = vmatprep.subr.mxu0 0.0
    %1160 = vmatpush1.msra.mxu0 %v334
    %1161 = vmatprep.subr.mxu0 0.0
    %1162 = vmatpush1.msra.mxu0 %v337
    %1163 = vmatprep.subr.mxu0 0.0
    %1164 = vmatpush1.msra.mxu0 %v340
    %1165 = vmatprep.subr.mxu0 0.0
    %1166 = vmatpush1.msra.mxu0 %v343
    %1167 = vmatprep.subr.mxu0 0.0
    %1168 = vmatpush1.msra.mxu0 %v346
    %1169 = vmatprep.subr.mxu0 0.0
    %1170 = vmatpush1.msra.mxu0 %v349
    %1171 = vmatprep.subr.mxu0 0.0
    %1172 = vmatpush1.msra.mxu0 %v352
    %1173 = vmatprep.subr.mxu0 0.0
    %1174 = vmatpush1.msra.mxu0 %v355
    %1175 = vmatprep.subr.mxu0 0.0
    %1176 = vmatpush1.msra.mxu0 %v358
    %1177 = vmatprep.subr.mxu0 0.0
    %1178 = vmatpush1.msra.mxu0 %v361
    %1179 = vmatprep.subr.mxu0 0.0
    %1180 = vmatpush1.msra.mxu0 %v364
    %1181 = vmatprep.subr.mxu0 0.0
    %1182 = vmatpush1.msra.mxu0 %v367
    %1183 = vmatprep.subr.mxu0 0.0
    %1184 = vmatpush1.msra.mxu0 %v370
    %1185 = vmatprep.subr.mxu0 0.0
    %1186 = vmatpush1.msra.mxu0 %v373
    %1187 = vmatprep.subr.mxu0 0.0
    %1188 = vmatpush1.msra.mxu0 %v376
    %1189 = vmatprep.subr.mxu0 0.0
    %1190 = vmatpush1.msra.mxu0 %v379
    %1191 = vmatprep.subr.mxu0 0.0
    %1192 = vmatpush1.msra.mxu0 0.0
    %1193 = vmatprep.subr.mxu0 0.0
    %1194 = vmatpush1.msra.mxu0 0.0
    %1195 = vmatprep.subr.mxu0 0.0
    %1196 = vmatpush1.msra.mxu0 0.0
    %1197 = vmatprep.subr.mxu0 0.0
    %1198 = vmatpush1.msra.mxu0 0.0
    %1199 = vmatprep.subr.mxu0 0.0
    %1200 = vmatpush1.msra.mxu0 0.0
    %1201 = vmatprep.subr.mxu0 0.0
    %1202 = vmatpush1.msra.mxu0 0.0
    %1203 = vmatprep.subr.mxu0 0.0
    %1204 = vmatpush1.msra.mxu0 0.0
    %1205 = vmatprep.subr.mxu0 0.0
    %1206 = vmatpush1.msra.mxu0 0.0
    %1207 = vmatprep.subr.mxu0 0.0
    %1208 = vmatpush1.msra.mxu0 0.0
    %1209 = vmatprep.subr.mxu0 0.0
    %1210 = vmatpush1.msra.mxu0 0.0
    %1211 = vmatprep.subr.mxu0 0.0
    %1212 = vmatpush1.msra.mxu0 0.0
    %1213 = vmatprep.subr.mxu0 0.0
    %1214 = vmatpush1.msra.mxu0 0.0
    %1215 = vmatprep.subr.mxu0 0.0
    %1216 = vmatpush1.msra.mxu0 0.0
    %1217 = vmatprep.subr.mxu0 0.0
    %1218 = vmatpush1.msra.mxu0 0.0
    %1219 = vmatprep.subr.mxu0 0.0
    %1220 = vmatpush1.msra.mxu0 0.0
    %1221 = vmatprep.subr.mxu0 0.0
    %1222 = vmatpush1.msra.mxu0 0.0
    %1223 = vmatprep.mubr.f32.mxu0 0.0
    %1224 = vmatmul.mubr.f32.gmra.mrb[0].mxu0 %v1086
    %v1225 = vpop.f32.mrb[0].mxu0
    %v1226 = vadd.f32 %v393, %v1225
    %v1227 = vpop.f32.mrb[0].mxu0
    %1228 = vdwg.mxu0
    %v1231 = vrot.slane %v1155, 4
    %v1232 = vrot.slane %v1157, 4
    %v1235 = vadd.f32 %v297, %v1231
    %v1236 = vadd.f32 %v298, %v1232
    %v1237 = vxor.u32 %v1235, 2147483648
    %v1238 = vxor.u32 %v1236, 2147483648
    %v1239 = vmul.f32 %v1237, 1.442695
    %v1240 = vpow.pop %v1239
    %v1241 = vmul.f32 %v1238, 1.442695
    %v1242 = vpow.pop %v1241
    %v1243 = vadd.f32 %v1240, 1.0
    %v1244 = vadd.f32 %v1242, 1.0
    %v1245 = vrcp.pop %v1243
    %v1246 = vmul.f32 1.0, %v1245
    %v1247 = vrcp.pop %v1244
    %v1248 = vmul.f32 1.0, %v1247
    %v1250 = vrot.slane %v1226, 4
    %v1252 = vmul.f32 %v1246, %v1250
    %v1253 = vadd.f32 %v299, %v1252
    %v1254 = vtanh.pop %v1253
    %v1255 = vsub.f32 1.0, %v1248
    %v1256 = vmul.f32 %v1255, %v1254
    %v1257 = vrot.slane %v1084, 7
    %v1259 = vmul.f32 %v1248, %v1257
    %v1260 = vadd.f32 %v1256, %v1259
    %v1262 = vrot.slane %v1260, 4
    %1264 = vmatprep.subr.mxu0 %v333
    %1265 = vmatpush1.msra.mxu0 %v332
    %1266 = vmatprep.subr.mxu0 %v336
    %1267 = vmatpush1.msra.mxu0 %v335
    %1268 = vmatprep.subr.mxu0 %v339
    %1269 = vmatpush1.msra.mxu0 %v338
    %1270 = vmatprep.subr.mxu0 %v342
    %1271 = vmatpush1.msra.mxu0 %v341
    %1272 = vmatprep.subr.mxu0 %v345
    %1273 = vmatpush1.msra.mxu0 %v344
    %1274 = vmatprep.subr.mxu0 %v348
    %1275 = vmatpush1.msra.mxu0 %v347
    %1276 = vmatprep.subr.mxu0 %v351
    %1277 = vmatpush1.msra.mxu0 %v350
    %1278 = vmatprep.subr.mxu0 %v354
    %1279 = vmatpush1.msra.mxu0 %v353
    %1280 = vmatprep.subr.mxu0 %v357
    %1281 = vmatpush1.msra.mxu0 %v356
    %1282 = vmatprep.subr.mxu0 %v360
    %1283 = vmatpush1.msra.mxu0 %v359
    %1284 = vmatprep.subr.mxu0 %v363
    %1285 = vmatpush1.msra.mxu0 %v362
    %1286 = vmatprep.subr.mxu0 %v366
    %1287 = vmatpush1.msra.mxu0 %v365
    %1288 = vmatprep.subr.mxu0 %v369
    %1289 = vmatpush1.msra.mxu0 %v368
    %1290 = vmatprep.subr.mxu0 %v372
    %1291 = vmatpush1.msra.mxu0 %v371
    %1292 = vmatprep.subr.mxu0 %v375
    %1293 = vmatpush1.msra.mxu0 %v374
    %1294 = vmatprep.subr.mxu0 %v378
    %1295 = vmatpush1.msra.mxu0 %v377
    %1296 = vmatprep.subr.mxu0 0.0
    %1297 = vmatpush1.msra.mxu0 0.0
    %1298 = vmatprep.subr.mxu0 0.0
    %1299 = vmatpush1.msra.mxu0 0.0
    %1300 = vmatprep.subr.mxu0 0.0
    %1301 = vmatpush1.msra.mxu0 0.0
    %1302 = vmatprep.subr.mxu0 0.0
    %1303 = vmatpush1.msra.mxu0 0.0
    %1304 = vmatprep.subr.mxu0 0.0
    %1305 = vmatpush1.msra.mxu0 0.0
    %1306 = vmatprep.subr.mxu0 0.0
    %1307 = vmatpush1.msra.mxu0 0.0
    %1308 = vmatprep.subr.mxu0 0.0
    %1309 = vmatpush1.msra.mxu0 0.0
    %1310 = vmatprep.subr.mxu0 0.0
    %1311 = vmatpush1.msra.mxu0 0.0
    %1312 = vmatprep.subr.mxu0 0.0
    %1313 = vmatpush1.msra.mxu0 0.0
    %1314 = vmatprep.subr.mxu0 0.0
    %1315 = vmatpush1.msra.mxu0 0.0
    %1316 = vmatprep.subr.mxu0 0.0
    %1317 = vmatpush1.msra.mxu0 0.0
    %1318 = vmatprep.subr.mxu0 0.0
    %1319 = vmatpush1.msra.mxu0 0.0
    %1320 = vmatprep.subr.mxu0 0.0
    %1321 = vmatpush1.msra.mxu0 0.0
    %1322 = vmatprep.subr.mxu0 0.0
    %1323 = vmatpush1.msra.mxu0 0.0
    %1324 = vmatprep.subr.mxu0 0.0
    %1325 = vmatpush1.msra.mxu0 0.0
    %1326 = vmatprep.subr.mxu0 0.0
    %1327 = vmatpush1.msra.mxu0 0.0
    %1328 = vmatprep.mubr.f32.mxu0 0.0
    %1329 = vmatmul.mubr.f32.gmra.mrb[0].mxu0 %v1262
    %v1330 = vpop.f32.mrb[0].mxu0
    %v1331 = vadd.f32 %v385, %v1330
    %v1332 = vpop.f32.mrb[0].mxu0
    %v1333 = vadd.f32 %v389, %v1332
    %1334 = vdwg.mxu0
    %1335 = vmatprep.subr.mxu0 0.0
    %1336 = vmatpush1.msra.mxu0 %v334
    %1337 = vmatprep.subr.mxu0 0.0
    %1338 = vmatpush1.msra.mxu0 %v337
    %1339 = vmatprep.subr.mxu0 0.0
    %1340 = vmatpush1.msra.mxu0 %v340
    %1341 = vmatprep.subr.mxu0 0.0
    %1342 = vmatpush1.msra.mxu0 %v343
    %1343 = vmatprep.subr.mxu0 0.0
    %1344 = vmatpush1.msra.mxu0 %v346
    %1345 = vmatprep.subr.mxu0 0.0
    %1346 = vmatpush1.msra.mxu0 %v349
    %1347 = vmatprep.subr.mxu0 0.0
    %1348 = vmatpush1.msra.mxu0 %v352
    %1349 = vmatprep.subr.mxu0 0.0
    %1350 = vmatpush1.msra.mxu0 %v355
    %1351 = vmatprep.subr.mxu0 0.0
    %1352 = vmatpush1.msra.mxu0 %v358
    %1353 = vmatprep.subr.mxu0 0.0
    %1354 = vmatpush1.msra.mxu0 %v361
    %1355 = vmatprep.subr.mxu0 0.0
    %1356 = vmatpush1.msra.mxu0 %v364
    %1357 = vmatprep.subr.mxu0 0.0
    %1358 = vmatpush1.msra.mxu0 %v367
    %1359 = vmatprep.subr.mxu0 0.0
    %1360 = vmatpush1.msra.mxu0 %v370
    %1361 = vmatprep.subr.mxu0 0.0
    %1362 = vmatpush1.msra.mxu0 %v373
    %1363 = vmatprep.subr.mxu0 0.0
    %1364 = vmatpush1.msra.mxu0 %v376
    %1365 = vmatprep.subr.mxu0 0.0
    %1366 = vmatpush1.msra.mxu0 %v379
    %1367 = vmatprep.subr.mxu0 0.0
    %1368 = vmatpush1.msra.mxu0 0.0
    %1369 = vmatprep.subr.mxu0 0.0
    %1370 = vmatpush1.msra.mxu0 0.0
    %1371 = vmatprep.subr.mxu0 0.0
    %1372 = vmatpush1.msra.mxu0 0.0
    %1373 = vmatprep.subr.mxu0 0.0
    %1374 = vmatpush1.msra.mxu0 0.0
    %1375 = vmatprep.subr.mxu0 0.0
    %1376 = vmatpush1.msra.mxu0 0.0
    %1377 = vmatprep.subr.mxu0 0.0
    %1378 = vmatpush1.msra.mxu0 0.0
    %1379 = vmatprep.subr.mxu0 0.0
    %1380 = vmatpush1.msra.mxu0 0.0
    %1381 = vmatprep.subr.mxu0 0.0
    %1382 = vmatpush1.msra.mxu0 0.0
    %1383 = vmatprep.subr.mxu0 0.0
    %1384 = vmatpush1.msra.mxu0 0.0
    %1385 = vmatprep.subr.mxu0 0.0
    %1386 = vmatpush1.msra.mxu0 0.0
    %1387 = vmatprep.subr.mxu0 0.0
    %1388 = vmatpush1.msra.mxu0 0.0
    %1389 = vmatprep.subr.mxu0 0.0
    %1390 = vmatpush1.msra.mxu0 0.0
    %1391 = vmatprep.subr.mxu0 0.0
    %1392 = vmatpush1.msra.mxu0 0.0
    %1393 = vmatprep.subr.mxu0 0.0
    %1394 = vmatpush1.msra.mxu0 0.0
    %1395 = vmatprep.subr.mxu0 0.0
    %1396 = vmatpush1.msra.mxu0 0.0
    %1397 = vmatprep.subr.mxu0 0.0
    %1398 = vmatpush1.msra.mxu0 0.0
    %1399 = vmatprep.mubr.f32.mxu0 0.0
    %1400 = vmatmul.mubr.f32.gmra.mrb[0].mxu0 %v1262
    %v1401 = vpop.f32.mrb[0].mxu0
    %v1402 = vadd.f32 %v393, %v1401
    %v1403 = vpop.f32.mrb[0].mxu0
    %1404 = vdwg.mxu0
    %v1407 = vrot.slane %v1331, 3
    %v1408 = vrot.slane %v1333, 3
    %v1411 = vadd.f32 %v297, %v1407
    %v1412 = vadd.f32 %v298, %v1408
    %v1413 = vxor.u32 %v1411, 2147483648
    %v1414 = vxor.u32 %v1412, 2147483648
    %v1415 = vmul.f32 %v1413, 1.442695
    %v1416 = vpow.pop %v1415
    %v1417 = vmul.f32 %v1414, 1.442695
    %v1418 = vpow.pop %v1417
    %v1419 = vadd.f32 %v1416, 1.0
    %v1420 = vadd.f32 %v1418, 1.0
    %v1421 = vrcp.pop %v1419
    %v1422 = vmul.f32 1.0, %v1421
    %v1423 = vrcp.pop %v1420
    %v1424 = vmul.f32 1.0, %v1423
    %v1426 = vrot.slane %v1402, 3
    %v1428 = vmul.f32 %v1422, %v1426
    %v1429 = vadd.f32 %v299, %v1428
    %v1430 = vtanh.pop %v1429
    %v1431 = vsub.f32 1.0, %v1424
    %v1432 = vmul.f32 %v1431, %v1430
    %v1433 = vrot.slane %v1260, 7
    %v1435 = vmul.f32 %v1424, %v1433
    %v1436 = vadd.f32 %v1432, %v1435
    %v1438 = vrot.slane %v1436, 5
    %1440 = vmatprep.subr.mxu0 %v333
    %1441 = vmatpush1.msra.mxu0 %v332
    %1442 = vmatprep.subr.mxu0 %v336
    %1443 = vmatpush1.msra.mxu0 %v335
    %1444 = vmatprep.subr.mxu0 %v339
    %1445 = vmatpush1.msra.mxu0 %v338
    %1446 = vmatprep.subr.mxu0 %v342
    %1447 = vmatpush1.msra.mxu0 %v341
    %1448 = vmatprep.subr.mxu0 %v345
    %1449 = vmatpush1.msra.mxu0 %v344
    %1450 = vmatprep.subr.mxu0 %v348
    %1451 = vmatpush1.msra.mxu0 %v347
    %1452 = vmatprep.subr.mxu0 %v351
    %1453 = vmatpush1.msra.mxu0 %v350
    %1454 = vmatprep.subr.mxu0 %v354
    %1455 = vmatpush1.msra.mxu0 %v353
    %1456 = vmatprep.subr.mxu0 %v357
    %1457 = vmatpush1.msra.mxu0 %v356
    %1458 = vmatprep.subr.mxu0 %v360
    %1459 = vmatpush1.msra.mxu0 %v359
    %1460 = vmatprep.subr.mxu0 %v363
    %1461 = vmatpush1.msra.mxu0 %v362
    %1462 = vmatprep.subr.mxu0 %v366
    %1463 = vmatpush1.msra.mxu0 %v365
    %1464 = vmatprep.subr.mxu0 %v369
    %1465 = vmatpush1.msra.mxu0 %v368
    %1466 = vmatprep.subr.mxu0 %v372
    %1467 = vmatpush1.msra.mxu0 %v371
    %1468 = vmatprep.subr.mxu0 %v375
    %1469 = vmatpush1.msra.mxu0 %v374
    %1470 = vmatprep.subr.mxu0 %v378
    %1471 = vmatpush1.msra.mxu0 %v377
    %1472 = vmatprep.subr.mxu0 0.0
    %1473 = vmatpush1.msra.mxu0 0.0
    %1474 = vmatprep.subr.mxu0 0.0
    %1475 = vmatpush1.msra.mxu0 0.0
    %1476 = vmatprep.subr.mxu0 0.0
    %1477 = vmatpush1.msra.mxu0 0.0
    %1478 = vmatprep.subr.mxu0 0.0
    %1479 = vmatpush1.msra.mxu0 0.0
    %1480 = vmatprep.subr.mxu0 0.0
    %1481 = vmatpush1.msra.mxu0 0.0
    %1482 = vmatprep.subr.mxu0 0.0
    %1483 = vmatpush1.msra.mxu0 0.0
    %1484 = vmatprep.subr.mxu0 0.0
    %1485 = vmatpush1.msra.mxu0 0.0
    %1486 = vmatprep.subr.mxu0 0.0
    %1487 = vmatpush1.msra.mxu0 0.0
    %1488 = vmatprep.subr.mxu0 0.0
    %1489 = vmatpush1.msra.mxu0 0.0
    %1490 = vmatprep.subr.mxu0 0.0
    %1491 = vmatpush1.msra.mxu0 0.0
    %1492 = vmatprep.subr.mxu0 0.0
    %1493 = vmatpush1.msra.mxu0 0.0
    %1494 = vmatprep.subr.mxu0 0.0
    %1495 = vmatpush1.msra.mxu0 0.0
    %1496 = vmatprep.subr.mxu0 0.0
    %1497 = vmatpush1.msra.mxu0 0.0
    %1498 = vmatprep.subr.mxu0 0.0
    %1499 = vmatpush1.msra.mxu0 0.0
    %1500 = vmatprep.subr.mxu0 0.0
    %1501 = vmatpush1.msra.mxu0 0.0
    %1502 = vmatprep.subr.mxu0 0.0
    %1503 = vmatpush1.msra.mxu0 0.0
    %1504 = vmatprep.mubr.f32.mxu0 0.0
    %1505 = vmatmul.mubr.f32.gmra.mrb[0].mxu0 %v1438
    %v1506 = vpop.f32.mrb[0].mxu0
    %v1507 = vadd.f32 %v385, %v1506
    %v1508 = vpop.f32.mrb[0].mxu0
    %v1509 = vadd.f32 %v389, %v1508
    %1510 = vdwg.mxu0
    %1511 = vmatprep.subr.mxu0 0.0
    %1512 = vmatpush1.msra.mxu0 %v334
    %1513 = vmatprep.subr.mxu0 0.0
    %1514 = vmatpush1.msra.mxu0 %v337
    %1515 = vmatprep.subr.mxu0 0.0
    %1516 = vmatpush1.msra.mxu0 %v340
    %1517 = vmatprep.subr.mxu0 0.0
    %1518 = vmatpush1.msra.mxu0 %v343
    %1519 = vmatprep.subr.mxu0 0.0
    %1520 = vmatpush1.msra.mxu0 %v346
    %1521 = vmatprep.subr.mxu0 0.0
    %1522 = vmatpush1.msra.mxu0 %v349
    %1523 = vmatprep.subr.mxu0 0.0
    %1524 = vmatpush1.msra.mxu0 %v352
    %1525 = vmatprep.subr.mxu0 0.0
    %1526 = vmatpush1.msra.mxu0 %v355
    %1527 = vmatprep.subr.mxu0 0.0
    %1528 = vmatpush1.msra.mxu0 %v358
    %1529 = vmatprep.subr.mxu0 0.0
    %1530 = vmatpush1.msra.mxu0 %v361
    %1531 = vmatprep.subr.mxu0 0.0
    %1532 = vmatpush1.msra.mxu0 %v364
    %1533 = vmatprep.subr.mxu0 0.0
    %1534 = vmatpush1.msra.mxu0 %v367
    %1535 = vmatprep.subr.mxu0 0.0
    %1536 = vmatpush1.msra.mxu0 %v370
    %1537 = vmatprep.subr.mxu0 0.0
    %1538 = vmatpush1.msra.mxu0 %v373
    %1539 = vmatprep.subr.mxu0 0.0
    %1540 = vmatpush1.msra.mxu0 %v376
    %1541 = vmatprep.subr.mxu0 0.0
    %1542 = vmatpush1.msra.mxu0 %v379
    %1543 = vmatprep.subr.mxu0 0.0
    %1544 = vmatpush1.msra.mxu0 0.0
    %1545 = vmatprep.subr.mxu0 0.0
    %1546 = vmatpush1.msra.mxu0 0.0
    %1547 = vmatprep.subr.mxu0 0.0
    %1548 = vmatpush1.msra.mxu0 0.0
    %1549 = vmatprep.subr.mxu0 0.0
    %1550 = vmatpush1.msra.mxu0 0.0
    %1551 = vmatprep.subr.mxu0 0.0
    %1552 = vmatpush1.msra.mxu0 0.0
    %1553 = vmatprep.subr.mxu0 0.0
    %1554 = vmatpush1.msra.mxu0 0.0
    %1555 = vmatprep.subr.mxu0 0.0
    %1556 = vmatpush1.msra.mxu0 0.0
    %1557 = vmatprep.subr.mxu0 0.0
    %1558 = vmatpush1.msra.mxu0 0.0
    %1559 = vmatprep.subr.mxu0 0.0
    %1560 = vmatpush1.msra.mxu0 0.0
    %1561 = vmatprep.subr.mxu0 0.0
    %1562 = vmatpush1.msra.mxu0 0.0
    %1563 = vmatprep.subr.mxu0 0.0
    %1564 = vmatpush1.msra.mxu0 0.0
    %1565 = vmatprep.subr.mxu0 0.0
    %1566 = vmatpush1.msra.mxu0 0.0
    %1567 = vmatprep.subr.mxu0 0.0
    %1568 = vmatpush1.msra.mxu0 0.0
    %1569 = vmatprep.subr.mxu0 0.0
    %1570 = vmatpush1.msra.mxu0 0.0
    %1571 = vmatprep.subr.mxu0 0.0
    %1572 = vmatpush1.msra.mxu0 0.0
    %1573 = vmatprep.subr.mxu0 0.0
    %1574 = vmatpush1.msra.mxu0 0.0
    %1575 = vmatprep.mubr.f32.mxu0 0.0
    %1576 = vmatmul.mubr.f32.gmra.mrb[0].mxu0 %v1438
    %v1577 = vpop.f32.mrb[0].mxu0
    %v1578 = vadd.f32 %v393, %v1577
    %v1579 = vpop.f32.mrb[0].mxu0
    %1580 = vdwg.mxu0
    %v1583 = vrot.slane %v1507, 2
    %v1584 = vrot.slane %v1509, 2
    %v1587 = vadd.f32 %v297, %v1583
    %v1588 = vadd.f32 %v298, %v1584
    %v1589 = vxor.u32 %v1587, 2147483648
    %v1590 = vxor.u32 %v1588, 2147483648
    %v1591 = vmul.f32 %v1589, 1.442695
    %v1592 = vpow.pop %v1591
    %v1593 = vmul.f32 %v1590, 1.442695
    %v1594 = vpow.pop %v1593
    %v1595 = vadd.f32 %v1592, 1.0
    %v1596 = vadd.f32 %v1594, 1.0
    %v1597 = vrcp.pop %v1595
    %v1598 = vmul.f32 1.0, %v1597
    %v1599 = vrcp.pop %v1596
    %v1600 = vmul.f32 1.0, %v1599
    %v1602 = vrot.slane %v1578, 2
    %v1604 = vmul.f32 %v1598, %v1602
    %v1605 = vadd.f32 %v299, %v1604
    %v1606 = vtanh.pop %v1605
    %v1607 = vsub.f32 1.0, %v1600
    %v1608 = vmul.f32 %v1607, %v1606
    %v1609 = vrot.slane %v1436, 7
    %v1611 = vmul.f32 %v1600, %v1609
    %v1612 = vadd.f32 %v1608, %v1611
    %v1614 = vrot.slane %v1612, 6
    %1616 = vmatprep.subr.mxu0 %v333
    %1617 = vmatpush1.msra.mxu0 %v332
    %1618 = vmatprep.subr.mxu0 %v336
    %1619 = vmatpush1.msra.mxu0 %v335
    %1620 = vmatprep.subr.mxu0 %v339
    %1621 = vmatpush1.msra.mxu0 %v338
    %1622 = vmatprep.subr.mxu0 %v342
    %1623 = vmatpush1.msra.mxu0 %v341
    %1624 = vmatprep.subr.mxu0 %v345
    %1625 = vmatpush1.msra.mxu0 %v344
    %1626 = vmatprep.subr.mxu0 %v348
    %1627 = vmatpush1.msra.mxu0 %v347
    %1628 = vmatprep.subr.mxu0 %v351
    %1629 = vmatpush1.msra.mxu0 %v350
    %1630 = vmatprep.subr.mxu0 %v354
    %1631 = vmatpush1.msra.mxu0 %v353
    %1632 = vmatprep.subr.mxu0 %v357
    %1633 = vmatpush1.msra.mxu0 %v356
    %1634 = vmatprep.subr.mxu0 %v360
    %1635 = vmatpush1.msra.mxu0 %v359
    %1636 = vmatprep.subr.mxu0 %v363
    %1637 = vmatpush1.msra.mxu0 %v362
    %1638 = vmatprep.subr.mxu0 %v366
    %1639 = vmatpush1.msra.mxu0 %v365
    %1640 = vmatprep.subr.mxu0 %v369
    %1641 = vmatpush1.msra.mxu0 %v368
    %1642 = vmatprep.subr.mxu0 %v372
    %1643 = vmatpush1.msra.mxu0 %v371
    %1644 = vmatprep.subr.mxu0 %v375
    %1645 = vmatpush1.msra.mxu0 %v374
    %1646 = vmatprep.subr.mxu0 %v378
    %1647 = vmatpush1.msra.mxu0 %v377
    %1648 = vmatprep.subr.mxu0 0.0
    %1649 = vmatpush1.msra.mxu0 0.0
    %1650 = vmatprep.subr.mxu0 0.0
    %1651 = vmatpush1.msra.mxu0 0.0
    %1652 = vmatprep.subr.mxu0 0.0
    %1653 = vmatpush1.msra.mxu0 0.0
    %1654 = vmatprep.subr.mxu0 0.0
    %1655 = vmatpush1.msra.mxu0 0.0
    %1656 = vmatprep.subr.mxu0 0.0
    %1657 = vmatpush1.msra.mxu0 0.0
    %1658 = vmatprep.subr.mxu0 0.0
    %1659 = vmatpush1.msra.mxu0 0.0
    %1660 = vmatprep.subr.mxu0 0.0
    %1661 = vmatpush1.msra.mxu0 0.0
    %1662 = vmatprep.subr.mxu0 0.0
    %1663 = vmatpush1.msra.mxu0 0.0
    %1664 = vmatprep.subr.mxu0 0.0
    %1665 = vmatpush1.msra.mxu0 0.0
    %1666 = vmatprep.subr.mxu0 0.0
    %1667 = vmatpush1.msra.mxu0 0.0
    %1668 = vmatprep.subr.mxu0 0.0
    %1669 = vmatpush1.msra.mxu0 0.0
    %1670 = vmatprep.subr.mxu0 0.0
    %1671 = vmatpush1.msra.mxu0 0.0
    %1672 = vmatprep.subr.mxu0 0.0
    %1673 = vmatpush1.msra.mxu0 0.0
    %1674 = vmatprep.subr.mxu0 0.0
    %1675 = vmatpush1.msra.mxu0 0.0
    %1676 = vmatprep.subr.mxu0 0.0
    %1677 = vmatpush1.msra.mxu0 0.0
    %1678 = vmatprep.subr.mxu0 0.0
    %1679 = vmatpush1.msra.mxu0 0.0
    %1680 = vmatprep.mubr.f32.mxu0 0.0
    %1681 = vmatmul.mubr.f32.gmra.mrb[0].mxu0 %v1614
    %v1682 = vpop.f32.mrb[0].mxu0
    %v1683 = vadd.f32 %v385, %v1682
    %v1684 = vpop.f32.mrb[0].mxu0
    %v1685 = vadd.f32 %v389, %v1684
    %1686 = vdwg.mxu0
    %1687 = vmatprep.subr.mxu0 0.0
    %1688 = vmatpush1.msra.mxu0 %v334
    %1689 = vmatprep.subr.mxu0 0.0
    %1690 = vmatpush1.msra.mxu0 %v337
    %1691 = vmatprep.subr.mxu0 0.0
    %1692 = vmatpush1.msra.mxu0 %v340
    %1693 = vmatprep.subr.mxu0 0.0
    %1694 = vmatpush1.msra.mxu0 %v343
    %1695 = vmatprep.subr.mxu0 0.0
    %1696 = vmatpush1.msra.mxu0 %v346
    %1697 = vmatprep.subr.mxu0 0.0
    %1698 = vmatpush1.msra.mxu0 %v349
    %1699 = vmatprep.subr.mxu0 0.0
    %1700 = vmatpush1.msra.mxu0 %v352
    %1701 = vmatprep.subr.mxu0 0.0
    %1702 = vmatpush1.msra.mxu0 %v355
    %1703 = vmatprep.subr.mxu0 0.0
    %1704 = vmatpush1.msra.mxu0 %v358
    %1705 = vmatprep.subr.mxu0 0.0
    %1706 = vmatpush1.msra.mxu0 %v361
    %1707 = vmatprep.subr.mxu0 0.0
    %1708 = vmatpush1.msra.mxu0 %v364
    %1709 = vmatprep.subr.mxu0 0.0
    %1710 = vmatpush1.msra.mxu0 %v367
    %1711 = vmatprep.subr.mxu0 0.0
    %1712 = vmatpush1.msra.mxu0 %v370
    %1713 = vmatprep.subr.mxu0 0.0
    %1714 = vmatpush1.msra.mxu0 %v373
    %1715 = vmatprep.subr.mxu0 0.0
    %1716 = vmatpush1.msra.mxu0 %v376
    %1717 = vmatprep.subr.mxu0 0.0
    %1718 = vmatpush1.msra.mxu0 %v379
    %1719 = vmatprep.subr.mxu0 0.0
    %1720 = vmatpush1.msra.mxu0 0.0
    %1721 = vmatprep.subr.mxu0 0.0
    %1722 = vmatpush1.msra.mxu0 0.0
    %1723 = vmatprep.subr.mxu0 0.0
    %1724 = vmatpush1.msra.mxu0 0.0
    %1725 = vmatprep.subr.mxu0 0.0
    %1726 = vmatpush1.msra.mxu0 0.0
    %1727 = vmatprep.subr.mxu0 0.0
    %1728 = vmatpush1.msra.mxu0 0.0
    %1729 = vmatprep.subr.mxu0 0.0
    %1730 = vmatpush1.msra.mxu0 0.0
    %1731 = vmatprep.subr.mxu0 0.0
    %1732 = vmatpush1.msra.mxu0 0.0
    %1733 = vmatprep.subr.mxu0 0.0
    %1734 = vmatpush1.msra.mxu0 0.0
    %1735 = vmatprep.subr.mxu0 0.0
    %1736 = vmatpush1.msra.mxu0 0.0
    %1737 = vmatprep.subr.mxu0 0.0
    %1738 = vmatpush1.msra.mxu0 0.0
    %1739 = vmatprep.subr.mxu0 0.0
    %1740 = vmatpush1.msra.mxu0 0.0
    %1741 = vmatprep.subr.mxu0 0.0
    %1742 = vmatpush1.msra.mxu0 0.0
    %1743 = vmatprep.subr.mxu0 0.0
    %1744 = vmatpush1.msra.mxu0 0.0
    %1745 = vmatprep.subr.mxu0 0.0
    %1746 = vmatpush1.msra.mxu0 0.0
    %1747 = vmatprep.subr.mxu0 0.0
    %1748 = vmatpush1.msra.mxu0 0.0
    %1749 = vmatprep.subr.mxu0 0.0
    %1750 = vmatpush1.msra.mxu0 0.0
    %1751 = vmatprep.mubr.f32.mxu0 0.0
    %1752 = vmatmul.mubr.f32.gmra.mrb[0].mxu0 %v1614
    %v1753 = vpop.f32.mrb[0].mxu0
    %v1754 = vadd.f32 %v393, %v1753
    %v1755 = vpop.f32.mrb[0].mxu0
    %1756 = vdwg.mxu0
    %v1759 = vrot.slane %v1683, 1
    %v1760 = vrot.slane %v1685, 1
    %v1763 = vadd.f32 %v297, %v1759
    %v1764 = vadd.f32 %v298, %v1760
    %v1765 = vxor.u32 %v1763, 2147483648
    %v1766 = vxor.u32 %v1764, 2147483648
    %v1767 = vmul.f32 %v1765, 1.442695
    %v1768 = vpow.pop %v1767
    %v1769 = vmul.f32 %v1766, 1.442695
    %v1770 = vpow.pop %v1769
    %v1771 = vadd.f32 %v1768, 1.0
    %v1772 = vadd.f32 %v1770, 1.0
    %v1773 = vrcp.pop %v1771
    %v1774 = vmul.f32 1.0, %v1773
    %v1775 = vrcp.pop %v1772
    %v1776 = vmul.f32 1.0, %v1775
    %v1778 = vrot.slane %v1754, 1
    %v1780 = vmul.f32 %v1774, %v1778
    %v1781 = vadd.f32 %v299, %v1780
    %v1782 = vtanh.pop %v1781
    %v1783 = vsub.f32 1.0, %v1776
    %v1784 = vmul.f32 %v1783, %v1782
    %v1785 = vrot.slane %v1612, 7
    %v1787 = vmul.f32 %v1776, %v1785
    %v1788 = vadd.f32 %v1784, %v1787
    %vm1789 = vcmask 1040384
    %v1790 = vsel %vm1789, %v558, %v732
    %vm1791 = vcmask 1041408
    %v1792 = vsel %vm1791, %v1790, %v908
    %vm1793 = vcmask 1042432
    %v1794 = vsel %vm1793, %v1792, %v1084
    %vm1795 = vcmask 1043456
    %v1796 = vsel %vm1795, %v1794, %v1260
    %vm1797 = vcmask 1044480
    %v1798 = vsel %vm1797, %v1796, %v1436
    %vm1799 = vcmask 1045504
    %v1800 = vsel %vm1799, %v1798, %v1612
    %vm1801 = vcmask 1046528
    %v1802 = vsel %vm1801, %v1800, %v1788
    %v1804 = vrot.slane %v1788, 7
    %v1806 = vrot.slane %v1612, 5
    %v1808 = vrot.slane %v1436, 3
    %v1810 = vrot.slane %v1260, 1
    %v1812 = vrot.slane %v908, 5
    %v1814 = vrot.slane %v732, 3
    %v1816 = vrot.slane %v558, 1
    %v1818 = vsel %vm1789, %v1804, %v1806
    %v1819 = vsel %vm1791, %v1818, %v1808
    %v1820 = vsel %vm1793, %v1819, %v1810
    %v1821 = vsel %vm1795, %v1820, %v1257
    %v1822 = vsel %vm1797, %v1821, %v1812
    %v1823 = vsel %vm1799, %v1822, %v1814
    %v1824 = vsel %vm1801, %v1823, %v1816
    %vm1825 = vcmask 523264
    %v1826 = vsel %vm1825, %v1802, %v1824
    %v1827 = vsel %vm1825, %v1824, %v1802
    %s1828 = smul.u32 4, 16
    %s1829 = smul.u32 %s1828, 3
    %s1830 = sshll.u32 %s1829, 4
    %1831 = dma.done [#allocation6], %s1830
    %s1832 = sshll.u32 %s1829, 4
    %1833 = dma.done %s98, %s1832
    %s1834 = sshll.u32 %s1829, 4
    %1835 = dma.done %s133, %s1834
    %v1836 = vld [vmem:[#allocation2] sm:$0xff]
    %v1837 = vld [vmem:[#allocation2 + $0x8] sm:$0xff]
    %v1838 = vld [vmem:[#allocation2 + $0x10] sm:$0xff]
    %v1839 = vld [vmem:[#allocation2 + $0x18] sm:$0xff]
    %v1840 = vld [vmem:[#allocation2 + $0x20] sm:$0xff]
    %v1841 = vld [vmem:[#allocation2 + $0x28] sm:$0xff]
    %v1842 = vld [vmem:[#allocation2 + $0x30] sm:$0xff]
    %v1843 = vld [vmem:[#allocation2 + $0x38] sm:$0xff]
    %v1844 = vld [vmem:[#allocation2 + $0x40] sm:$0xff]
    %v1845 = vld [vmem:[#allocation2 + $0x48] sm:$0xff]
    %v1846 = vld [vmem:[#allocation2 + $0x50] sm:$0xff]
    %v1847 = vld [vmem:[#allocation2 + $0x58] sm:$0xff]
    %v1848 = vld [vmem:[#allocation2 + $0x60] sm:$0xff]
    %v1849 = vld [vmem:[#allocation2 + $0x68] sm:$0xff]
    %v1850 = vld [vmem:[#allocation2 + $0x70] sm:$0xff]
    %v1851 = vld [vmem:[#allocation2 + $0x78] sm:$0xff]
    %v1852 = vld [vmem:[#allocation2 + $0x80] sm:$0xff]
    %v1853 = vld [vmem:[#allocation2 + $0x88] sm:$0xff]
    %v1854 = vld [vmem:[#allocation2 + $0x90] sm:$0xff]
    %v1855 = vld [vmem:[#allocation2 + $0x98] sm:$0xff]
    %v1856 = vld [vmem:[#allocation2 + $0xa0] sm:$0xff]
    %v1857 = vld [vmem:[#allocation2 + $0xa8] sm:$0xff]
    %v1858 = vld [vmem:[#allocation2 + $0xb0] sm:$0xff]
    %v1859 = vld [vmem:[#allocation2 + $0xb8] sm:$0xff]
    %v1860 = vunpack.c.l.bf16 %v1836
    %v1861 = vunpack.c.l.bf16 %v1837
    %v1862 = vunpack.c.l.bf16 %v1838
    %v1863 = vunpack.c.h.bf16 %v1836
    %v1864 = vunpack.c.h.bf16 %v1837
    %v1865 = vunpack.c.h.bf16 %v1838
    %v1866 = vunpack.c.l.bf16 %v1839
    %v1867 = vunpack.c.l.bf16 %v1840
    %v1868 = vunpack.c.l.bf16 %v1841
    %v1869 = vunpack.c.h.bf16 %v1839
    %v1870 = vunpack.c.h.bf16 %v1840
    %v1871 = vunpack.c.h.bf16 %v1841
    %v1872 = vunpack.c.l.bf16 %v1842
    %v1873 = vunpack.c.l.bf16 %v1843
    %v1874 = vunpack.c.l.bf16 %v1844
    %v1875 = vunpack.c.h.bf16 %v1842
    %v1876 = vunpack.c.h.bf16 %v1843
    %v1877 = vunpack.c.h.bf16 %v1844
    %v1878 = vunpack.c.l.bf16 %v1845
    %v1879 = vunpack.c.l.bf16 %v1846
    %v1880 = vunpack.c.l.bf16 %v1847
    %v1881 = vunpack.c.h.bf16 %v1845
    %v1882 = vunpack.c.h.bf16 %v1846
    %v1883 = vunpack.c.h.bf16 %v1847
    %v1884 = vunpack.c.l.bf16 %v1848
    %v1885 = vunpack.c.l.bf16 %v1849
    %v1886 = vunpack.c.l.bf16 %v1850
    %v1887 = vunpack.c.h.bf16 %v1848
    %v1888 = vunpack.c.h.bf16 %v1849
    %v1889 = vunpack.c.h.bf16 %v1850
    %v1890 = vunpack.c.l.bf16 %v1851
    %v1891 = vunpack.c.l.bf16 %v1852
    %v1892 = vunpack.c.l.bf16 %v1853
    %v1893 = vunpack.c.h.bf16 %v1851
    %v1894 = vunpack.c.h.bf16 %v1852
    %v1895 = vunpack.c.h.bf16 %v1853
    %v1896 = vunpack.c.l.bf16 %v1854
    %v1897 = vunpack.c.l.bf16 %v1855
    %v1898 = vunpack.c.l.bf16 %v1856
    %v1899 = vunpack.c.h.bf16 %v1854
    %v1900 = vunpack.c.h.bf16 %v1855
    %v1901 = vunpack.c.h.bf16 %v1856
    %v1902 = vunpack.c.l.bf16 %v1857
    %v1903 = vunpack.c.l.bf16 %v1858
    %v1904 = vunpack.c.l.bf16 %v1859
    %v1905 = vunpack.c.h.bf16 %v1857
    %v1906 = vunpack.c.h.bf16 %v1858
    %v1907 = vunpack.c.h.bf16 %v1859
    %v1908 = vld [vmem:[#allocation3] sm:$0xff]
    %v1909 = vld [vmem:[#allocation3 + $0x8] sm:$0xff]
    %v1910 = vld [vmem:[#allocation3 + $0x10] sm:$0xff]
    %v1911 = vld [vmem:[#allocation3 + $0x18] sm:$0xff]
    %v1912 = vld [vmem:[#allocation3 + $0x20] sm:$0xff]
    %v1913 = vld [vmem:[#allocation3 + $0x28] sm:$0xff]
    %v1914 = vld [vmem:[#allocation3 + $0x30] sm:$0xff]
    %v1915 = vld [vmem:[#allocation3 + $0x38] sm:$0xff]
    %v1916 = vld [vmem:[#allocation3 + $0x40] sm:$0xff]
    %v1917 = vld [vmem:[#allocation3 + $0x48] sm:$0xff]
    %v1918 = vld [vmem:[#allocation3 + $0x50] sm:$0xff]
    %v1919 = vld [vmem:[#allocation3 + $0x58] sm:$0xff]
    %v1920 = vld [vmem:[#allocation3 + $0x60] sm:$0xff]
    %v1921 = vld [vmem:[#allocation3 + $0x68] sm:$0xff]
    %v1922 = vld [vmem:[#allocation3 + $0x70] sm:$0xff]
    %v1923 = vld [vmem:[#allocation3 + $0x78] sm:$0xff]
    %v1924 = vld [vmem:[#allocation3 + $0x80] sm:$0xff]
    %v1925 = vld [vmem:[#allocation3 + $0x88] sm:$0xff]
    %v1926 = vld [vmem:[#allocation3 + $0x90] sm:$0xff]
    %v1927 = vld [vmem:[#allocation3 + $0x98] sm:$0xff]
    %v1928 = vld [vmem:[#allocation3 + $0xa0] sm:$0xff]
    %v1929 = vld [vmem:[#allocation3 + $0xa8] sm:$0xff]
    %v1930 = vld [vmem:[#allocation3 + $0xb0] sm:$0xff]
    %v1931 = vld [vmem:[#allocation3 + $0xb8] sm:$0xff]
    %v1932 = vunpack.c.l.bf16 %v1908
    %v1933 = vunpack.c.l.bf16 %v1909
    %v1934 = vunpack.c.l.bf16 %v1910
    %v1935 = vunpack.c.h.bf16 %v1908
    %v1936 = vunpack.c.h.bf16 %v1909
    %v1937 = vunpack.c.h.bf16 %v1910
    %v1938 = vunpack.c.l.bf16 %v1911
    %v1939 = vunpack.c.l.bf16 %v1912
    %v1940 = vunpack.c.l.bf16 %v1913
    %v1941 = vunpack.c.h.bf16 %v1911
    %v1942 = vunpack.c.h.bf16 %v1912
    %v1943 = vunpack.c.h.bf16 %v1913
    %v1944 = vunpack.c.l.bf16 %v1914
    %v1945 = vunpack.c.l.bf16 %v1915
    %v1946 = vunpack.c.l.bf16 %v1916
    %v1947 = vunpack.c.h.bf16 %v1914
    %v1948 = vunpack.c.h.bf16 %v1915
    %v1949 = vunpack.c.h.bf16 %v1916
    %v1950 = vunpack.c.l.bf16 %v1917
    %v1951 = vunpack.c.l.bf16 %v1918
    %v1952 = vunpack.c.l.bf16 %v1919
    %v1953 = vunpack.c.h.bf16 %v1917
    %v1954 = vunpack.c.h.bf16 %v1918
    %v1955 = vunpack.c.h.bf16 %v1919
    %v1956 = vunpack.c.l.bf16 %v1920
    %v1957 = vunpack.c.l.bf16 %v1921
    %v1958 = vunpack.c.l.bf16 %v1922
    %v1959 = vunpack.c.h.bf16 %v1920
    %v1960 = vunpack.c.h.bf16 %v1921
    %v1961 = vunpack.c.h.bf16 %v1922
    %v1962 = vunpack.c.l.bf16 %v1923
    %v1963 = vunpack.c.l.bf16 %v1924
    %v1964 = vunpack.c.l.bf16 %v1925
    %v1965 = vunpack.c.h.bf16 %v1923
    %v1966 = vunpack.c.h.bf16 %v1924
    %v1967 = vunpack.c.h.bf16 %v1925
    %v1968 = vunpack.c.l.bf16 %v1926
    %v1969 = vunpack.c.l.bf16 %v1927
    %v1970 = vunpack.c.l.bf16 %v1928
    %v1971 = vunpack.c.h.bf16 %v1926
    %v1972 = vunpack.c.h.bf16 %v1927
    %v1973 = vunpack.c.h.bf16 %v1928
    %v1974 = vunpack.c.l.bf16 %v1929
    %v1975 = vunpack.c.l.bf16 %v1930
    %v1976 = vunpack.c.l.bf16 %v1931
    %v1977 = vunpack.c.h.bf16 %v1929
    %v1978 = vunpack.c.h.bf16 %v1930
    %v1979 = vunpack.c.h.bf16 %v1931
    %1980 = vmatprep.subr.mxu0 %v1933
    %1981 = vmatpush1.msra.mxu0 %v1932
    %1982 = vmatprep.subr.mxu0 %v1936
    %1983 = vmatpush1.msra.mxu0 %v1935
    %1984 = vmatprep.subr.mxu0 %v1939
    %1985 = vmatpush1.msra.mxu0 %v1938
    %1986 = vmatprep.subr.mxu0 %v1942
    %1987 = vmatpush1.msra.mxu0 %v1941
    %1988 = vmatprep.subr.mxu0 %v1945
    %1989 = vmatpush1.msra.mxu0 %v1944
    %1990 = vmatprep.subr.mxu0 %v1948
    %1991 = vmatpush1.msra.mxu0 %v1947
    %1992 = vmatprep.subr.mxu0 %v1951
    %1993 = vmatpush1.msra.mxu0 %v1950
    %1994 = vmatprep.subr.mxu0 %v1954
    %1995 = vmatpush1.msra.mxu0 %v1953
    %1996 = vmatprep.subr.mxu0 %v1957
    %1997 = vmatpush1.msra.mxu0 %v1956
    %1998 = vmatprep.subr.mxu0 %v1960
    %1999 = vmatpush1.msra.mxu0 %v1959
    %2000 = vmatprep.subr.mxu0 %v1963
    %2001 = vmatpush1.msra.mxu0 %v1962
    %2002 = vmatprep.subr.mxu0 %v1966
    %2003 = vmatpush1.msra.mxu0 %v1965
    %2004 = vmatprep.subr.mxu0 %v1969
    %2005 = vmatpush1.msra.mxu0 %v1968
    %2006 = vmatprep.subr.mxu0 %v1972
    %2007 = vmatpush1.msra.mxu0 %v1971
    %2008 = vmatprep.subr.mxu0 %v1975
    %2009 = vmatpush1.msra.mxu0 %v1974
    %2010 = vmatprep.subr.mxu0 %v1978
    %2011 = vmatpush1.msra.mxu0 %v1977
    %2012 = vmatprep.subr.mxu0 0.0
    %2013 = vmatpush1.msra.mxu0 0.0
    %2014 = vmatprep.subr.mxu0 0.0
    %2015 = vmatpush1.msra.mxu0 0.0
    %2016 = vmatprep.subr.mxu0 0.0
    %2017 = vmatpush1.msra.mxu0 0.0
    %2018 = vmatprep.subr.mxu0 0.0
    %2019 = vmatpush1.msra.mxu0 0.0
    %2020 = vmatprep.subr.mxu0 0.0
    %2021 = vmatpush1.msra.mxu0 0.0
    %2022 = vmatprep.subr.mxu0 0.0
    %2023 = vmatpush1.msra.mxu0 0.0
    %2024 = vmatprep.subr.mxu0 0.0
    %2025 = vmatpush1.msra.mxu0 0.0
    %2026 = vmatprep.subr.mxu0 0.0
    %2027 = vmatpush1.msra.mxu0 0.0
    %2028 = vmatprep.subr.mxu0 0.0
    %2029 = vmatpush1.msra.mxu0 0.0
    %2030 = vmatprep.subr.mxu0 0.0
    %2031 = vmatpush1.msra.mxu0 0.0
    %2032 = vmatprep.subr.mxu0 0.0
    %2033 = vmatpush1.msra.mxu0 0.0
    %2034 = vmatprep.subr.mxu0 0.0
    %2035 = vmatpush1.msra.mxu0 0.0
    %2036 = vmatprep.subr.mxu0 0.0
    %2037 = vmatpush1.msra.mxu0 0.0
    %2038 = vmatprep.subr.mxu0 0.0
    %2039 = vmatpush1.msra.mxu0 0.0
    %2040 = vmatprep.subr.mxu0 0.0
    %2041 = vmatpush1.msra.mxu0 0.0
    %2042 = vmatprep.subr.mxu0 0.0
    %2043 = vmatpush1.msra.mxu0 0.0
    %2044 = vmatprep.mubr.f32.mxu0 0.0
    %2045 = vmatmul.mubr.f32.gmra.mrb[0].mxu0 %v1827
    %v2046 = vpop.f32.mrb[0].mxu0
    %v2047 = vadd.f32 0.0, %v2046
    %v2048 = vpop.f32.mrb[0].mxu0
    %v2049 = vadd.f32 0.0, %v2048
    %2050 = vdwg.mxu0
    %2051 = vmatprep.subr.mxu0 0.0
    %2052 = vmatpush1.msra.mxu0 %v1934
    %2053 = vmatprep.subr.mxu0 0.0
    %2054 = vmatpush1.msra.mxu0 %v1937
    %2055 = vmatprep.subr.mxu0 0.0
    %2056 = vmatpush1.msra.mxu0 %v1940
    %2057 = vmatprep.subr.mxu0 0.0
    %2058 = vmatpush1.msra.mxu0 %v1943
    %2059 = vmatprep.subr.mxu0 0.0
    %2060 = vmatpush1.msra.mxu0 %v1946
    %2061 = vmatprep.subr.mxu0 0.0
    %2062 = vmatpush1.msra.mxu0 %v1949
    %2063 = vmatprep.subr.mxu0 0.0
    %2064 = vmatpush1.msra.mxu0 %v1952
    %2065 = vmatprep.subr.mxu0 0.0
    %2066 = vmatpush1.msra.mxu0 %v1955
    %2067 = vmatprep.subr.mxu0 0.0
    %2068 = vmatpush1.msra.mxu0 %v1958
    %2069 = vmatprep.subr.mxu0 0.0
    %2070 = vmatpush1.msra.mxu0 %v1961
    %2071 = vmatprep.subr.mxu0 0.0
    %2072 = vmatpush1.msra.mxu0 %v1964
    %2073 = vmatprep.subr.mxu0 0.0
    %2074 = vmatpush1.msra.mxu0 %v1967
    %2075 = vmatprep.subr.mxu0 0.0
    %2076 = vmatpush1.msra.mxu0 %v1970
    %2077 = vmatprep.subr.mxu0 0.0
    %2078 = vmatpush1.msra.mxu0 %v1973
    %2079 = vmatprep.subr.mxu0 0.0
    %2080 = vmatpush1.msra.mxu0 %v1976
    %2081 = vmatprep.subr.mxu0 0.0
    %2082 = vmatpush1.msra.mxu0 %v1979
    %2083 = vmatprep.subr.mxu0 0.0
    %2084 = vmatpush1.msra.mxu0 0.0
    %2085 = vmatprep.subr.mxu0 0.0
    %2086 = vmatpush1.msra.mxu0 0.0
    %2087 = vmatprep.subr.mxu0 0.0
    %2088 = vmatpush1.msra.mxu0 0.0
    %2089 = vmatprep.subr.mxu0 0.0
    %2090 = vmatpush1.msra.mxu0 0.0
    %2091 = vmatprep.subr.mxu0 0.0
    %2092 = vmatpush1.msra.mxu0 0.0
    %2093 = vmatprep.subr.mxu0 0.0
    %2094 = vmatpush1.msra.mxu0 0.0
    %2095 = vmatprep.subr.mxu0 0.0
    %2096 = vmatpush1.msra.mxu0 0.0
    %2097 = vmatprep.subr.mxu0 0.0
    %2098 = vmatpush1.msra.mxu0 0.0
    %2099 = vmatprep.subr.mxu0 0.0
    %2100 = vmatpush1.msra.mxu0 0.0
    %2101 = vmatprep.subr.mxu0 0.0
    %2102 = vmatpush1.msra.mxu0 0.0
    %2103 = vmatprep.subr.mxu0 0.0
    %2104 = vmatpush1.msra.mxu0 0.0
    %2105 = vmatprep.subr.mxu0 0.0
    %2106 = vmatpush1.msra.mxu0 0.0
    %2107 = vmatprep.subr.mxu0 0.0
    %2108 = vmatpush1.msra.mxu0 0.0
    %2109 = vmatprep.subr.mxu0 0.0
    %2110 = vmatpush1.msra.mxu0 0.0
    %2111 = vmatprep.subr.mxu0 0.0
    %2112 = vmatpush1.msra.mxu0 0.0
    %2113 = vmatprep.subr.mxu0 0.0
    %2114 = vmatpush1.msra.mxu0 0.0
    %2115 = vmatprep.mubr.f32.mxu0 0.0
    %2116 = vmatmul.mubr.f32.gmra.mrb[0].mxu0 %v1827
    %v2117 = vpop.f32.mrb[0].mxu0
    %v2118 = vadd.f32 0.0, %v2117
    %v2119 = vpop.f32.mrb[0].mxu0
    %2120 = vdwg.mxu0
    %2121 = vmatprep.subr.mxu0 %v1861
    %2122 = vmatpush1.msra.mxu0 %v1860
    %2123 = vmatprep.subr.mxu0 %v1864
    %2124 = vmatpush1.msra.mxu0 %v1863
    %2125 = vmatprep.subr.mxu0 %v1867
    %2126 = vmatpush1.msra.mxu0 %v1866
    %2127 = vmatprep.subr.mxu0 %v1870
    %2128 = vmatpush1.msra.mxu0 %v1869
    %2129 = vmatprep.subr.mxu0 %v1873
    %2130 = vmatpush1.msra.mxu0 %v1872
    %2131 = vmatprep.subr.mxu0 %v1876
    %2132 = vmatpush1.msra.mxu0 %v1875
    %2133 = vmatprep.subr.mxu0 %v1879
    %2134 = vmatpush1.msra.mxu0 %v1878
    %2135 = vmatprep.subr.mxu0 %v1882
    %2136 = vmatpush1.msra.mxu0 %v1881
    %2137 = vmatprep.subr.mxu0 %v1885
    %2138 = vmatpush1.msra.mxu0 %v1884
    %2139 = vmatprep.subr.mxu0 %v1888
    %2140 = vmatpush1.msra.mxu0 %v1887
    %2141 = vmatprep.subr.mxu0 %v1891
    %2142 = vmatpush1.msra.mxu0 %v1890
    %2143 = vmatprep.subr.mxu0 %v1894
    %2144 = vmatpush1.msra.mxu0 %v1893
    %2145 = vmatprep.subr.mxu0 %v1897
    %2146 = vmatpush1.msra.mxu0 %v1896
    %2147 = vmatprep.subr.mxu0 %v1900
    %2148 = vmatpush1.msra.mxu0 %v1899
    %2149 = vmatprep.subr.mxu0 %v1903
    %2150 = vmatpush1.msra.mxu0 %v1902
    %2151 = vmatprep.subr.mxu0 %v1906
    %2152 = vmatpush1.msra.mxu0 %v1905
    %2153 = vmatprep.subr.mxu0 0.0
    %2154 = vmatpush1.msra.mxu0 0.0
    %2155 = vmatprep.subr.mxu0 0.0
    %2156 = vmatpush1.msra.mxu0 0.0
    %2157 = vmatprep.subr.mxu0 0.0
    %2158 = vmatpush1.msra.mxu0 0.0
    %2159 = vmatprep.subr.mxu0 0.0
    %2160 = vmatpush1.msra.mxu0 0.0
    %2161 = vmatprep.subr.mxu0 0.0
    %2162 = vmatpush1.msra.mxu0 0.0
    %2163 = vmatprep.subr.mxu0 0.0
    %2164 = vmatpush1.msra.mxu0 0.0
    %2165 = vmatprep.subr.mxu0 0.0
    %2166 = vmatpush1.msra.mxu0 0.0
    %2167 = vmatprep.subr.mxu0 0.0
    %2168 = vmatpush1.msra.mxu0 0.0
    %2169 = vmatprep.subr.mxu0 0.0
    %2170 = vmatpush1.msra.mxu0 0.0
    %2171 = vmatprep.subr.mxu0 0.0
    %2172 = vmatpush1.msra.mxu0 0.0
    %2173 = vmatprep.subr.mxu0 0.0
    %2174 = vmatpush1.msra.mxu0 0.0
    %2175 = vmatprep.subr.mxu0 0.0
    %2176 = vmatpush1.msra.mxu0 0.0
    %2177 = vmatprep.subr.mxu0 0.0
    %2178 = vmatpush1.msra.mxu0 0.0
    %2179 = vmatprep.subr.mxu0 0.0
    %2180 = vmatpush1.msra.mxu0 0.0
    %2181 = vmatprep.subr.mxu0 0.0
    %2182 = vmatpush1.msra.mxu0 0.0
    %2183 = vmatprep.subr.mxu0 0.0
    %2184 = vmatpush1.msra.mxu0 0.0
    %2185 = vmatprep.mubr.f32.mxu0 0.0
    %2186 = vmatmul.mubr.f32.gmra.mrb[0].mxu0 %v1826
    %v2187 = vpop.f32.mrb[0].mxu0
    %v2188 = vadd.f32 %v2047, %v2187
    %v2189 = vpop.f32.mrb[0].mxu0
    %v2190 = vadd.f32 %v2049, %v2189
    %2191 = vdwg.mxu0
    %2192 = vmatprep.subr.mxu0 0.0
    %2193 = vmatpush1.msra.mxu0 %v1862
    %2194 = vmatprep.subr.mxu0 0.0
    %2195 = vmatpush1.msra.mxu0 %v1865
    %2196 = vmatprep.subr.mxu0 0.0
    %2197 = vmatpush1.msra.mxu0 %v1868
    %2198 = vmatprep.subr.mxu0 0.0
    %2199 = vmatpush1.msra.mxu0 %v1871
    %2200 = vmatprep.subr.mxu0 0.0
    %2201 = vmatpush1.msra.mxu0 %v1874
    %2202 = vmatprep.subr.mxu0 0.0
    %2203 = vmatpush1.msra.mxu0 %v1877
    %2204 = vmatprep.subr.mxu0 0.0
    %2205 = vmatpush1.msra.mxu0 %v1880
    %2206 = vmatprep.subr.mxu0 0.0
    %2207 = vmatpush1.msra.mxu0 %v1883
    %2208 = vmatprep.subr.mxu0 0.0
    %2209 = vmatpush1.msra.mxu0 %v1886
    %2210 = vmatprep.subr.mxu0 0.0
    %2211 = vmatpush1.msra.mxu0 %v1889
    %2212 = vmatprep.subr.mxu0 0.0
    %2213 = vmatpush1.msra.mxu0 %v1892
    %2214 = vmatprep.subr.mxu0 0.0
    %2215 = vmatpush1.msra.mxu0 %v1895
    %2216 = vmatprep.subr.mxu0 0.0
    %2217 = vmatpush1.msra.mxu0 %v1898
    %2218 = vmatprep.subr.mxu0 0.0
    %2219 = vmatpush1.msra.mxu0 %v1901
    %2220 = vmatprep.subr.mxu0 0.0
    %2221 = vmatpush1.msra.mxu0 %v1904
    %2222 = vmatprep.subr.mxu0 0.0
    %2223 = vmatpush1.msra.mxu0 %v1907
    %2224 = vmatprep.subr.mxu0 0.0
    %2225 = vmatpush1.msra.mxu0 0.0
    %2226 = vmatprep.subr.mxu0 0.0
    %2227 = vmatpush1.msra.mxu0 0.0
    %2228 = vmatprep.subr.mxu0 0.0
    %2229 = vmatpush1.msra.mxu0 0.0
    %2230 = vmatprep.subr.mxu0 0.0
    %2231 = vmatpush1.msra.mxu0 0.0
    %2232 = vmatprep.subr.mxu0 0.0
    %2233 = vmatpush1.msra.mxu0 0.0
    %2234 = vmatprep.subr.mxu0 0.0
    %2235 = vmatpush1.msra.mxu0 0.0
    %2236 = vmatprep.subr.mxu0 0.0
    %2237 = vmatpush1.msra.mxu0 0.0
    %2238 = vmatprep.subr.mxu0 0.0
    %2239 = vmatpush1.msra.mxu0 0.0
    %2240 = vmatprep.subr.mxu0 0.0
    %2241 = vmatpush1.msra.mxu0 0.0
    %2242 = vmatprep.subr.mxu0 0.0
    %2243 = vmatpush1.msra.mxu0 0.0
    %2244 = vmatprep.subr.mxu0 0.0
    %2245 = vmatpush1.msra.mxu0 0.0
    %2246 = vmatprep.subr.mxu0 0.0
    %2247 = vmatpush1.msra.mxu0 0.0
    %2248 = vmatprep.subr.mxu0 0.0
    %2249 = vmatpush1.msra.mxu0 0.0
    %2250 = vmatprep.subr.mxu0 0.0
    %2251 = vmatpush1.msra.mxu0 0.0
    %2252 = vmatprep.subr.mxu0 0.0
    %2253 = vmatpush1.msra.mxu0 0.0
    %2254 = vmatprep.subr.mxu0 0.0
    %2255 = vmatpush1.msra.mxu0 0.0
    %2256 = vmatprep.mubr.f32.mxu0 0.0
    %2257 = vmatmul.mubr.f32.gmra.mrb[0].mxu0 %v1826
    %v2258 = vpop.f32.mrb[0].mxu0
    %v2259 = vadd.f32 %v2118, %v2258
    %v2260 = vpop.f32.mrb[0].mxu0
    %2261 = vdwg.mxu0
    %v2262 = vld [vmem:[%s10] sm:$0x7]
    %v2264 = vlaneseq
    %v2265 = vshrl.u32 %v2264, 7
    %v2266 = vsub.s32 0, %v2265
    %v2267 = vrot.slane %v2262, %v2266
    %v2268 = vlaneseq
    %v2269 = vshrl.u32 %v2268, 7
    %v2270 = vsub.s32 1, %v2269
    %v2271 = vrot.slane %v2262, %v2270
    %v2272 = vlaneseq
    %v2273 = vshrl.u32 %v2272, 7
    %v2274 = vsub.s32 2, %v2273
    %v2275 = vrot.slane %v2262, %v2274
    %v2279 = vadd.f32 %v2188, %v2267
    %v2280 = vadd.f32 %v2190, %v2271
    %v2281 = vadd.f32 %v2259, %v2275
    %v2282 = vld [vmem:[#allocation4] sm:$0xff]
    %v2283 = vld [vmem:[#allocation4 + $0x8] sm:$0xff]
    %v2284 = vld [vmem:[#allocation4 + $0x10] sm:$0xff]
    %v2285 = vld [vmem:[#allocation4 + $0x18] sm:$0xff]
    %v2286 = vld [vmem:[#allocation4 + $0x20] sm:$0xff]
    %v2287 = vld [vmem:[#allocation4 + $0x28] sm:$0xff]
    %v2288 = vld [vmem:[#allocation4 + $0x30] sm:$0xff]
    %v2289 = vld [vmem:[#allocation4 + $0x38] sm:$0xff]
    %v2290 = vld [vmem:[#allocation4 + $0x40] sm:$0xff]
    %v2291 = vld [vmem:[#allocation4 + $0x48] sm:$0xff]
    %v2292 = vld [vmem:[#allocation4 + $0x50] sm:$0xff]
    %v2293 = vld [vmem:[#allocation4 + $0x58] sm:$0xff]
    %v2294 = vld [vmem:[#allocation4 + $0x60] sm:$0xff]
    %v2295 = vld [vmem:[#allocation4 + $0x68] sm:$0xff]
    %v2296 = vld [vmem:[#allocation4 + $0x70] sm:$0xff]
    %v2297 = vld [vmem:[#allocation4 + $0x78] sm:$0xff]
    %v2298 = vld [vmem:[#allocation4 + $0x80] sm:$0xff]
    %v2299 = vld [vmem:[#allocation4 + $0x88] sm:$0xff]
    %v2300 = vld [vmem:[#allocation4 + $0x90] sm:$0xff]
    %v2301 = vld [vmem:[#allocation4 + $0x98] sm:$0xff]
    %v2302 = vld [vmem:[#allocation4 + $0xa0] sm:$0xff]
    %v2303 = vld [vmem:[#allocation4 + $0xa8] sm:$0xff]
    %v2304 = vld [vmem:[#allocation4 + $0xb0] sm:$0xff]
    %v2305 = vld [vmem:[#allocation4 + $0xb8] sm:$0xff]
    %v2306 = vunpack.c.l.bf16 %v2282
    %v2307 = vunpack.c.l.bf16 %v2283
    %v2308 = vunpack.c.l.bf16 %v2284
    %v2309 = vunpack.c.h.bf16 %v2282
    %v2310 = vunpack.c.h.bf16 %v2283
    %v2311 = vunpack.c.h.bf16 %v2284
    %v2312 = vunpack.c.l.bf16 %v2285
    %v2313 = vunpack.c.l.bf16 %v2286
    %v2314 = vunpack.c.l.bf16 %v2287
    %v2315 = vunpack.c.h.bf16 %v2285
    %v2316 = vunpack.c.h.bf16 %v2286
    %v2317 = vunpack.c.h.bf16 %v2287
    %v2318 = vunpack.c.l.bf16 %v2288
    %v2319 = vunpack.c.l.bf16 %v2289
    %v2320 = vunpack.c.l.bf16 %v2290
    %v2321 = vunpack.c.h.bf16 %v2288
    %v2322 = vunpack.c.h.bf16 %v2289
    %v2323 = vunpack.c.h.bf16 %v2290
    %v2324 = vunpack.c.l.bf16 %v2291
    %v2325 = vunpack.c.l.bf16 %v2292
    %v2326 = vunpack.c.l.bf16 %v2293
    %v2327 = vunpack.c.h.bf16 %v2291
    %v2328 = vunpack.c.h.bf16 %v2292
    %v2329 = vunpack.c.h.bf16 %v2293
    %v2330 = vunpack.c.l.bf16 %v2294
    %v2331 = vunpack.c.l.bf16 %v2295
    %v2332 = vunpack.c.l.bf16 %v2296
    %v2333 = vunpack.c.h.bf16 %v2294
    %v2334 = vunpack.c.h.bf16 %v2295
    %v2335 = vunpack.c.h.bf16 %v2296
    %v2336 = vunpack.c.l.bf16 %v2297
    %v2337 = vunpack.c.l.bf16 %v2298
    %v2338 = vunpack.c.l.bf16 %v2299
    %v2339 = vunpack.c.h.bf16 %v2297
    %v2340 = vunpack.c.h.bf16 %v2298
    %v2341 = vunpack.c.h.bf16 %v2299
    %v2342 = vunpack.c.l.bf16 %v2300
    %v2343 = vunpack.c.l.bf16 %v2301
    %v2344 = vunpack.c.l.bf16 %v2302
    %v2345 = vunpack.c.h.bf16 %v2300
    %v2346 = vunpack.c.h.bf16 %v2301
    %v2347 = vunpack.c.h.bf16 %v2302
    %v2348 = vunpack.c.l.bf16 %v2303
    %v2349 = vunpack.c.l.bf16 %v2304
    %v2350 = vunpack.c.l.bf16 %v2305
    %v2351 = vunpack.c.h.bf16 %v2303
    %v2352 = vunpack.c.h.bf16 %v2304
    %v2353 = vunpack.c.h.bf16 %v2305
    %v2354 = vld [vmem:[%s11] sm:$0x7]
    %v2356 = vlaneseq
    %v2357 = vshrl.u32 %v2356, 7
    %v2358 = vsub.s32 0, %v2357
    %v2359 = vrot.slane %v2354, %v2358
    %v2360 = vlaneseq
    %v2361 = vshrl.u32 %v2360, 7
    %v2362 = vsub.s32 1, %v2361
    %v2363 = vrot.slane %v2354, %v2362
    %v2364 = vlaneseq
    %v2365 = vshrl.u32 %v2364, 7
    %v2366 = vsub.s32 2, %v2365
    %v2367 = vrot.slane %v2354, %v2366
    %2371 = vmatprep.subr.mxu0 %v2307
    %2372 = vmatpush1.msra.mxu0 %v2306
    %2373 = vmatprep.subr.mxu0 %v2310
    %2374 = vmatpush1.msra.mxu0 %v2309
    %2375 = vmatprep.subr.mxu0 %v2313
    %2376 = vmatpush1.msra.mxu0 %v2312
    %2377 = vmatprep.subr.mxu0 %v2316
    %2378 = vmatpush1.msra.mxu0 %v2315
    %2379 = vmatprep.subr.mxu0 %v2319
    %2380 = vmatpush1.msra.mxu0 %v2318
    %2381 = vmatprep.subr.mxu0 %v2322
    %2382 = vmatpush1.msra.mxu0 %v2321
    %2383 = vmatprep.subr.mxu0 %v2325
    %2384 = vmatpush1.msra.mxu0 %v2324
    %2385 = vmatprep.subr.mxu0 %v2328
    %2386 = vmatpush1.msra.mxu0 %v2327
    %2387 = vmatprep.subr.mxu0 %v2331
    %2388 = vmatpush1.msra.mxu0 %v2330
    %2389 = vmatprep.subr.mxu0 %v2334
    %2390 = vmatpush1.msra.mxu0 %v2333
    %2391 = vmatprep.subr.mxu0 %v2337
    %2392 = vmatpush1.msra.mxu0 %v2336
    %2393 = vmatprep.subr.mxu0 %v2340
    %2394 = vmatpush1.msra.mxu0 %v2339
    %2395 = vmatprep.subr.mxu0 %v2343
    %2396 = vmatpush1.msra.mxu0 %v2342
    %2397 = vmatprep.subr.mxu0 %v2346
    %2398 = vmatpush1.msra.mxu0 %v2345
    %2399 = vmatprep.subr.mxu0 %v2349
    %2400 = vmatpush1.msra.mxu0 %v2348
    %2401 = vmatprep.subr.mxu0 %v2352
    %2402 = vmatpush1.msra.mxu0 %v2351
    %2403 = vmatprep.subr.mxu0 0.0
    %2404 = vmatpush1.msra.mxu0 0.0
    %2405 = vmatprep.subr.mxu0 0.0
    %2406 = vmatpush1.msra.mxu0 0.0
    %2407 = vmatprep.subr.mxu0 0.0
    %2408 = vmatpush1.msra.mxu0 0.0
    %2409 = vmatprep.subr.mxu0 0.0
    %2410 = vmatpush1.msra.mxu0 0.0
    %2411 = vmatprep.subr.mxu0 0.0
    %2412 = vmatpush1.msra.mxu0 0.0
    %2413 = vmatprep.subr.mxu0 0.0
    %2414 = vmatpush1.msra.mxu0 0.0
    %2415 = vmatprep.subr.mxu0 0.0
    %2416 = vmatpush1.msra.mxu0 0.0
    %2417 = vmatprep.subr.mxu0 0.0
    %2418 = vmatpush1.msra.mxu0 0.0
    %2419 = vmatprep.subr.mxu0 0.0
    %2420 = vmatpush1.msra.mxu0 0.0
    %2421 = vmatprep.subr.mxu0 0.0
    %2422 = vmatpush1.msra.mxu0 0.0
    %2423 = vmatprep.subr.mxu0 0.0
    %2424 = vmatpush1.msra.mxu0 0.0
    %2425 = vmatprep.subr.mxu0 0.0
    %2426 = vmatpush1.msra.mxu0 0.0
    %2427 = vmatprep.subr.mxu0 0.0
    %2428 = vmatpush1.msra.mxu0 0.0
    %2429 = vmatprep.subr.mxu0 0.0
    %2430 = vmatpush1.msra.mxu0 0.0
    %2431 = vmatprep.subr.mxu0 0.0
    %2432 = vmatpush1.msra.mxu0 0.0
    %2433 = vmatprep.subr.mxu0 0.0
    %2434 = vmatpush1.msra.mxu0 0.0
    %2435 = vmatprep.mubr.f32.mxu0 0.0
    %2436 = vmatmul.mubr.f32.gmra.mrb[0].mxu0 0.0
    %v2437 = vpop.f32.mrb[0].mxu0
    %v2438 = vadd.f32 %v2359, %v2437
    %v2439 = vpop.f32.mrb[0].mxu0
    %v2440 = vadd.f32 %v2363, %v2439
    %2441 = vdwg.mxu0
    %2442 = vmatprep.subr.mxu0 0.0
    %2443 = vmatpush1.msra.mxu0 %v2308
    %2444 = vmatprep.subr.mxu0 0.0
    %2445 = vmatpush1.msra.mxu0 %v2311
    %2446 = vmatprep.subr.mxu0 0.0
    %2447 = vmatpush1.msra.mxu0 %v2314
    %2448 = vmatprep.subr.mxu0 0.0
    %2449 = vmatpush1.msra.mxu0 %v2317
    %2450 = vmatprep.subr.mxu0 0.0
    %2451 = vmatpush1.msra.mxu0 %v2320
    %2452 = vmatprep.subr.mxu0 0.0
    %2453 = vmatpush1.msra.mxu0 %v2323
    %2454 = vmatprep.subr.mxu0 0.0
    %2455 = vmatpush1.msra.mxu0 %v2326
    %2456 = vmatprep.subr.mxu0 0.0
    %2457 = vmatpush1.msra.mxu0 %v2329
    %2458 = vmatprep.subr.mxu0 0.0
    %2459 = vmatpush1.msra.mxu0 %v2332
    %2460 = vmatprep.subr.mxu0 0.0
    %2461 = vmatpush1.msra.mxu0 %v2335
    %2462 = vmatprep.subr.mxu0 0.0
    %2463 = vmatpush1.msra.mxu0 %v2338
    %2464 = vmatprep.subr.mxu0 0.0
    %2465 = vmatpush1.msra.mxu0 %v2341
    %2466 = vmatprep.subr.mxu0 0.0
    %2467 = vmatpush1.msra.mxu0 %v2344
    %2468 = vmatprep.subr.mxu0 0.0
    %2469 = vmatpush1.msra.mxu0 %v2347
    %2470 = vmatprep.subr.mxu0 0.0
    %2471 = vmatpush1.msra.mxu0 %v2350
    %2472 = vmatprep.subr.mxu0 0.0
    %2473 = vmatpush1.msra.mxu0 %v2353
    %2474 = vmatprep.subr.mxu0 0.0
    %2475 = vmatpush1.msra.mxu0 0.0
    %2476 = vmatprep.subr.mxu0 0.0
    %2477 = vmatpush1.msra.mxu0 0.0
    %2478 = vmatprep.subr.mxu0 0.0
    %2479 = vmatpush1.msra.mxu0 0.0
    %2480 = vmatprep.subr.mxu0 0.0
    %2481 = vmatpush1.msra.mxu0 0.0
    %2482 = vmatprep.subr.mxu0 0.0
    %2483 = vmatpush1.msra.mxu0 0.0
    %2484 = vmatprep.subr.mxu0 0.0
    %2485 = vmatpush1.msra.mxu0 0.0
    %2486 = vmatprep.subr.mxu0 0.0
    %2487 = vmatpush1.msra.mxu0 0.0
    %2488 = vmatprep.subr.mxu0 0.0
    %2489 = vmatpush1.msra.mxu0 0.0
    %2490 = vmatprep.subr.mxu0 0.0
    %2491 = vmatpush1.msra.mxu0 0.0
    %2492 = vmatprep.subr.mxu0 0.0
    %2493 = vmatpush1.msra.mxu0 0.0
    %2494 = vmatprep.subr.mxu0 0.0
    %2495 = vmatpush1.msra.mxu0 0.0
    %2496 = vmatprep.subr.mxu0 0.0
    %2497 = vmatpush1.msra.mxu0 0.0
    %2498 = vmatprep.subr.mxu0 0.0
    %2499 = vmatpush1.msra.mxu0 0.0
    %2500 = vmatprep.subr.mxu0 0.0
    %2501 = vmatpush1.msra.mxu0 0.0
    %2502 = vmatprep.subr.mxu0 0.0
    %2503 = vmatpush1.msra.mxu0 0.0
    %2504 = vmatprep.subr.mxu0 0.0
    %2505 = vmatpush1.msra.mxu0 0.0
    %2506 = vmatprep.mubr.f32.mxu0 0.0
    %2507 = vmatmul.mubr.f32.gmra.mrb[0].mxu0 0.0
    %v2508 = vpop.f32.mrb[0].mxu0
    %v2509 = vadd.f32 %v2367, %v2508
    %v2510 = vpop.f32.mrb[0].mxu0
    %2511 = vdwg.mxu0
    %v2512 = vadd.f32 %v2279, %v2438
    %v2513 = vadd.f32 %v2280, %v2440
    %v2514 = vxor.u32 %v2512, 2147483648
    %v2515 = vxor.u32 %v2513, 2147483648
    %v2516 = vmul.f32 %v2514, 1.442695
    %v2517 = vpow.pop %v2516
    %v2518 = vmul.f32 %v2515, 1.442695
    %v2519 = vpow.pop %v2518
    %v2520 = vadd.f32 %v2517, 1.0
    %v2521 = vadd.f32 %v2519, 1.0
    %v2522 = vrcp.pop %v2520
    %v2523 = vmul.f32 1.0, %v2522
    %v2524 = vrcp.pop %v2521
    %v2525 = vmul.f32 1.0, %v2524
    %v2526 = vmul.f32 %v2523, %v2509
    %v2527 = vadd.f32 %v2281, %v2526
    %v2528 = vtanh.pop %v2527
    %v2529 = vsub.f32 1.0, %v2525
    %v2530 = vmul.f32 %v2529, %v2528
    %v2531 = vmul.f32 %v2525, 0.0
    %v2532 = vadd.f32 %v2530, %v2531
    %2533 = vmatprep.subr.mxu0 %v2307
    %2534 = vmatpush1.msra.mxu0 %v2306
    %2535 = vmatprep.subr.mxu0 %v2310
    %2536 = vmatpush1.msra.mxu0 %v2309
    %2537 = vmatprep.subr.mxu0 %v2313
    %2538 = vmatpush1.msra.mxu0 %v2312
    %2539 = vmatprep.subr.mxu0 %v2316
    %2540 = vmatpush1.msra.mxu0 %v2315
    %2541 = vmatprep.subr.mxu0 %v2319
    %2542 = vmatpush1.msra.mxu0 %v2318
    %2543 = vmatprep.subr.mxu0 %v2322
    %2544 = vmatpush1.msra.mxu0 %v2321
    %2545 = vmatprep.subr.mxu0 %v2325
    %2546 = vmatpush1.msra.mxu0 %v2324
    %2547 = vmatprep.subr.mxu0 %v2328
    %2548 = vmatpush1.msra.mxu0 %v2327
    %2549 = vmatprep.subr.mxu0 %v2331
    %2550 = vmatpush1.msra.mxu0 %v2330
    %2551 = vmatprep.subr.mxu0 %v2334
    %2552 = vmatpush1.msra.mxu0 %v2333
    %2553 = vmatprep.subr.mxu0 %v2337
    %2554 = vmatpush1.msra.mxu0 %v2336
    %2555 = vmatprep.subr.mxu0 %v2340
    %2556 = vmatpush1.msra.mxu0 %v2339
    %2557 = vmatprep.subr.mxu0 %v2343
    %2558 = vmatpush1.msra.mxu0 %v2342
    %2559 = vmatprep.subr.mxu0 %v2346
    %2560 = vmatpush1.msra.mxu0 %v2345
    %2561 = vmatprep.subr.mxu0 %v2349
    %2562 = vmatpush1.msra.mxu0 %v2348
    %2563 = vmatprep.subr.mxu0 %v2352
    %2564 = vmatpush1.msra.mxu0 %v2351
    %2565 = vmatprep.subr.mxu0 0.0
    %2566 = vmatpush1.msra.mxu0 0.0
    %2567 = vmatprep.subr.mxu0 0.0
    %2568 = vmatpush1.msra.mxu0 0.0
    %2569 = vmatprep.subr.mxu0 0.0
    %2570 = vmatpush1.msra.mxu0 0.0
    %2571 = vmatprep.subr.mxu0 0.0
    %2572 = vmatpush1.msra.mxu0 0.0
    %2573 = vmatprep.subr.mxu0 0.0
    %2574 = vmatpush1.msra.mxu0 0.0
    %2575 = vmatprep.subr.mxu0 0.0
    %2576 = vmatpush1.msra.mxu0 0.0
    %2577 = vmatprep.subr.mxu0 0.0
    %2578 = vmatpush1.msra.mxu0 0.0
    %2579 = vmatprep.subr.mxu0 0.0
    %2580 = vmatpush1.msra.mxu0 0.0
    %2581 = vmatprep.subr.mxu0 0.0
    %2582 = vmatpush1.msra.mxu0 0.0
    %2583 = vmatprep.subr.mxu0 0.0
    %2584 = vmatpush1.msra.mxu0 0.0
    %2585 = vmatprep.subr.mxu0 0.0
    %2586 = vmatpush1.msra.mxu0 0.0
    %2587 = vmatprep.subr.mxu0 0.0
    %2588 = vmatpush1.msra.mxu0 0.0
    %2589 = vmatprep.subr.mxu0 0.0
    %2590 = vmatpush1.msra.mxu0 0.0
    %2591 = vmatprep.subr.mxu0 0.0
    %2592 = vmatpush1.msra.mxu0 0.0
    %2593 = vmatprep.subr.mxu0 0.0
    %2594 = vmatpush1.msra.mxu0 0.0
    %2595 = vmatprep.subr.mxu0 0.0
    %2596 = vmatpush1.msra.mxu0 0.0
    %2597 = vmatprep.mubr.f32.mxu0 0.0
    %2598 = vmatmul.mubr.f32.gmra.mrb[0].mxu0 %v2532
    %v2599 = vpop.f32.mrb[0].mxu0
    %v2600 = vadd.f32 %v2359, %v2599
    %v2601 = vpop.f32.mrb[0].mxu0
    %v2602 = vadd.f32 %v2363, %v2601
    %2603 = vdwg.mxu0
    %2604 = vmatprep.subr.mxu0 0.0
    %2605 = vmatpush1.msra.mxu0 %v2308
    %2606 = vmatprep.subr.mxu0 0.0
    %2607 = vmatpush1.msra.mxu0 %v2311
    %2608 = vmatprep.subr.mxu0 0.0
    %2609 = vmatpush1.msra.mxu0 %v2314
    %2610 = vmatprep.subr.mxu0 0.0
    %2611 = vmatpush1.msra.mxu0 %v2317
    %2612 = vmatprep.subr.mxu0 0.0
    %2613 = vmatpush1.msra.mxu0 %v2320
    %2614 = vmatprep.subr.mxu0 0.0
    %2615 = vmatpush1.msra.mxu0 %v2323
    %2616 = vmatprep.subr.mxu0 0.0
    %2617 = vmatpush1.msra.mxu0 %v2326
    %2618 = vmatprep.subr.mxu0 0.0
    %2619 = vmatpush1.msra.mxu0 %v2329
    %2620 = vmatprep.subr.mxu0 0.0
    %2621 = vmatpush1.msra.mxu0 %v2332
    %2622 = vmatprep.subr.mxu0 0.0
    %2623 = vmatpush1.msra.mxu0 %v2335
    %2624 = vmatprep.subr.mxu0 0.0
    %2625 = vmatpush1.msra.mxu0 %v2338
    %2626 = vmatprep.subr.mxu0 0.0
    %2627 = vmatpush1.msra.mxu0 %v2341
    %2628 = vmatprep.subr.mxu0 0.0
    %2629 = vmatpush1.msra.mxu0 %v2344
    %2630 = vmatprep.subr.mxu0 0.0
    %2631 = vmatpush1.msra.mxu0 %v2347
    %2632 = vmatprep.subr.mxu0 0.0
    %2633 = vmatpush1.msra.mxu0 %v2350
    %2634 = vmatprep.subr.mxu0 0.0
    %2635 = vmatpush1.msra.mxu0 %v2353
    %2636 = vmatprep.subr.mxu0 0.0
    %2637 = vmatpush1.msra.mxu0 0.0
    %2638 = vmatprep.subr.mxu0 0.0
    %2639 = vmatpush1.msra.mxu0 0.0
    %2640 = vmatprep.subr.mxu0 0.0
    %2641 = vmatpush1.msra.mxu0 0.0
    %2642 = vmatprep.subr.mxu0 0.0
    %2643 = vmatpush1.msra.mxu0 0.0
    %2644 = vmatprep.subr.mxu0 0.0
    %2645 = vmatpush1.msra.mxu0 0.0
    %2646 = vmatprep.subr.mxu0 0.0
    %2647 = vmatpush1.msra.mxu0 0.0
    %2648 = vmatprep.subr.mxu0 0.0
    %2649 = vmatpush1.msra.mxu0 0.0
    %2650 = vmatprep.subr.mxu0 0.0
    %2651 = vmatpush1.msra.mxu0 0.0
    %2652 = vmatprep.subr.mxu0 0.0
    %2653 = vmatpush1.msra.mxu0 0.0
    %2654 = vmatprep.subr.mxu0 0.0
    %2655 = vmatpush1.msra.mxu0 0.0
    %2656 = vmatprep.subr.mxu0 0.0
    %2657 = vmatpush1.msra.mxu0 0.0
    %2658 = vmatprep.subr.mxu0 0.0
    %2659 = vmatpush1.msra.mxu0 0.0
    %2660 = vmatprep.subr.mxu0 0.0
    %2661 = vmatpush1.msra.mxu0 0.0
    %2662 = vmatprep.subr.mxu0 0.0
    %2663 = vmatpush1.msra.mxu0 0.0
    %2664 = vmatprep.subr.mxu0 0.0
    %2665 = vmatpush1.msra.mxu0 0.0
    %2666 = vmatprep.subr.mxu0 0.0
    %2667 = vmatpush1.msra.mxu0 0.0
    %2668 = vmatprep.mubr.f32.mxu0 0.0
    %2669 = vmatmul.mubr.f32.gmra.mrb[0].mxu0 %v2532
    %v2670 = vpop.f32.mrb[0].mxu0
    %v2671 = vadd.f32 %v2367, %v2670
    %v2672 = vpop.f32.mrb[0].mxu0
    %2673 = vdwg.mxu0
    %v2676 = vrot.slane %v2600, 7
    %v2677 = vrot.slane %v2602, 7
    %v2680 = vadd.f32 %v2279, %v2676
    %v2681 = vadd.f32 %v2280, %v2677
    %v2682 = vxor.u32 %v2680, 2147483648
    %v2683 = vxor.u32 %v2681, 2147483648
    %v2684 = vmul.f32 %v2682, 1.442695
    %v2685 = vpow.pop %v2684
    %v2686 = vmul.f32 %v2683, 1.442695
    %v2687 = vpow.pop %v2686
    %v2688 = vadd.f32 %v2685, 1.0
    %v2689 = vadd.f32 %v2687, 1.0
    %v2690 = vrcp.pop %v2688
    %v2691 = vmul.f32 1.0, %v2690
    %v2692 = vrcp.pop %v2689
    %v2693 = vmul.f32 1.0, %v2692
    %v2695 = vrot.slane %v2671, 7
    %v2697 = vmul.f32 %v2691, %v2695
    %v2698 = vadd.f32 %v2281, %v2697
    %v2699 = vtanh.pop %v2698
    %v2700 = vsub.f32 1.0, %v2693
    %v2701 = vmul.f32 %v2700, %v2699
    %v2703 = vrot.slane %v2532, 7
    %v2705 = vmul.f32 %v2693, %v2703
    %v2706 = vadd.f32 %v2701, %v2705
    %v2708 = vrot.slane %v2706, 1
    %2710 = vmatprep.subr.mxu0 %v2307
    %2711 = vmatpush1.msra.mxu0 %v2306
    %2712 = vmatprep.subr.mxu0 %v2310
    %2713 = vmatpush1.msra.mxu0 %v2309
    %2714 = vmatprep.subr.mxu0 %v2313
    %2715 = vmatpush1.msra.mxu0 %v2312
    %2716 = vmatprep.subr.mxu0 %v2316
    %2717 = vmatpush1.msra.mxu0 %v2315
    %2718 = vmatprep.subr.mxu0 %v2319
    %2719 = vmatpush1.msra.mxu0 %v2318
    %2720 = vmatprep.subr.mxu0 %v2322
    %2721 = vmatpush1.msra.mxu0 %v2321
    %2722 = vmatprep.subr.mxu0 %v2325
    %2723 = vmatpush1.msra.mxu0 %v2324
    %2724 = vmatprep.subr.mxu0 %v2328
    %2725 = vmatpush1.msra.mxu0 %v2327
    %2726 = vmatprep.subr.mxu0 %v2331
    %2727 = vmatpush1.msra.mxu0 %v2330
    %2728 = vmatprep.subr.mxu0 %v2334
    %2729 = vmatpush1.msra.mxu0 %v2333
    %2730 = vmatprep.subr.mxu0 %v2337
    %2731 = vmatpush1.msra.mxu0 %v2336
    %2732 = vmatprep.subr.mxu0 %v2340
    %2733 = vmatpush1.msra.mxu0 %v2339
    %2734 = vmatprep.subr.mxu0 %v2343
    %2735 = vmatpush1.msra.mxu0 %v2342
    %2736 = vmatprep.subr.mxu0 %v2346
    %2737 = vmatpush1.msra.mxu0 %v2345
    %2738 = vmatprep.subr.mxu0 %v2349
    %2739 = vmatpush1.msra.mxu0 %v2348
    %2740 = vmatprep.subr.mxu0 %v2352
    %2741 = vmatpush1.msra.mxu0 %v2351
    %2742 = vmatprep.subr.mxu0 0.0
    %2743 = vmatpush1.msra.mxu0 0.0
    %2744 = vmatprep.subr.mxu0 0.0
    %2745 = vmatpush1.msra.mxu0 0.0
    %2746 = vmatprep.subr.mxu0 0.0
    %2747 = vmatpush1.msra.mxu0 0.0
    %2748 = vmatprep.subr.mxu0 0.0
    %2749 = vmatpush1.msra.mxu0 0.0
    %2750 = vmatprep.subr.mxu0 0.0
    %2751 = vmatpush1.msra.mxu0 0.0
    %2752 = vmatprep.subr.mxu0 0.0
    %2753 = vmatpush1.msra.mxu0 0.0
    %2754 = vmatprep.subr.mxu0 0.0
    %2755 = vmatpush1.msra.mxu0 0.0
    %2756 = vmatprep.subr.mxu0 0.0
    %2757 = vmatpush1.msra.mxu0 0.0
    %2758 = vmatprep.subr.mxu0 0.0
    %2759 = vmatpush1.msra.mxu0 0.0
    %2760 = vmatprep.subr.mxu0 0.0
    %2761 = vmatpush1.msra.mxu0 0.0
    %2762 = vmatprep.subr.mxu0 0.0
    %2763 = vmatpush1.msra.mxu0 0.0
    %2764 = vmatprep.subr.mxu0 0.0
    %2765 = vmatpush1.msra.mxu0 0.0
    %2766 = vmatprep.subr.mxu0 0.0
    %2767 = vmatpush1.msra.mxu0 0.0
    %2768 = vmatprep.subr.mxu0 0.0
    %2769 = vmatpush1.msra.mxu0 0.0
    %2770 = vmatprep.subr.mxu0 0.0
    %2771 = vmatpush1.msra.mxu0 0.0
    %2772 = vmatprep.subr.mxu0 0.0
    %2773 = vmatpush1.msra.mxu0 0.0
    %2774 = vmatprep.mubr.f32.mxu0 0.0
    %2775 = vmatmul.mubr.f32.gmra.mrb[0].mxu0 %v2708
    %v2776 = vpop.f32.mrb[0].mxu0
    %v2777 = vadd.f32 %v2359, %v2776
    %v2778 = vpop.f32.mrb[0].mxu0
    %v2779 = vadd.f32 %v2363, %v2778
    %2780 = vdwg.mxu0
    %2781 = vmatprep.subr.mxu0 0.0
    %2782 = vmatpush1.msra.mxu0 %v2308
    %2783 = vmatprep.subr.mxu0 0.0
    %2784 = vmatpush1.msra.mxu0 %v2311
    %2785 = vmatprep.subr.mxu0 0.0
    %2786 = vmatpush1.msra.mxu0 %v2314
    %2787 = vmatprep.subr.mxu0 0.0
    %2788 = vmatpush1.msra.mxu0 %v2317
    %2789 = vmatprep.subr.mxu0 0.0
    %2790 = vmatpush1.msra.mxu0 %v2320
    %2791 = vmatprep.subr.mxu0 0.0
    %2792 = vmatpush1.msra.mxu0 %v2323
    %2793 = vmatprep.subr.mxu0 0.0
    %2794 = vmatpush1.msra.mxu0 %v2326
    %2795 = vmatprep.subr.mxu0 0.0
    %2796 = vmatpush1.msra.mxu0 %v2329
    %2797 = vmatprep.subr.mxu0 0.0
    %2798 = vmatpush1.msra.mxu0 %v2332
    %2799 = vmatprep.subr.mxu0 0.0
    %2800 = vmatpush1.msra.mxu0 %v2335
    %2801 = vmatprep.subr.mxu0 0.0
    %2802 = vmatpush1.msra.mxu0 %v2338
    %2803 = vmatprep.subr.mxu0 0.0
    %2804 = vmatpush1.msra.mxu0 %v2341
    %2805 = vmatprep.subr.mxu0 0.0
    %2806 = vmatpush1.msra.mxu0 %v2344
    %2807 = vmatprep.subr.mxu0 0.0
    %2808 = vmatpush1.msra.mxu0 %v2347
    %2809 = vmatprep.subr.mxu0 0.0
    %2810 = vmatpush1.msra.mxu0 %v2350
    %2811 = vmatprep.subr.mxu0 0.0
    %2812 = vmatpush1.msra.mxu0 %v2353
    %2813 = vmatprep.subr.mxu0 0.0
    %2814 = vmatpush1.msra.mxu0 0.0
    %2815 = vmatprep.subr.mxu0 0.0
    %2816 = vmatpush1.msra.mxu0 0.0
    %2817 = vmatprep.subr.mxu0 0.0
    %2818 = vmatpush1.msra.mxu0 0.0
    %2819 = vmatprep.subr.mxu0 0.0
    %2820 = vmatpush1.msra.mxu0 0.0
    %2821 = vmatprep.subr.mxu0 0.0
    %2822 = vmatpush1.msra.mxu0 0.0
    %2823 = vmatprep.subr.mxu0 0.0
    %2824 = vmatpush1.msra.mxu0 0.0
    %2825 = vmatprep.subr.mxu0 0.0
    %2826 = vmatpush1.msra.mxu0 0.0
    %2827 = vmatprep.subr.mxu0 0.0
    %2828 = vmatpush1.msra.mxu0 0.0
    %2829 = vmatprep.subr.mxu0 0.0
    %2830 = vmatpush1.msra.mxu0 0.0
    %2831 = vmatprep.subr.mxu0 0.0
    %2832 = vmatpush1.msra.mxu0 0.0
    %2833 = vmatprep.subr.mxu0 0.0
    %2834 = vmatpush1.msra.mxu0 0.0
    %2835 = vmatprep.subr.mxu0 0.0
    %2836 = vmatpush1.msra.mxu0 0.0
    %2837 = vmatprep.subr.mxu0 0.0
    %2838 = vmatpush1.msra.mxu0 0.0
    %2839 = vmatprep.subr.mxu0 0.0
    %2840 = vmatpush1.msra.mxu0 0.0
    %2841 = vmatprep.subr.mxu0 0.0
    %2842 = vmatpush1.msra.mxu0 0.0
    %2843 = vmatprep.subr.mxu0 0.0
    %2844 = vmatpush1.msra.mxu0 0.0
    %2845 = vmatprep.mubr.f32.mxu0 0.0
    %2846 = vmatmul.mubr.f32.gmra.mrb[0].mxu0 %v2708
    %v2847 = vpop.f32.mrb[0].mxu0
    %v2848 = vadd.f32 %v2367, %v2847
    %v2849 = vpop.f32.mrb[0].mxu0
    %2850 = vdwg.mxu0
    %v2853 = vrot.slane %v2777, 6
    %v2854 = vrot.slane %v2779, 6
    %v2857 = vadd.f32 %v2279, %v2853
    %v2858 = vadd.f32 %v2280, %v2854
    %v2859 = vxor.u32 %v2857, 2147483648
    %v2860 = vxor.u32 %v2858, 2147483648
    %v2861 = vmul.f32 %v2859, 1.442695
    %v2862 = vpow.pop %v2861
    %v2863 = vmul.f32 %v2860, 1.442695
    %v2864 = vpow.pop %v2863
    %v2865 = vadd.f32 %v2862, 1.0
    %v2866 = vadd.f32 %v2864, 1.0
    %v2867 = vrcp.pop %v2865
    %v2868 = vmul.f32 1.0, %v2867
    %v2869 = vrcp.pop %v2866
    %v2870 = vmul.f32 1.0, %v2869
    %v2872 = vrot.slane %v2848, 6
    %v2874 = vmul.f32 %v2868, %v2872
    %v2875 = vadd.f32 %v2281, %v2874
    %v2876 = vtanh.pop %v2875
    %v2877 = vsub.f32 1.0, %v2870
    %v2878 = vmul.f32 %v2877, %v2876
    %v2879 = vrot.slane %v2706, 7
    %v2881 = vmul.f32 %v2870, %v2879
    %v2882 = vadd.f32 %v2878, %v2881
    %v2884 = vrot.slane %v2882, 2
    %2886 = vmatprep.subr.mxu0 %v2307
    %2887 = vmatpush1.msra.mxu0 %v2306
    %2888 = vmatprep.subr.mxu0 %v2310
    %2889 = vmatpush1.msra.mxu0 %v2309
    %2890 = vmatprep.subr.mxu0 %v2313
    %2891 = vmatpush1.msra.mxu0 %v2312
    %2892 = vmatprep.subr.mxu0 %v2316
    %2893 = vmatpush1.msra.mxu0 %v2315
    %2894 = vmatprep.subr.mxu0 %v2319
    %2895 = vmatpush1.msra.mxu0 %v2318
    %2896 = vmatprep.subr.mxu0 %v2322
    %2897 = vmatpush1.msra.mxu0 %v2321
    %2898 = vmatprep.subr.mxu0 %v2325
    %2899 = vmatpush1.msra.mxu0 %v2324
    %2900 = vmatprep.subr.mxu0 %v2328
    %2901 = vmatpush1.msra.mxu0 %v2327
    %2902 = vmatprep.subr.mxu0 %v2331
    %2903 = vmatpush1.msra.mxu0 %v2330
    %2904 = vmatprep.subr.mxu0 %v2334
    %2905 = vmatpush1.msra.mxu0 %v2333
    %2906 = vmatprep.subr.mxu0 %v2337
    %2907 = vmatpush1.msra.mxu0 %v2336
    %2908 = vmatprep.subr.mxu0 %v2340
    %2909 = vmatpush1.msra.mxu0 %v2339
    %2910 = vmatprep.subr.mxu0 %v2343
    %2911 = vmatpush1.msra.mxu0 %v2342
    %2912 = vmatprep.subr.mxu0 %v2346
    %2913 = vmatpush1.msra.mxu0 %v2345
    %2914 = vmatprep.subr.mxu0 %v2349
    %2915 = vmatpush1.msra.mxu0 %v2348
    %2916 = vmatprep.subr.mxu0 %v2352
    %2917 = vmatpush1.msra.mxu0 %v2351
    %2918 = vmatprep.subr.mxu0 0.0
    %2919 = vmatpush1.msra.mxu0 0.0
    %2920 = vmatprep.subr.mxu0 0.0
    %2921 = vmatpush1.msra.mxu0 0.0
    %2922 = vmatprep.subr.mxu0 0.0
    %2923 = vmatpush1.msra.mxu0 0.0
    %2924 = vmatprep.subr.mxu0 0.0
    %2925 = vmatpush1.msra.mxu0 0.0
    %2926 = vmatprep.subr.mxu0 0.0
    %2927 = vmatpush1.msra.mxu0 0.0
    %2928 = vmatprep.subr.mxu0 0.0
    %2929 = vmatpush1.msra.mxu0 0.0
    %2930 = vmatprep.subr.mxu0 0.0
    %2931 = vmatpush1.msra.mxu0 0.0
    %2932 = vmatprep.subr.mxu0 0.0
    %2933 = vmatpush1.msra.mxu0 0.0
    %2934 = vmatprep.subr.mxu0 0.0
    %2935 = vmatpush1.msra.mxu0 0.0
    %2936 = vmatprep.subr.mxu0 0.0
    %2937 = vmatpush1.msra.mxu0 0.0
    %2938 = vmatprep.subr.mxu0 0.0
    %2939 = vmatpush1.msra.mxu0 0.0
    %2940 = vmatprep.subr.mxu0 0.0
    %2941 = vmatpush1.msra.mxu0 0.0
    %2942 = vmatprep.subr.mxu0 0.0
    %2943 = vmatpush1.msra.mxu0 0.0
    %2944 = vmatprep.subr.mxu0 0.0
    %2945 = vmatpush1.msra.mxu0 0.0
    %2946 = vmatprep.subr.mxu0 0.0
    %2947 = vmatpush1.msra.mxu0 0.0
    %2948 = vmatprep.subr.mxu0 0.0
    %2949 = vmatpush1.msra.mxu0 0.0
    %2950 = vmatprep.mubr.f32.mxu0 0.0
    %2951 = vmatmul.mubr.f32.gmra.mrb[0].mxu0 %v2884
    %v2952 = vpop.f32.mrb[0].mxu0
    %v2953 = vadd.f32 %v2359, %v2952
    %v2954 = vpop.f32.mrb[0].mxu0
    %v2955 = vadd.f32 %v2363, %v2954
    %2956 = vdwg.mxu0
    %2957 = vmatprep.subr.mxu0 0.0
    %2958 = vmatpush1.msra.mxu0 %v2308
    %2959 = vmatprep.subr.mxu0 0.0
    %2960 = vmatpush1.msra.mxu0 %v2311
    %2961 = vmatprep.subr.mxu0 0.0
    %2962 = vmatpush1.msra.mxu0 %v2314
    %2963 = vmatprep.subr.mxu0 0.0
    %2964 = vmatpush1.msra.mxu0 %v2317
    %2965 = vmatprep.subr.mxu0 0.0
    %2966 = vmatpush1.msra.mxu0 %v2320
    %2967 = vmatprep.subr.mxu0 0.0
    %2968 = vmatpush1.msra.mxu0 %v2323
    %2969 = vmatprep.subr.mxu0 0.0
    %2970 = vmatpush1.msra.mxu0 %v2326
    %2971 = vmatprep.subr.mxu0 0.0
    %2972 = vmatpush1.msra.mxu0 %v2329
    %2973 = vmatprep.subr.mxu0 0.0
    %2974 = vmatpush1.msra.mxu0 %v2332
    %2975 = vmatprep.subr.mxu0 0.0
    %2976 = vmatpush1.msra.mxu0 %v2335
    %2977 = vmatprep.subr.mxu0 0.0
    %2978 = vmatpush1.msra.mxu0 %v2338
    %2979 = vmatprep.subr.mxu0 0.0
    %2980 = vmatpush1.msra.mxu0 %v2341
    %2981 = vmatprep.subr.mxu0 0.0
    %2982 = vmatpush1.msra.mxu0 %v2344
    %2983 = vmatprep.subr.mxu0 0.0
    %2984 = vmatpush1.msra.mxu0 %v2347
    %2985 = vmatprep.subr.mxu0 0.0
    %2986 = vmatpush1.msra.mxu0 %v2350
    %2987 = vmatprep.subr.mxu0 0.0
    %2988 = vmatpush1.msra.mxu0 %v2353
    %2989 = vmatprep.subr.mxu0 0.0
    %2990 = vmatpush1.msra.mxu0 0.0
    %2991 = vmatprep.subr.mxu0 0.0
    %2992 = vmatpush1.msra.mxu0 0.0
    %2993 = vmatprep.subr.mxu0 0.0
    %2994 = vmatpush1.msra.mxu0 0.0
    %2995 = vmatprep.subr.mxu0 0.0
    %2996 = vmatpush1.msra.mxu0 0.0
    %2997 = vmatprep.subr.mxu0 0.0
    %2998 = vmatpush1.msra.mxu0 0.0
    %2999 = vmatprep.subr.mxu0 0.0
    %3000 = vmatpush1.msra.mxu0 0.0
    %3001 = vmatprep.subr.mxu0 0.0
    %3002 = vmatpush1.msra.mxu0 0.0
    %3003 = vmatprep.subr.mxu0 0.0
    %3004 = vmatpush1.msra.mxu0 0.0
    %3005 = vmatprep.subr.mxu0 0.0
    %3006 = vmatpush1.msra.mxu0 0.0
    %3007 = vmatprep.subr.mxu0 0.0
    %3008 = vmatpush1.msra.mxu0 0.0
    %3009 = vmatprep.subr.mxu0 0.0
    %3010 = vmatpush1.msra.mxu0 0.0
    %3011 = vmatprep.subr.mxu0 0.0
    %3012 = vmatpush1.msra.mxu0 0.0
    %3013 = vmatprep.subr.mxu0 0.0
    %3014 = vmatpush1.msra.mxu0 0.0
    %3015 = vmatprep.subr.mxu0 0.0
    %3016 = vmatpush1.msra.mxu0 0.0
    %3017 = vmatprep.subr.mxu0 0.0
    %3018 = vmatpush1.msra.mxu0 0.0
    %3019 = vmatprep.subr.mxu0 0.0
    %3020 = vmatpush1.msra.mxu0 0.0
    %3021 = vmatprep.mubr.f32.mxu0 0.0
    %3022 = vmatmul.mubr.f32.gmra.mrb[0].mxu0 %v2884
    %v3023 = vpop.f32.mrb[0].mxu0
    %v3024 = vadd.f32 %v2367, %v3023
    %v3025 = vpop.f32.mrb[0].mxu0
    %3026 = vdwg.mxu0
    %v3029 = vrot.slane %v2953, 5
    %v3030 = vrot.slane %v2955, 5
    %v3033 = vadd.f32 %v2279, %v3029
    %v3034 = vadd.f32 %v2280, %v3030
    %v3035 = vxor.u32 %v3033, 2147483648
    %v3036 = vxor.u32 %v3034, 2147483648
    %v3037 = vmul.f32 %v3035, 1.442695
    %v3038 = vpow.pop %v3037
    %v3039 = vmul.f32 %v3036, 1.442695
    %v3040 = vpow.pop %v3039
    %v3041 = vadd.f32 %v3038, 1.0
    %v3042 = vadd.f32 %v3040, 1.0
    %v3043 = vrcp.pop %v3041
    %v3044 = vmul.f32 1.0, %v3043
    %v3045 = vrcp.pop %v3042
    %v3046 = vmul.f32 1.0, %v3045
    %v3048 = vrot.slane %v3024, 5
    %v3050 = vmul.f32 %v3044, %v3048
    %v3051 = vadd.f32 %v2281, %v3050
    %v3052 = vtanh.pop %v3051
    %v3053 = vsub.f32 1.0, %v3046
    %v3054 = vmul.f32 %v3053, %v3052
    %v3055 = vrot.slane %v2882, 7
    %v3057 = vmul.f32 %v3046, %v3055
    %v3058 = vadd.f32 %v3054, %v3057
    %v3060 = vrot.slane %v3058, 3
    %3062 = vmatprep.subr.mxu0 %v2307
    %3063 = vmatpush1.msra.mxu0 %v2306
    %3064 = vmatprep.subr.mxu0 %v2310
    %3065 = vmatpush1.msra.mxu0 %v2309
    %3066 = vmatprep.subr.mxu0 %v2313
    %3067 = vmatpush1.msra.mxu0 %v2312
    %3068 = vmatprep.subr.mxu0 %v2316
    %3069 = vmatpush1.msra.mxu0 %v2315
    %3070 = vmatprep.subr.mxu0 %v2319
    %3071 = vmatpush1.msra.mxu0 %v2318
    %3072 = vmatprep.subr.mxu0 %v2322
    %3073 = vmatpush1.msra.mxu0 %v2321
    %3074 = vmatprep.subr.mxu0 %v2325
    %3075 = vmatpush1.msra.mxu0 %v2324
    %3076 = vmatprep.subr.mxu0 %v2328
    %3077 = vmatpush1.msra.mxu0 %v2327
    %3078 = vmatprep.subr.mxu0 %v2331
    %3079 = vmatpush1.msra.mxu0 %v2330
    %3080 = vmatprep.subr.mxu0 %v2334
    %3081 = vmatpush1.msra.mxu0 %v2333
    %3082 = vmatprep.subr.mxu0 %v2337
    %3083 = vmatpush1.msra.mxu0 %v2336
    %3084 = vmatprep.subr.mxu0 %v2340
    %3085 = vmatpush1.msra.mxu0 %v2339
    %3086 = vmatprep.subr.mxu0 %v2343
    %3087 = vmatpush1.msra.mxu0 %v2342
    %3088 = vmatprep.subr.mxu0 %v2346
    %3089 = vmatpush1.msra.mxu0 %v2345
    %3090 = vmatprep.subr.mxu0 %v2349
    %3091 = vmatpush1.msra.mxu0 %v2348
    %3092 = vmatprep.subr.mxu0 %v2352
    %3093 = vmatpush1.msra.mxu0 %v2351
    %3094 = vmatprep.subr.mxu0 0.0
    %3095 = vmatpush1.msra.mxu0 0.0
    %3096 = vmatprep.subr.mxu0 0.0
    %3097 = vmatpush1.msra.mxu0 0.0
    %3098 = vmatprep.subr.mxu0 0.0
    %3099 = vmatpush1.msra.mxu0 0.0
    %3100 = vmatprep.subr.mxu0 0.0
    %3101 = vmatpush1.msra.mxu0 0.0
    %3102 = vmatprep.subr.mxu0 0.0
    %3103 = vmatpush1.msra.mxu0 0.0
    %3104 = vmatprep.subr.mxu0 0.0
    %3105 = vmatpush1.msra.mxu0 0.0
    %3106 = vmatprep.subr.mxu0 0.0
    %3107 = vmatpush1.msra.mxu0 0.0
    %3108 = vmatprep.subr.mxu0 0.0
    %3109 = vmatpush1.msra.mxu0 0.0
    %3110 = vmatprep.subr.mxu0 0.0
    %3111 = vmatpush1.msra.mxu0 0.0
    %3112 = vmatprep.subr.mxu0 0.0
    %3113 = vmatpush1.msra.mxu0 0.0
    %3114 = vmatprep.subr.mxu0 0.0
    %3115 = vmatpush1.msra.mxu0 0.0
    %3116 = vmatprep.subr.mxu0 0.0
    %3117 = vmatpush1.msra.mxu0 0.0
    %3118 = vmatprep.subr.mxu0 0.0
    %3119 = vmatpush1.msra.mxu0 0.0
    %3120 = vmatprep.subr.mxu0 0.0
    %3121 = vmatpush1.msra.mxu0 0.0
    %3122 = vmatprep.subr.mxu0 0.0
    %3123 = vmatpush1.msra.mxu0 0.0
    %3124 = vmatprep.subr.mxu0 0.0
    %3125 = vmatpush1.msra.mxu0 0.0
    %3126 = vmatprep.mubr.f32.mxu0 0.0
    %3127 = vmatmul.mubr.f32.gmra.mrb[0].mxu0 %v3060
    %v3128 = vpop.f32.mrb[0].mxu0
    %v3129 = vadd.f32 %v2359, %v3128
    %v3130 = vpop.f32.mrb[0].mxu0
    %v3131 = vadd.f32 %v2363, %v3130
    %3132 = vdwg.mxu0
    %3133 = vmatprep.subr.mxu0 0.0
    %3134 = vmatpush1.msra.mxu0 %v2308
    %3135 = vmatprep.subr.mxu0 0.0
    %3136 = vmatpush1.msra.mxu0 %v2311
    %3137 = vmatprep.subr.mxu0 0.0
    %3138 = vmatpush1.msra.mxu0 %v2314
    %3139 = vmatprep.subr.mxu0 0.0
    %3140 = vmatpush1.msra.mxu0 %v2317
    %3141 = vmatprep.subr.mxu0 0.0
    %3142 = vmatpush1.msra.mxu0 %v2320
    %3143 = vmatprep.subr.mxu0 0.0
    %3144 = vmatpush1.msra.mxu0 %v2323
    %3145 = vmatprep.subr.mxu0 0.0
    %3146 = vmatpush1.msra.mxu0 %v2326
    %3147 = vmatprep.subr.mxu0 0.0
    %3148 = vmatpush1.msra.mxu0 %v2329
    %3149 = vmatprep.subr.mxu0 0.0
    %3150 = vmatpush1.msra.mxu0 %v2332
    %3151 = vmatprep.subr.mxu0 0.0
    %3152 = vmatpush1.msra.mxu0 %v2335
    %3153 = vmatprep.subr.mxu0 0.0
    %3154 = vmatpush1.msra.mxu0 %v2338
    %3155 = vmatprep.subr.mxu0 0.0
    %3156 = vmatpush1.msra.mxu0 %v2341
    %3157 = vmatprep.subr.mxu0 0.0
    %3158 = vmatpush1.msra.mxu0 %v2344
    %3159 = vmatprep.subr.mxu0 0.0
    %3160 = vmatpush1.msra.mxu0 %v2347
    %3161 = vmatprep.subr.mxu0 0.0
    %3162 = vmatpush1.msra.mxu0 %v2350
    %3163 = vmatprep.subr.mxu0 0.0
    %3164 = vmatpush1.msra.mxu0 %v2353
    %3165 = vmatprep.subr.mxu0 0.0
    %3166 = vmatpush1.msra.mxu0 0.0
    %3167 = vmatprep.subr.mxu0 0.0
    %3168 = vmatpush1.msra.mxu0 0.0
    %3169 = vmatprep.subr.mxu0 0.0
    %3170 = vmatpush1.msra.mxu0 0.0
    %3171 = vmatprep.subr.mxu0 0.0
    %3172 = vmatpush1.msra.mxu0 0.0
    %3173 = vmatprep.subr.mxu0 0.0
    %3174 = vmatpush1.msra.mxu0 0.0
    %3175 = vmatprep.subr.mxu0 0.0
    %3176 = vmatpush1.msra.mxu0 0.0
    %3177 = vmatprep.subr.mxu0 0.0
    %3178 = vmatpush1.msra.mxu0 0.0
    %3179 = vmatprep.subr.mxu0 0.0
    %3180 = vmatpush1.msra.mxu0 0.0
    %3181 = vmatprep.subr.mxu0 0.0
    %3182 = vmatpush1.msra.mxu0 0.0
    %3183 = vmatprep.subr.mxu0 0.0
    %3184 = vmatpush1.msra.mxu0 0.0
    %3185 = vmatprep.subr.mxu0 0.0
    %3186 = vmatpush1.msra.mxu0 0.0
    %3187 = vmatprep.subr.mxu0 0.0
    %3188 = vmatpush1.msra.mxu0 0.0
    %3189 = vmatprep.subr.mxu0 0.0
    %3190 = vmatpush1.msra.mxu0 0.0
    %3191 = vmatprep.subr.mxu0 0.0
    %3192 = vmatpush1.msra.mxu0 0.0
    %3193 = vmatprep.subr.mxu0 0.0
    %3194 = vmatpush1.msra.mxu0 0.0
    %3195 = vmatprep.subr.mxu0 0.0
    %3196 = vmatpush1.msra.mxu0 0.0
    %3197 = vmatprep.mubr.f32.mxu0 0.0
    %3198 = vmatmul.mubr.f32.gmra.mrb[0].mxu0 %v3060
    %v3199 = vpop.f32.mrb[0].mxu0
    %v3200 = vadd.f32 %v2367, %v3199
    %v3201 = vpop.f32.mrb[0].mxu0
    %3202 = vdwg.mxu0
    %v3205 = vrot.slane %v3129, 4
    %v3206 = vrot.slane %v3131, 4
    %v3209 = vadd.f32 %v2279, %v3205
    %v3210 = vadd.f32 %v2280, %v3206
    %v3211 = vxor.u32 %v3209, 2147483648
    %v3212 = vxor.u32 %v3210, 2147483648
    %v3213 = vmul.f32 %v3211, 1.442695
    %v3214 = vpow.pop %v3213
    %v3215 = vmul.f32 %v3212, 1.442695
    %v3216 = vpow.pop %v3215
    %v3217 = vadd.f32 %v3214, 1.0
    %v3218 = vadd.f32 %v3216, 1.0
    %v3219 = vrcp.pop %v3217
    %v3220 = vmul.f32 1.0, %v3219
    %v3221 = vrcp.pop %v3218
    %v3222 = vmul.f32 1.0, %v3221
    %v3224 = vrot.slane %v3200, 4
    %v3226 = vmul.f32 %v3220, %v3224
    %v3227 = vadd.f32 %v2281, %v3226
    %v3228 = vtanh.pop %v3227
    %v3229 = vsub.f32 1.0, %v3222
    %v3230 = vmul.f32 %v3229, %v3228
    %v3231 = vrot.slane %v3058, 7
    %v3233 = vmul.f32 %v3222, %v3231
    %v3234 = vadd.f32 %v3230, %v3233
    %v3236 = vrot.slane %v3234, 4
    %3238 = vmatprep.subr.mxu0 %v2307
    %3239 = vmatpush1.msra.mxu0 %v2306
    %3240 = vmatprep.subr.mxu0 %v2310
    %3241 = vmatpush1.msra.mxu0 %v2309
    %3242 = vmatprep.subr.mxu0 %v2313
    %3243 = vmatpush1.msra.mxu0 %v2312
    %3244 = vmatprep.subr.mxu0 %v2316
    %3245 = vmatpush1.msra.mxu0 %v2315
    %3246 = vmatprep.subr.mxu0 %v2319
    %3247 = vmatpush1.msra.mxu0 %v2318
    %3248 = vmatprep.subr.mxu0 %v2322
    %3249 = vmatpush1.msra.mxu0 %v2321
    %3250 = vmatprep.subr.mxu0 %v2325
    %3251 = vmatpush1.msra.mxu0 %v2324
    %3252 = vmatprep.subr.mxu0 %v2328
    %3253 = vmatpush1.msra.mxu0 %v2327
    %3254 = vmatprep.subr.mxu0 %v2331
    %3255 = vmatpush1.msra.mxu0 %v2330
    %3256 = vmatprep.subr.mxu0 %v2334
    %3257 = vmatpush1.msra.mxu0 %v2333
    %3258 = vmatprep.subr.mxu0 %v2337
    %3259 = vmatpush1.msra.mxu0 %v2336
    %3260 = vmatprep.subr.mxu0 %v2340
    %3261 = vmatpush1.msra.mxu0 %v2339
    %3262 = vmatprep.subr.mxu0 %v2343
    %3263 = vmatpush1.msra.mxu0 %v2342
    %3264 = vmatprep.subr.mxu0 %v2346
    %3265 = vmatpush1.msra.mxu0 %v2345
    %3266 = vmatprep.subr.mxu0 %v2349
    %3267 = vmatpush1.msra.mxu0 %v2348
    %3268 = vmatprep.subr.mxu0 %v2352
    %3269 = vmatpush1.msra.mxu0 %v2351
    %3270 = vmatprep.subr.mxu0 0.0
    %3271 = vmatpush1.msra.mxu0 0.0
    %3272 = vmatprep.subr.mxu0 0.0
    %3273 = vmatpush1.msra.mxu0 0.0
    %3274 = vmatprep.subr.mxu0 0.0
    %3275 = vmatpush1.msra.mxu0 0.0
    %3276 = vmatprep.subr.mxu0 0.0
    %3277 = vmatpush1.msra.mxu0 0.0
    %3278 = vmatprep.subr.mxu0 0.0
    %3279 = vmatpush1.msra.mxu0 0.0
    %3280 = vmatprep.subr.mxu0 0.0
    %3281 = vmatpush1.msra.mxu0 0.0
    %3282 = vmatprep.subr.mxu0 0.0
    %3283 = vmatpush1.msra.mxu0 0.0
    %3284 = vmatprep.subr.mxu0 0.0
    %3285 = vmatpush1.msra.mxu0 0.0
    %3286 = vmatprep.subr.mxu0 0.0
    %3287 = vmatpush1.msra.mxu0 0.0
    %3288 = vmatprep.subr.mxu0 0.0
    %3289 = vmatpush1.msra.mxu0 0.0
    %3290 = vmatprep.subr.mxu0 0.0
    %3291 = vmatpush1.msra.mxu0 0.0
    %3292 = vmatprep.subr.mxu0 0.0
    %3293 = vmatpush1.msra.mxu0 0.0
    %3294 = vmatprep.subr.mxu0 0.0
    %3295 = vmatpush1.msra.mxu0 0.0
    %3296 = vmatprep.subr.mxu0 0.0
    %3297 = vmatpush1.msra.mxu0 0.0
    %3298 = vmatprep.subr.mxu0 0.0
    %3299 = vmatpush1.msra.mxu0 0.0
    %3300 = vmatprep.subr.mxu0 0.0
    %3301 = vmatpush1.msra.mxu0 0.0
    %3302 = vmatprep.mubr.f32.mxu0 0.0
    %3303 = vmatmul.mubr.f32.gmra.mrb[0].mxu0 %v3236
    %v3304 = vpop.f32.mrb[0].mxu0
    %v3305 = vadd.f32 %v2359, %v3304
    %v3306 = vpop.f32.mrb[0].mxu0
    %v3307 = vadd.f32 %v2363, %v3306
    %3308 = vdwg.mxu0
    %3309 = vmatprep.subr.mxu0 0.0
    %3310 = vmatpush1.msra.mxu0 %v2308
    %3311 = vmatprep.subr.mxu0 0.0
    %3312 = vmatpush1.msra.mxu0 %v2311
    %3313 = vmatprep.subr.mxu0 0.0
    %3314 = vmatpush1.msra.mxu0 %v2314
    %3315 = vmatprep.subr.mxu0 0.0
    %3316 = vmatpush1.msra.mxu0 %v2317
    %3317 = vmatprep.subr.mxu0 0.0
    %3318 = vmatpush1.msra.mxu0 %v2320
    %3319 = vmatprep.subr.mxu0 0.0
    %3320 = vmatpush1.msra.mxu0 %v2323
    %3321 = vmatprep.subr.mxu0 0.0
    %3322 = vmatpush1.msra.mxu0 %v2326
    %3323 = vmatprep.subr.mxu0 0.0
    %3324 = vmatpush1.msra.mxu0 %v2329
    %3325 = vmatprep.subr.mxu0 0.0
    %3326 = vmatpush1.msra.mxu0 %v2332
    %3327 = vmatprep.subr.mxu0 0.0
    %3328 = vmatpush1.msra.mxu0 %v2335
    %3329 = vmatprep.subr.mxu0 0.0
    %3330 = vmatpush1.msra.mxu0 %v2338
    %3331 = vmatprep.subr.mxu0 0.0
    %3332 = vmatpush1.msra.mxu0 %v2341
    %3333 = vmatprep.subr.mxu0 0.0
    %3334 = vmatpush1.msra.mxu0 %v2344
    %3335 = vmatprep.subr.mxu0 0.0
    %3336 = vmatpush1.msra.mxu0 %v2347
    %3337 = vmatprep.subr.mxu0 0.0
    %3338 = vmatpush1.msra.mxu0 %v2350
    %3339 = vmatprep.subr.mxu0 0.0
    %3340 = vmatpush1.msra.mxu0 %v2353
    %3341 = vmatprep.subr.mxu0 0.0
    %3342 = vmatpush1.msra.mxu0 0.0
    %3343 = vmatprep.subr.mxu0 0.0
    %3344 = vmatpush1.msra.mxu0 0.0
    %3345 = vmatprep.subr.mxu0 0.0
    %3346 = vmatpush1.msra.mxu0 0.0
    %3347 = vmatprep.subr.mxu0 0.0
    %3348 = vmatpush1.msra.mxu0 0.0
    %3349 = vmatprep.subr.mxu0 0.0
    %3350 = vmatpush1.msra.mxu0 0.0
    %3351 = vmatprep.subr.mxu0 0.0
    %3352 = vmatpush1.msra.mxu0 0.0
    %3353 = vmatprep.subr.mxu0 0.0
    %3354 = vmatpush1.msra.mxu0 0.0
    %3355 = vmatprep.subr.mxu0 0.0
    %3356 = vmatpush1.msra.mxu0 0.0
    %3357 = vmatprep.subr.mxu0 0.0
    %3358 = vmatpush1.msra.mxu0 0.0
    %3359 = vmatprep.subr.mxu0 0.0
    %3360 = vmatpush1.msra.mxu0 0.0
    %3361 = vmatprep.subr.mxu0 0.0
    %3362 = vmatpush1.msra.mxu0 0.0
    %3363 = vmatprep.subr.mxu0 0.0
    %3364 = vmatpush1.msra.mxu0 0.0
    %3365 = vmatprep.subr.mxu0 0.0
    %3366 = vmatpush1.msra.mxu0 0.0
    %3367 = vmatprep.subr.mxu0 0.0
    %3368 = vmatpush1.msra.mxu0 0.0
    %3369 = vmatprep.subr.mxu0 0.0
    %3370 = vmatpush1.msra.mxu0 0.0
    %3371 = vmatprep.subr.mxu0 0.0
    %3372 = vmatpush1.msra.mxu0 0.0
    %3373 = vmatprep.mubr.f32.mxu0 0.0
    %3374 = vmatmul.mubr.f32.gmra.mrb[0].mxu0 %v3236
    %v3375 = vpop.f32.mrb[0].mxu0
    %v3376 = vadd.f32 %v2367, %v3375
    %v3377 = vpop.f32.mrb[0].mxu0
    %3378 = vdwg.mxu0
    %v3381 = vrot.slane %v3305, 3
    %v3382 = vrot.slane %v3307, 3
    %v3385 = vadd.f32 %v2279, %v3381
    %v3386 = vadd.f32 %v2280, %v3382
    %v3387 = vxor.u32 %v3385, 2147483648
    %v3388 = vxor.u32 %v3386, 2147483648
    %v3389 = vmul.f32 %v3387, 1.442695
    %v3390 = vpow.pop %v3389
    %v3391 = vmul.f32 %v3388, 1.442695
    %v3392 = vpow.pop %v3391
    %v3393 = vadd.f32 %v3390, 1.0
    %v3394 = vadd.f32 %v3392, 1.0
    %v3395 = vrcp.pop %v3393
    %v3396 = vmul.f32 1.0, %v3395
    %v3397 = vrcp.pop %v3394
    %v3398 = vmul.f32 1.0, %v3397
    %v3400 = vrot.slane %v3376, 3
    %v3402 = vmul.f32 %v3396, %v3400
    %v3403 = vadd.f32 %v2281, %v3402
    %v3404 = vtanh.pop %v3403
    %v3405 = vsub.f32 1.0, %v3398
    %v3406 = vmul.f32 %v3405, %v3404
    %v3407 = vrot.slane %v3234, 7
    %v3409 = vmul.f32 %v3398, %v3407
    %v3410 = vadd.f32 %v3406, %v3409
    %v3412 = vrot.slane %v3410, 5
    %3414 = vmatprep.subr.mxu0 %v2307
    %3415 = vmatpush1.msra.mxu0 %v2306
    %3416 = vmatprep.subr.mxu0 %v2310
    %3417 = vmatpush1.msra.mxu0 %v2309
    %3418 = vmatprep.subr.mxu0 %v2313
    %3419 = vmatpush1.msra.mxu0 %v2312
    %3420 = vmatprep.subr.mxu0 %v2316
    %3421 = vmatpush1.msra.mxu0 %v2315
    %3422 = vmatprep.subr.mxu0 %v2319
    %3423 = vmatpush1.msra.mxu0 %v2318
    %3424 = vmatprep.subr.mxu0 %v2322
    %3425 = vmatpush1.msra.mxu0 %v2321
    %3426 = vmatprep.subr.mxu0 %v2325
    %3427 = vmatpush1.msra.mxu0 %v2324
    %3428 = vmatprep.subr.mxu0 %v2328
    %3429 = vmatpush1.msra.mxu0 %v2327
    %3430 = vmatprep.subr.mxu0 %v2331
    %3431 = vmatpush1.msra.mxu0 %v2330
    %3432 = vmatprep.subr.mxu0 %v2334
    %3433 = vmatpush1.msra.mxu0 %v2333
    %3434 = vmatprep.subr.mxu0 %v2337
    %3435 = vmatpush1.msra.mxu0 %v2336
    %3436 = vmatprep.subr.mxu0 %v2340
    %3437 = vmatpush1.msra.mxu0 %v2339
    %3438 = vmatprep.subr.mxu0 %v2343
    %3439 = vmatpush1.msra.mxu0 %v2342
    %3440 = vmatprep.subr.mxu0 %v2346
    %3441 = vmatpush1.msra.mxu0 %v2345
    %3442 = vmatprep.subr.mxu0 %v2349
    %3443 = vmatpush1.msra.mxu0 %v2348
    %3444 = vmatprep.subr.mxu0 %v2352
    %3445 = vmatpush1.msra.mxu0 %v2351
    %3446 = vmatprep.subr.mxu0 0.0
    %3447 = vmatpush1.msra.mxu0 0.0
    %3448 = vmatprep.subr.mxu0 0.0
    %3449 = vmatpush1.msra.mxu0 0.0
    %3450 = vmatprep.subr.mxu0 0.0
    %3451 = vmatpush1.msra.mxu0 0.0
    %3452 = vmatprep.subr.mxu0 0.0
    %3453 = vmatpush1.msra.mxu0 0.0
    %3454 = vmatprep.subr.mxu0 0.0
    %3455 = vmatpush1.msra.mxu0 0.0
    %3456 = vmatprep.subr.mxu0 0.0
    %3457 = vmatpush1.msra.mxu0 0.0
    %3458 = vmatprep.subr.mxu0 0.0
    %3459 = vmatpush1.msra.mxu0 0.0
    %3460 = vmatprep.subr.mxu0 0.0
    %3461 = vmatpush1.msra.mxu0 0.0
    %3462 = vmatprep.subr.mxu0 0.0
    %3463 = vmatpush1.msra.mxu0 0.0
    %3464 = vmatprep.subr.mxu0 0.0
    %3465 = vmatpush1.msra.mxu0 0.0
    %3466 = vmatprep.subr.mxu0 0.0
    %3467 = vmatpush1.msra.mxu0 0.0
    %3468 = vmatprep.subr.mxu0 0.0
    %3469 = vmatpush1.msra.mxu0 0.0
    %3470 = vmatprep.subr.mxu0 0.0
    %3471 = vmatpush1.msra.mxu0 0.0
    %3472 = vmatprep.subr.mxu0 0.0
    %3473 = vmatpush1.msra.mxu0 0.0
    %3474 = vmatprep.subr.mxu0 0.0
    %3475 = vmatpush1.msra.mxu0 0.0
    %3476 = vmatprep.subr.mxu0 0.0
    %3477 = vmatpush1.msra.mxu0 0.0
    %3478 = vmatprep.mubr.f32.mxu0 0.0
    %3479 = vmatmul.mubr.f32.gmra.mrb[0].mxu0 %v3412
    %v3480 = vpop.f32.mrb[0].mxu0
    %v3481 = vadd.f32 %v2359, %v3480
    %v3482 = vpop.f32.mrb[0].mxu0
    %v3483 = vadd.f32 %v2363, %v3482
    %3484 = vdwg.mxu0
    %3485 = vmatprep.subr.mxu0 0.0
    %3486 = vmatpush1.msra.mxu0 %v2308
    %3487 = vmatprep.subr.mxu0 0.0
    %3488 = vmatpush1.msra.mxu0 %v2311
    %3489 = vmatprep.subr.mxu0 0.0
    %3490 = vmatpush1.msra.mxu0 %v2314
    %3491 = vmatprep.subr.mxu0 0.0
    %3492 = vmatpush1.msra.mxu0 %v2317
    %3493 = vmatprep.subr.mxu0 0.0
    %3494 = vmatpush1.msra.mxu0 %v2320
    %3495 = vmatprep.subr.mxu0 0.0
    %3496 = vmatpush1.msra.mxu0 %v2323
    %3497 = vmatprep.subr.mxu0 0.0
    %3498 = vmatpush1.msra.mxu0 %v2326
    %3499 = vmatprep.subr.mxu0 0.0
    %3500 = vmatpush1.msra.mxu0 %v2329
    %3501 = vmatprep.subr.mxu0 0.0
    %3502 = vmatpush1.msra.mxu0 %v2332
    %3503 = vmatprep.subr.mxu0 0.0
    %3504 = vmatpush1.msra.mxu0 %v2335
    %3505 = vmatprep.subr.mxu0 0.0
    %3506 = vmatpush1.msra.mxu0 %v2338
    %3507 = vmatprep.subr.mxu0 0.0
    %3508 = vmatpush1.msra.mxu0 %v2341
    %3509 = vmatprep.subr.mxu0 0.0
    %3510 = vmatpush1.msra.mxu0 %v2344
    %3511 = vmatprep.subr.mxu0 0.0
    %3512 = vmatpush1.msra.mxu0 %v2347
    %3513 = vmatprep.subr.mxu0 0.0
    %3514 = vmatpush1.msra.mxu0 %v2350
    %3515 = vmatprep.subr.mxu0 0.0
    %3516 = vmatpush1.msra.mxu0 %v2353
    %3517 = vmatprep.subr.mxu0 0.0
    %3518 = vmatpush1.msra.mxu0 0.0
    %3519 = vmatprep.subr.mxu0 0.0
    %3520 = vmatpush1.msra.mxu0 0.0
    %3521 = vmatprep.subr.mxu0 0.0
    %3522 = vmatpush1.msra.mxu0 0.0
    %3523 = vmatprep.subr.mxu0 0.0
    %3524 = vmatpush1.msra.mxu0 0.0
    %3525 = vmatprep.subr.mxu0 0.0
    %3526 = vmatpush1.msra.mxu0 0.0
    %3527 = vmatprep.subr.mxu0 0.0
    %3528 = vmatpush1.msra.mxu0 0.0
    %3529 = vmatprep.subr.mxu0 0.0
    %3530 = vmatpush1.msra.mxu0 0.0
    %3531 = vmatprep.subr.mxu0 0.0
    %3532 = vmatpush1.msra.mxu0 0.0
    %3533 = vmatprep.subr.mxu0 0.0
    %3534 = vmatpush1.msra.mxu0 0.0
    %3535 = vmatprep.subr.mxu0 0.0
    %3536 = vmatpush1.msra.mxu0 0.0
    %3537 = vmatprep.subr.mxu0 0.0
    %3538 = vmatpush1.msra.mxu0 0.0
    %3539 = vmatprep.subr.mxu0 0.0
    %3540 = vmatpush1.msra.mxu0 0.0
    %3541 = vmatprep.subr.mxu0 0.0
    %3542 = vmatpush1.msra.mxu0 0.0
    %3543 = vmatprep.subr.mxu0 0.0
    %3544 = vmatpush1.msra.mxu0 0.0
    %3545 = vmatprep.subr.mxu0 0.0
    %3546 = vmatpush1.msra.mxu0 0.0
    %3547 = vmatprep.subr.mxu0 0.0
    %3548 = vmatpush1.msra.mxu0 0.0
    %3549 = vmatprep.mubr.f32.mxu0 0.0
    %3550 = vmatmul.mubr.f32.gmra.mrb[0].mxu0 %v3412
    %v3551 = vpop.f32.mrb[0].mxu0
    %v3552 = vadd.f32 %v2367, %v3551
    %v3553 = vpop.f32.mrb[0].mxu0
    %3554 = vdwg.mxu0
    %v3557 = vrot.slane %v3481, 2
    %v3558 = vrot.slane %v3483, 2
    %v3561 = vadd.f32 %v2279, %v3557
    %v3562 = vadd.f32 %v2280, %v3558
    %v3563 = vxor.u32 %v3561, 2147483648
    %v3564 = vxor.u32 %v3562, 2147483648
    %v3565 = vmul.f32 %v3563, 1.442695
    %v3566 = vpow.pop %v3565
    %v3567 = vmul.f32 %v3564, 1.442695
    %v3568 = vpow.pop %v3567
    %v3569 = vadd.f32 %v3566, 1.0
    %v3570 = vadd.f32 %v3568, 1.0
    %v3571 = vrcp.pop %v3569
    %v3572 = vmul.f32 1.0, %v3571
    %v3573 = vrcp.pop %v3570
    %v3574 = vmul.f32 1.0, %v3573
    %v3576 = vrot.slane %v3552, 2
    %v3578 = vmul.f32 %v3572, %v3576
    %v3579 = vadd.f32 %v2281, %v3578
    %v3580 = vtanh.pop %v3579
    %v3581 = vsub.f32 1.0, %v3574
    %v3582 = vmul.f32 %v3581, %v3580
    %v3583 = vrot.slane %v3410, 7
    %v3585 = vmul.f32 %v3574, %v3583
    %v3586 = vadd.f32 %v3582, %v3585
    %v3588 = vrot.slane %v3586, 6
    %3590 = vmatprep.subr.mxu0 %v2307
    %3591 = vmatpush1.msra.mxu0 %v2306
    %3592 = vmatprep.subr.mxu0 %v2310
    %3593 = vmatpush1.msra.mxu0 %v2309
    %3594 = vmatprep.subr.mxu0 %v2313
    %3595 = vmatpush1.msra.mxu0 %v2312
    %3596 = vmatprep.subr.mxu0 %v2316
    %3597 = vmatpush1.msra.mxu0 %v2315
    %3598 = vmatprep.subr.mxu0 %v2319
    %3599 = vmatpush1.msra.mxu0 %v2318
    %3600 = vmatprep.subr.mxu0 %v2322
    %3601 = vmatpush1.msra.mxu0 %v2321
    %3602 = vmatprep.subr.mxu0 %v2325
    %3603 = vmatpush1.msra.mxu0 %v2324
    %3604 = vmatprep.subr.mxu0 %v2328
    %3605 = vmatpush1.msra.mxu0 %v2327
    %3606 = vmatprep.subr.mxu0 %v2331
    %3607 = vmatpush1.msra.mxu0 %v2330
    %3608 = vmatprep.subr.mxu0 %v2334
    %3609 = vmatpush1.msra.mxu0 %v2333
    %3610 = vmatprep.subr.mxu0 %v2337
    %3611 = vmatpush1.msra.mxu0 %v2336
    %3612 = vmatprep.subr.mxu0 %v2340
    %3613 = vmatpush1.msra.mxu0 %v2339
    %3614 = vmatprep.subr.mxu0 %v2343
    %3615 = vmatpush1.msra.mxu0 %v2342
    %3616 = vmatprep.subr.mxu0 %v2346
    %3617 = vmatpush1.msra.mxu0 %v2345
    %3618 = vmatprep.subr.mxu0 %v2349
    %3619 = vmatpush1.msra.mxu0 %v2348
    %3620 = vmatprep.subr.mxu0 %v2352
    %3621 = vmatpush1.msra.mxu0 %v2351
    %3622 = vmatprep.subr.mxu0 0.0
    %3623 = vmatpush1.msra.mxu0 0.0
    %3624 = vmatprep.subr.mxu0 0.0
    %3625 = vmatpush1.msra.mxu0 0.0
    %3626 = vmatprep.subr.mxu0 0.0
    %3627 = vmatpush1.msra.mxu0 0.0
    %3628 = vmatprep.subr.mxu0 0.0
    %3629 = vmatpush1.msra.mxu0 0.0
    %3630 = vmatprep.subr.mxu0 0.0
    %3631 = vmatpush1.msra.mxu0 0.0
    %3632 = vmatprep.subr.mxu0 0.0
    %3633 = vmatpush1.msra.mxu0 0.0
    %3634 = vmatprep.subr.mxu0 0.0
    %3635 = vmatpush1.msra.mxu0 0.0
    %3636 = vmatprep.subr.mxu0 0.0
    %3637 = vmatpush1.msra.mxu0 0.0
    %3638 = vmatprep.subr.mxu0 0.0
    %3639 = vmatpush1.msra.mxu0 0.0
    %3640 = vmatprep.subr.mxu0 0.0
    %3641 = vmatpush1.msra.mxu0 0.0
    %3642 = vmatprep.subr.mxu0 0.0
    %3643 = vmatpush1.msra.mxu0 0.0
    %3644 = vmatprep.subr.mxu0 0.0
    %3645 = vmatpush1.msra.mxu0 0.0
    %3646 = vmatprep.subr.mxu0 0.0
    %3647 = vmatpush1.msra.mxu0 0.0
    %3648 = vmatprep.subr.mxu0 0.0
    %3649 = vmatpush1.msra.mxu0 0.0
    %3650 = vmatprep.subr.mxu0 0.0
    %3651 = vmatpush1.msra.mxu0 0.0
    %3652 = vmatprep.subr.mxu0 0.0
    %3653 = vmatpush1.msra.mxu0 0.0
    %3654 = vmatprep.mubr.f32.mxu0 0.0
    %3655 = vmatmul.mubr.f32.gmra.mrb[0].mxu0 %v3588
    %v3656 = vpop.f32.mrb[0].mxu0
    %v3657 = vadd.f32 %v2359, %v3656
    %v3658 = vpop.f32.mrb[0].mxu0
    %v3659 = vadd.f32 %v2363, %v3658
    %3660 = vdwg.mxu0
    %3661 = vmatprep.subr.mxu0 0.0
    %3662 = vmatpush1.msra.mxu0 %v2308
    %3663 = vmatprep.subr.mxu0 0.0
    %3664 = vmatpush1.msra.mxu0 %v2311
    %3665 = vmatprep.subr.mxu0 0.0
    %3666 = vmatpush1.msra.mxu0 %v2314
    %3667 = vmatprep.subr.mxu0 0.0
    %3668 = vmatpush1.msra.mxu0 %v2317
    %3669 = vmatprep.subr.mxu0 0.0
    %3670 = vmatpush1.msra.mxu0 %v2320
    %3671 = vmatprep.subr.mxu0 0.0
    %3672 = vmatpush1.msra.mxu0 %v2323
    %3673 = vmatprep.subr.mxu0 0.0
    %3674 = vmatpush1.msra.mxu0 %v2326
    %3675 = vmatprep.subr.mxu0 0.0
    %3676 = vmatpush1.msra.mxu0 %v2329
    %3677 = vmatprep.subr.mxu0 0.0
    %3678 = vmatpush1.msra.mxu0 %v2332
    %3679 = vmatprep.subr.mxu0 0.0
    %3680 = vmatpush1.msra.mxu0 %v2335
    %3681 = vmatprep.subr.mxu0 0.0
    %3682 = vmatpush1.msra.mxu0 %v2338
    %3683 = vmatprep.subr.mxu0 0.0
    %3684 = vmatpush1.msra.mxu0 %v2341
    %3685 = vmatprep.subr.mxu0 0.0
    %3686 = vmatpush1.msra.mxu0 %v2344
    %3687 = vmatprep.subr.mxu0 0.0
    %3688 = vmatpush1.msra.mxu0 %v2347
    %3689 = vmatprep.subr.mxu0 0.0
    %3690 = vmatpush1.msra.mxu0 %v2350
    %3691 = vmatprep.subr.mxu0 0.0
    %3692 = vmatpush1.msra.mxu0 %v2353
    %3693 = vmatprep.subr.mxu0 0.0
    %3694 = vmatpush1.msra.mxu0 0.0
    %3695 = vmatprep.subr.mxu0 0.0
    %3696 = vmatpush1.msra.mxu0 0.0
    %3697 = vmatprep.subr.mxu0 0.0
    %3698 = vmatpush1.msra.mxu0 0.0
    %3699 = vmatprep.subr.mxu0 0.0
    %3700 = vmatpush1.msra.mxu0 0.0
    %3701 = vmatprep.subr.mxu0 0.0
    %3702 = vmatpush1.msra.mxu0 0.0
    %3703 = vmatprep.subr.mxu0 0.0
    %3704 = vmatpush1.msra.mxu0 0.0
    %3705 = vmatprep.subr.mxu0 0.0
    %3706 = vmatpush1.msra.mxu0 0.0
    %3707 = vmatprep.subr.mxu0 0.0
    %3708 = vmatpush1.msra.mxu0 0.0
    %3709 = vmatprep.subr.mxu0 0.0
    %3710 = vmatpush1.msra.mxu0 0.0
    %3711 = vmatprep.subr.mxu0 0.0
    %3712 = vmatpush1.msra.mxu0 0.0
    %3713 = vmatprep.subr.mxu0 0.0
    %3714 = vmatpush1.msra.mxu0 0.0
    %3715 = vmatprep.subr.mxu0 0.0
    %3716 = vmatpush1.msra.mxu0 0.0
    %3717 = vmatprep.subr.mxu0 0.0
    %3718 = vmatpush1.msra.mxu0 0.0
    %3719 = vmatprep.subr.mxu0 0.0
    %3720 = vmatpush1.msra.mxu0 0.0
    %3721 = vmatprep.subr.mxu0 0.0
    %3722 = vmatpush1.msra.mxu0 0.0
    %3723 = vmatprep.subr.mxu0 0.0
    %3724 = vmatpush1.msra.mxu0 0.0
    %3725 = vmatprep.mubr.f32.mxu0 0.0
    %3726 = vmatmul.mubr.f32.gmra.mrb[0].mxu0 %v3588
    %v3727 = vpop.f32.mrb[0].mxu0
    %v3728 = vadd.f32 %v2367, %v3727
    %v3729 = vpop.f32.mrb[0].mxu0
    %3730 = vdwg.mxu0
    %v3733 = vrot.slane %v3657, 1
    %v3734 = vrot.slane %v3659, 1
    %v3737 = vadd.f32 %v2279, %v3733
    %v3738 = vadd.f32 %v2280, %v3734
    %v3739 = vxor.u32 %v3737, 2147483648
    %v3740 = vxor.u32 %v3738, 2147483648
    %v3741 = vmul.f32 %v3739, 1.442695
    %v3742 = vpow.pop %v3741
    %v3743 = vmul.f32 %v3740, 1.442695
    %v3744 = vpow.pop %v3743
    %v3745 = vadd.f32 %v3742, 1.0
    %v3746 = vadd.f32 %v3744, 1.0
    %v3747 = vrcp.pop %v3745
    %v3748 = vmul.f32 1.0, %v3747
    %v3749 = vrcp.pop %v3746
    %v3750 = vmul.f32 1.0, %v3749
    %v3752 = vrot.slane %v3728, 1
    %v3754 = vmul.f32 %v3748, %v3752
    %v3755 = vadd.f32 %v2281, %v3754
    %v3756 = vtanh.pop %v3755
    %v3757 = vsub.f32 1.0, %v3750
    %v3758 = vmul.f32 %v3757, %v3756
    %v3759 = vrot.slane %v3586, 7
    %v3761 = vmul.f32 %v3750, %v3759
    %v3762 = vadd.f32 %v3758, %v3761
    %v3763 = vsel %vm1789, %v2532, %v2706
    %v3764 = vsel %vm1791, %v3763, %v2882
    %v3765 = vsel %vm1793, %v3764, %v3058
    %v3766 = vsel %vm1795, %v3765, %v3234
    %v3767 = vsel %vm1797, %v3766, %v3410
    %v3768 = vsel %vm1799, %v3767, %v3586
    %v3769 = vsel %vm1801, %v3768, %v3762
    %v3771 = vrot.slane %v3762, 7
    %v3773 = vrot.slane %v3586, 5
    %v3775 = vrot.slane %v3410, 3
    %v3777 = vrot.slane %v3234, 1
    %v3779 = vrot.slane %v2882, 5
    %v3781 = vrot.slane %v2706, 3
    %v3783 = vrot.slane %v2532, 1
    %v3785 = vsel %vm1789, %v3771, %v3773
    %v3786 = vsel %vm1791, %v3785, %v3775
    %v3787 = vsel %vm1793, %v3786, %v3777
    %v3788 = vsel %vm1795, %v3787, %v3231
    %v3789 = vsel %vm1797, %v3788, %v3779
    %v3790 = vsel %vm1799, %v3789, %v3781
    %v3791 = vsel %vm1801, %v3790, %v3783
    %v3792 = vsel %vm1825, %v3769, %v3791
    %s3793 = smul.u32 %s1828, 1
    %s3794 = sshll.u32 %s3793, 4
    %3795 = dma.done %s168, %s3794
    %v3796 = vld [vmem:[#allocation5] sm:$0xff]
    %v3797 = vld [vmem:[#allocation5 + $0x8] sm:$0xff]
    %v3798 = vld [vmem:[#allocation5 + $0x10] sm:$0xff]
    %v3799 = vld [vmem:[#allocation5 + $0x18] sm:$0xff]
    %v3800 = vld [vmem:[#allocation5 + $0x20] sm:$0xff]
    %v3801 = vld [vmem:[#allocation5 + $0x28] sm:$0xff]
    %v3802 = vld [vmem:[#allocation5 + $0x30] sm:$0xff]
    %v3803 = vld [vmem:[#allocation5 + $0x38] sm:$0xff]
    %v3804 = vunpack.c.l.bf16 %v3796
    %v3805 = vunpack.c.h.bf16 %v3796
    %v3806 = vunpack.c.l.bf16 %v3797
    %v3807 = vunpack.c.h.bf16 %v3797
    %v3808 = vunpack.c.l.bf16 %v3798
    %v3809 = vunpack.c.h.bf16 %v3798
    %v3810 = vunpack.c.l.bf16 %v3799
    %v3811 = vunpack.c.h.bf16 %v3799
    %v3812 = vunpack.c.l.bf16 %v3800
    %v3813 = vunpack.c.h.bf16 %v3800
    %v3814 = vunpack.c.l.bf16 %v3801
    %v3815 = vunpack.c.h.bf16 %v3801
    %v3816 = vunpack.c.l.bf16 %v3802
    %v3817 = vunpack.c.h.bf16 %v3802
    %v3818 = vunpack.c.l.bf16 %v3803
    %v3819 = vunpack.c.h.bf16 %v3803
    %3820 = vmatprep.subr.mxu0 0.0
    %3821 = vmatpush1.msra.mxu0 %v3804
    %3822 = vmatprep.subr.mxu0 0.0
    %3823 = vmatpush1.msra.mxu0 %v3805
    %3824 = vmatprep.subr.mxu0 0.0
    %3825 = vmatpush1.msra.mxu0 %v3806
    %3826 = vmatprep.subr.mxu0 0.0
    %3827 = vmatpush1.msra.mxu0 %v3807
    %3828 = vmatprep.subr.mxu0 0.0
    %3829 = vmatpush1.msra.mxu0 %v3808
    %3830 = vmatprep.subr.mxu0 0.0
    %3831 = vmatpush1.msra.mxu0 %v3809
    %3832 = vmatprep.subr.mxu0 0.0
    %3833 = vmatpush1.msra.mxu0 %v3810
    %3834 = vmatprep.subr.mxu0 0.0
    %3835 = vmatpush1.msra.mxu0 %v3811
    %3836 = vmatprep.subr.mxu0 0.0
    %3837 = vmatpush1.msra.mxu0 %v3812
    %3838 = vmatprep.subr.mxu0 0.0
    %3839 = vmatpush1.msra.mxu0 %v3813
    %3840 = vmatprep.subr.mxu0 0.0
    %3841 = vmatpush1.msra.mxu0 %v3814
    %3842 = vmatprep.subr.mxu0 0.0
    %3843 = vmatpush1.msra.mxu0 %v3815
    %3844 = vmatprep.subr.mxu0 0.0
    %3845 = vmatpush1.msra.mxu0 %v3816
    %3846 = vmatprep.subr.mxu0 0.0
    %3847 = vmatpush1.msra.mxu0 %v3817
    %3848 = vmatprep.subr.mxu0 0.0
    %3849 = vmatpush1.msra.mxu0 %v3818
    %3850 = vmatprep.subr.mxu0 0.0
    %3851 = vmatpush1.msra.mxu0 %v3819
    %3852 = vmatprep.subr.mxu0 0.0
    %3853 = vmatpush1.msra.mxu0 0.0
    %3854 = vmatprep.subr.mxu0 0.0
    %3855 = vmatpush1.msra.mxu0 0.0
    %3856 = vmatprep.subr.mxu0 0.0
    %3857 = vmatpush1.msra.mxu0 0.0
    %3858 = vmatprep.subr.mxu0 0.0
    %3859 = vmatpush1.msra.mxu0 0.0
    %3860 = vmatprep.subr.mxu0 0.0
    %3861 = vmatpush1.msra.mxu0 0.0
    %3862 = vmatprep.subr.mxu0 0.0
    %3863 = vmatpush1.msra.mxu0 0.0
    %3864 = vmatprep.subr.mxu0 0.0
    %3865 = vmatpush1.msra.mxu0 0.0
    %3866 = vmatprep.subr.mxu0 0.0
    %3867 = vmatpush1.msra.mxu0 0.0
    %3868 = vmatprep.subr.mxu0 0.0
    %3869 = vmatpush1.msra.mxu0 0.0
    %3870 = vmatprep.subr.mxu0 0.0
    %3871 = vmatpush1.msra.mxu0 0.0
    %3872 = vmatprep.subr.mxu0 0.0
    %3873 = vmatpush1.msra.mxu0 0.0
    %3874 = vmatprep.subr.mxu0 0.0
    %3875 = vmatpush1.msra.mxu0 0.0
    %3876 = vmatprep.subr.mxu0 0.0
    %3877 = vmatpush1.msra.mxu0 0.0
    %3878 = vmatprep.subr.mxu0 0.0
    %3879 = vmatpush1.msra.mxu0 0.0
    %3880 = vmatprep.subr.mxu0 0.0
    %3881 = vmatpush1.msra.mxu0 0.0
    %3882 = vmatprep.subr.mxu0 0.0
    %3883 = vmatpush1.msra.mxu0 0.0
    %3884 = vmatprep.mubr.f32.mxu0 0.0
    %3885 = vmatmul.mubr.f32.gmra.mrb[0].mxu0 %v3792
    %v3886 = vpop.f32.mrb[0].mxu0
    %v3887 = vadd.f32 0.0, %v3886
    %v3888 = vpop.f32.mrb[0].mxu0
    %3889 = vdwg.mxu0
    %v3890 = vtanh.pop %v3887
    %v3891 = vld [vmem:[%s13] sm:$0x1]
    %3892 = vmatprep.subr.mxu0 0.0
    %3893 = vmatpush1.xpose.msra.mxu0 %v3890
    %3894 = vmatprep.subr.mxu0 0.0
    %3895 = vmatpush1.xpose.msra.mxu0 0.0
    %3896 = vmatprep.subr.mxu0 0.0
    %3897 = vmatpush1.xpose.msra.mxu0 0.0
    %3898 = vmatprep.subr.mxu0 0.0
    %3899 = vmatpush1.xpose.msra.mxu0 0.0
    %3900 = vmatprep.subr.mxu0 0.0
    %3901 = vmatpush1.xpose.msra.mxu0 0.0
    %3902 = vmatprep.subr.mxu0 0.0
    %3903 = vmatpush1.xpose.msra.mxu0 0.0
    %3904 = vmatprep.subr.mxu0 0.0
    %3905 = vmatpush1.xpose.msra.mxu0 0.0
    %3906 = vmatprep.subr.mxu0 0.0
    %3907 = vmatpush1.xpose.msra.mxu0 0.0
    %3908 = vmatprep.subr.mxu0 0.0
    %3909 = vmatpush1.xpose.msra.mxu0 0.0
    %3910 = vmatprep.subr.mxu0 0.0
    %3911 = vmatpush1.xpose.msra.mxu0 0.0
    %3912 = vmatprep.subr.mxu0 0.0
    %3913 = vmatpush1.xpose.msra.mxu0 0.0
    %3914 = vmatprep.subr.mxu0 0.0
    %3915 = vmatpush1.xpose.msra.mxu0 0.0
    %3916 = vmatprep.subr.mxu0 0.0
    %3917 = vmatpush1.xpose.msra.mxu0 0.0
    %3918 = vmatprep.subr.mxu0 0.0
    %3919 = vmatpush1.xpose.msra.mxu0 0.0
    %3920 = vmatprep.subr.mxu0 0.0
    %3921 = vmatpush1.xpose.msra.mxu0 0.0
    %3922 = vmatprep.subr.mxu0 0.0
    %3923 = vmatpush1.xpose.msra.mxu0 0.0
    %3924 = vmatprep.subr.mxu0 0.0
    %3925 = vmatpush1.xpose.msra.mxu0 0.0
    %3926 = vmatprep.subr.mxu0 0.0
    %3927 = vmatpush1.xpose.msra.mxu0 0.0
    %3928 = vmatprep.subr.mxu0 0.0
    %3929 = vmatpush1.xpose.msra.mxu0 0.0
    %3930 = vmatprep.subr.mxu0 0.0
    %3931 = vmatpush1.xpose.msra.mxu0 0.0
    %3932 = vmatprep.subr.mxu0 0.0
    %3933 = vmatpush1.xpose.msra.mxu0 0.0
    %3934 = vmatprep.subr.mxu0 0.0
    %3935 = vmatpush1.xpose.msra.mxu0 0.0
    %3936 = vmatprep.subr.mxu0 0.0
    %3937 = vmatpush1.xpose.msra.mxu0 0.0
    %3938 = vmatprep.subr.mxu0 0.0
    %3939 = vmatpush1.xpose.msra.mxu0 0.0
    %3940 = vmatprep.subr.mxu0 0.0
    %3941 = vmatpush1.xpose.msra.mxu0 0.0
    %3942 = vmatprep.subr.mxu0 0.0
    %3943 = vmatpush1.xpose.msra.mxu0 0.0
    %3944 = vmatprep.subr.mxu0 0.0
    %3945 = vmatpush1.xpose.msra.mxu0 0.0
    %3946 = vmatprep.subr.mxu0 0.0
    %3947 = vmatpush1.xpose.msra.mxu0 0.0
    %3948 = vmatprep.subr.mxu0 0.0
    %3949 = vmatpush1.xpose.msra.mxu0 0.0
    %3950 = vmatprep.subr.mxu0 0.0
    %3951 = vmatpush1.xpose.msra.mxu0 0.0
    %3952 = vmatprep.subr.mxu0 0.0
    %3953 = vmatpush1.xpose.msra.mxu0 0.0
    %3954 = vmatprep.subr.mxu0 0.0
    %3955 = vmatpush1.xpose.msra.mxu0 0.0
    %3956 = vmatprep.mubr.f32.mxu0 0.0
    %3957 = vmatmul.mubr.f32.gmra.mrb[0].mxu0 %v3891
    %v3958 = vpop.f32.mrb[0].mxu0
    %v3959 = vadd.f32 0.0, %v3958
    %v3960 = vpop.f32.mrb[0].mxu0
    %3961 = vdwg.mxu0
    %vm3962 = vcmask 57344
    %v3963 = vsel %vm3962, %v3959, -inf
    %3964 = vmax.xlane.f32.xlu0 %v3963
    %v3965 = vpop.xlane.xlu0 %3964
    %v3966 = vsub.f32 %v3959, %v3965
    %v3967 = vmul.f32 %v3966, 1.442695
    %v3968 = vpow.pop %v3967
    %v3969 = vsel %vm3962, %v3968, 0.0
    %3970 = vadd.xlane.f32.xlu0 %v3969
    %v3971 = vpop.xlane.xlu0 %3970
    %v3972 = vrcp.pop %v3971
    %v3973 = vmul.f32 %v3968, %v3972
    %3974 = vst.msk [vmem:[#allocation11] sm:$0x1] %vm3962, %v3973
    %vm3975 = vcmask 64512
    %v3977 = vsel %vm3975, %v3973, 0
    %3979 = vmatprep.subr.mxu0 0.0
    %3980 = vmatpush1.msra.mxu0 %v3792
    %3981 = vmatprep.subr.mxu0 0.0
    %3982 = vmatpush1.msra.mxu0 0.0
    %3983 = vmatprep.subr.mxu0 0.0
    %3984 = vmatpush1.msra.mxu0 0.0
    %3985 = vmatprep.subr.mxu0 0.0
    %3986 = vmatpush1.msra.mxu0 0.0
    %3987 = vmatprep.subr.mxu0 0.0
    %3988 = vmatpush1.msra.mxu0 0.0
    %3989 = vmatprep.subr.mxu0 0.0
    %3990 = vmatpush1.msra.mxu0 0.0
    %3991 = vmatprep.subr.mxu0 0.0
    %3992 = vmatpush1.msra.mxu0 0.0
    %3993 = vmatprep.subr.mxu0 0.0
    %3994 = vmatpush1.msra.mxu0 0.0
    %3995 = vmatprep.subr.mxu0 0.0
    %3996 = vmatpush1.msra.mxu0 0.0
    %3997 = vmatprep.subr.mxu0 0.0
    %3998 = vmatpush1.msra.mxu0 0.0
    %3999 = vmatprep.subr.mxu0 0.0
    %4000 = vmatpush1.msra.mxu0 0.0
    %4001 = vmatprep.subr.mxu0 0.0
    %4002 = vmatpush1.msra.mxu0 0.0
    %4003 = vmatprep.subr.mxu0 0.0
    %4004 = vmatpush1.msra.mxu0 0.0
    %4005 = vmatprep.subr.mxu0 0.0
    %4006 = vmatpush1.msra.mxu0 0.0
    %4007 = vmatprep.subr.mxu0 0.0
    %4008 = vmatpush1.msra.mxu0 0.0
    %4009 = vmatprep.subr.mxu0 0.0
    %4010 = vmatpush1.msra.mxu0 0.0
    %4011 = vmatprep.subr.mxu0 0.0
    %4012 = vmatpush1.msra.mxu0 0.0
    %4013 = vmatprep.subr.mxu0 0.0
    %4014 = vmatpush1.msra.mxu0 0.0
    %4015 = vmatprep.subr.mxu0 0.0
    %4016 = vmatpush1.msra.mxu0 0.0
    %4017 = vmatprep.subr.mxu0 0.0
    %4018 = vmatpush1.msra.mxu0 0.0
    %4019 = vmatprep.subr.mxu0 0.0
    %4020 = vmatpush1.msra.mxu0 0.0
    %4021 = vmatprep.subr.mxu0 0.0
    %4022 = vmatpush1.msra.mxu0 0.0
    %4023 = vmatprep.subr.mxu0 0.0
    %4024 = vmatpush1.msra.mxu0 0.0
    %4025 = vmatprep.subr.mxu0 0.0
    %4026 = vmatpush1.msra.mxu0 0.0
    %4027 = vmatprep.subr.mxu0 0.0
    %4028 = vmatpush1.msra.mxu0 0.0
    %4029 = vmatprep.subr.mxu0 0.0
    %4030 = vmatpush1.msra.mxu0 0.0
    %4031 = vmatprep.subr.mxu0 0.0
    %4032 = vmatpush1.msra.mxu0 0.0
    %4033 = vmatprep.subr.mxu0 0.0
    %4034 = vmatpush1.msra.mxu0 0.0
    %4035 = vmatprep.subr.mxu0 0.0
    %4036 = vmatpush1.msra.mxu0 0.0
    %4037 = vmatprep.subr.mxu0 0.0
    %4038 = vmatpush1.msra.mxu0 0.0
    %4039 = vmatprep.subr.mxu0 0.0
    %4040 = vmatpush1.msra.mxu0 0.0
    %4041 = vmatprep.subr.mxu0 0.0
    %4042 = vmatpush1.msra.mxu0 0.0
    %4043 = vmatprep.mubr.f32.mxu0 0.0
    %4044 = vmatmul.mubr.f32.gmra.mrb[0].mxu0 %v3977
    %v4045 = vpop.f32.mrb[0].mxu0
    %v4046 = vadd.f32 0.0, %v4045
    %v4047 = vpop.f32.mrb[0].mxu0
    %4048 = vdwg.mxu0
    %v4049 = vld [vmem:[%s14] sm:$0xff]
    %v4050 = vld [vmem:[%s14 + $0x8] sm:$0xff]
    %v4051 = vld [vmem:[%s14 + $0x10] sm:$0xff]
    %v4052 = vld [vmem:[%s14 + $0x18] sm:$0xff]
    %v4053 = vld [vmem:[%s14 + $0x20] sm:$0xff]
    %v4054 = vld [vmem:[%s14 + $0x28] sm:$0xff]
    %v4055 = vld [vmem:[%s14 + $0x30] sm:$0xff]
    %v4056 = vld [vmem:[%s14 + $0x38] sm:$0xff]
    %v4057 = vld [vmem:[%s14 + $0x40] sm:$0xff]
    %v4058 = vld [vmem:[%s14 + $0x48] sm:$0xff]
    %v4059 = vld [vmem:[%s14 + $0x50] sm:$0xff]
    %v4060 = vld [vmem:[%s14 + $0x58] sm:$0xff]
    %v4061 = vld [vmem:[%s14 + $0x60] sm:$0xff]
    %v4062 = vld [vmem:[%s14 + $0x68] sm:$0xff]
    %v4063 = vld [vmem:[%s14 + $0x70] sm:$0xff]
    %v4064 = vld [vmem:[%s14 + $0x78] sm:$0xff]
    %v4065 = vld [vmem:[%s15] sm:$0x1]
    %4066 = vmatprep.subr.mxu0 0.0
    %4067 = vmatpush1.msra.mxu0 %v4049
    %4068 = vmatprep.subr.mxu0 0.0
    %4069 = vmatpush1.msra.mxu0 %v4050
    %4070 = vmatprep.subr.mxu0 0.0
    %4071 = vmatpush1.msra.mxu0 %v4051
    %4072 = vmatprep.subr.mxu0 0.0
    %4073 = vmatpush1.msra.mxu0 %v4052
    %4074 = vmatprep.subr.mxu0 0.0
    %4075 = vmatpush1.msra.mxu0 %v4053
    %4076 = vmatprep.subr.mxu0 0.0
    %4077 = vmatpush1.msra.mxu0 %v4054
    %4078 = vmatprep.subr.mxu0 0.0
    %4079 = vmatpush1.msra.mxu0 %v4055
    %4080 = vmatprep.subr.mxu0 0.0
    %4081 = vmatpush1.msra.mxu0 %v4056
    %4082 = vmatprep.subr.mxu0 0.0
    %4083 = vmatpush1.msra.mxu0 %v4057
    %4084 = vmatprep.subr.mxu0 0.0
    %4085 = vmatpush1.msra.mxu0 %v4058
    %4086 = vmatprep.subr.mxu0 0.0
    %4087 = vmatpush1.msra.mxu0 %v4059
    %4088 = vmatprep.subr.mxu0 0.0
    %4089 = vmatpush1.msra.mxu0 %v4060
    %4090 = vmatprep.subr.mxu0 0.0
    %4091 = vmatpush1.msra.mxu0 %v4061
    %4092 = vmatprep.subr.mxu0 0.0
    %4093 = vmatpush1.msra.mxu0 %v4062
    %4094 = vmatprep.subr.mxu0 0.0
    %4095 = vmatpush1.msra.mxu0 %v4063
    %4096 = vmatprep.subr.mxu0 0.0
    %4097 = vmatpush1.msra.mxu0 %v4064
    %4098 = vmatprep.subr.mxu0 0.0
    %4099 = vmatpush1.msra.mxu0 0.0
    %4100 = vmatprep.subr.mxu0 0.0
    %4101 = vmatpush1.msra.mxu0 0.0
    %4102 = vmatprep.subr.mxu0 0.0
    %4103 = vmatpush1.msra.mxu0 0.0
    %4104 = vmatprep.subr.mxu0 0.0
    %4105 = vmatpush1.msra.mxu0 0.0
    %4106 = vmatprep.subr.mxu0 0.0
    %4107 = vmatpush1.msra.mxu0 0.0
    %4108 = vmatprep.subr.mxu0 0.0
    %4109 = vmatpush1.msra.mxu0 0.0
    %4110 = vmatprep.subr.mxu0 0.0
    %4111 = vmatpush1.msra.mxu0 0.0
    %4112 = vmatprep.subr.mxu0 0.0
    %4113 = vmatpush1.msra.mxu0 0.0
    %4114 = vmatprep.subr.mxu0 0.0
    %4115 = vmatpush1.msra.mxu0 0.0
    %4116 = vmatprep.subr.mxu0 0.0
    %4117 = vmatpush1.msra.mxu0 0.0
    %4118 = vmatprep.subr.mxu0 0.0
    %4119 = vmatpush1.msra.mxu0 0.0
    %4120 = vmatprep.subr.mxu0 0.0
    %4121 = vmatpush1.msra.mxu0 0.0
    %4122 = vmatprep.subr.mxu0 0.0
    %4123 = vmatpush1.msra.mxu0 0.0
    %4124 = vmatprep.subr.mxu0 0.0
    %4125 = vmatpush1.msra.mxu0 0.0
    %4126 = vmatprep.subr.mxu0 0.0
    %4127 = vmatpush1.msra.mxu0 0.0
    %4128 = vmatprep.subr.mxu0 0.0
    %4129 = vmatpush1.msra.mxu0 0.0
    %4130 = vmatprep.mubr.f32.mxu0 0.0
    %4131 = vmatmul.mubr.f32.gmra.mrb[0].mxu0 %v4046
    %v4132 = vpop.f32.mrb[0].mxu0
    %v4133 = vadd.f32 %v4065, %v4132
    %v4134 = vpop.f32.mrb[0].mxu0
    %4135 = vdwg.mxu0
    %vm4136 = vcmask 8192
    %v4137 = vsel %vm4136, %v4133, -inf
    %4138 = vmax.xlane.f32.xlu0 %v4137
    %v4139 = vpop.xlane.xlu0 %4138
    %v4140 = vsub.f32 %v4133, %v4139
    %v4141 = vmul.f32 %v4140, 1.442695
    %v4142 = vpow.pop %v4141
    %v4143 = vsel %vm4136, %v4142, 0.0
    %4144 = vadd.xlane.f32.xlu0 %v4143
    %v4145 = vpop.xlane.xlu0 %4144
    %v4146 = vrcp.pop %v4145
    %v4147 = vmul.f32 %v4142, %v4146
    %4148 = vst.msk [vmem:[#allocation10] sm:$0x1] %vm4136, %v4147
    // Predicated region
    $region88: #{tpu_custom_call.1} parent=1 // pred_check
      _
    $region89: #{tpu_custom_call.1} parent=1 // pred_check_branch
      %4150 = sbr.rel (0) target = $region91
    $region90: #{tpu_custom_call.1} parent=1 // pred_region
      %s4152 = ssub.s32 16, 16
      %4153 = vsyncadd [#allocation9], %s4152
      %s4155 = sshll.u32 [#allocation10], 4
      %s4156 = int_to_ptr.vmem [resolvable:$true] %s4155
      %4158 = dma.vmem_to_hbm [thread:$0]  %s4156, 16, %s16, [#allocation9]
    $region91: #{tpu_custom_call.1} parent=1 // pred_fallthru
      _
    // Predicated region
    $region92: #{tpu_custom_call.1} parent=1 // pred_check
      _
    $region93: #{tpu_custom_call.1} parent=1 // pred_check_branch
      %4160 = sbr.rel (0) target = $region95
    $region94: #{tpu_custom_call.1} parent=1 // pred_region
      %s4162 = ssub.s32 16, 16
      %4163 = vsyncadd [#allocation12], %s4162
      %s4165 = sshll.u32 [#allocation11], 4
      %s4166 = int_to_ptr.vmem [resolvable:$true] %s4165
      %4168 = dma.vmem_to_hbm [thread:$0]  %s4166, 16, %s17, [#allocation12]
    $region95: #{tpu_custom_call.1} parent=1 // pred_fallthru
      _
    // Predicated region
    $region96: #{tpu_custom_call.1} parent=1 // pred_check
      _
    $region97: #{tpu_custom_call.1} parent=1 // pred_check_branch
      %4170 = sbr.rel (0) target = $region99
    $region98: #{tpu_custom_call.1} parent=1 // pred_region
      %4171 = dma.done [#allocation9], 16
    $region99: #{tpu_custom_call.1} parent=1 // pred_fallthru
      _
    // Predicated region
    $region100: #{tpu_custom_call.1} parent=1 // pred_check
      _
    $region101: #{tpu_custom_call.1} parent=1 // pred_check_branch
      %4173 = sbr.rel (0) target = $region103
    $region102: #{tpu_custom_call.1} parent=1 // pred_region
      %4174 = dma.done [#allocation12], 16
    $region103: #{tpu_custom_call.1} parent=1 // pred_fallthru
      _
    %4175 = vsyncpa [#allocation8], 1
    %4176 = vsyncpa [#allocation9], 1
    %4177 = vsyncpa [#allocation12], 1
  %4178 = vsyncmov [#allocation6]
  %s4179 = vpop.sfrf %4178
  %p4180 = scmp.eq.s32.totalorder %s4179, 0
  %p4181 = pneg %p4180
  %4183 = shalt.err (%p4181)
  %s4184 = scalar_lea.sflag [#allocation6], 1
  %4185 = vsyncmov %s4184
  %s4186 = vpop.sfrf %4185
  %p4187 = scmp.eq.s32.totalorder %s4186, 0
  %p4188 = pneg %p4187
  %4190 = shalt.err (%p4188)
  %s4191 = scalar_lea.sflag [#allocation6], 2
  %4192 = vsyncmov %s4191
  %s4193 = vpop.sfrf %4192
  %p4194 = scmp.eq.s32.totalorder %s4193, 0
  %p4195 = pneg %p4194
  %4197 = shalt.err (%p4195)
  %s4198 = scalar_lea.sflag [#allocation6], 3
  %4199 = vsyncmov %s4198
  %s4200 = vpop.sfrf %4199
  %p4201 = scmp.eq.s32.totalorder %s4200, 0
  %p4202 = pneg %p4201
  %4204 = shalt.err (%p4202)

</llo_original>
